<compile_context>
chip_gen: v7x
topology: tpu7x:2x2x1
jax: 0.10.0
libtpu: 0.0.40
codegen_flags: <defaults>
</compile_context>

<pallas_src>
import functools
import math

import jax
import jax.numpy as jnp
import numpy as np
from jax import lax
from jax.experimental import pallas as pl
from jax.experimental.pallas import tpu as pltpu


# ----------------------------- fused Pallas kernel ------------------------------ #

def decode_block_kernel(
    x_ref, mem_ref,
    ln1_g_ref, ln1_b_ref,
    a1_wqkv_ref, a1_bqkv_ref, a1_wp_ref, a1_bp_ref,
    ln2_g_ref, ln2_b_ref,
    a2_wq_ref, a2_bq_ref, a2_wkv_ref, a2_bkv_ref, a2_wp_ref, a2_bp_ref,
    ln3_g_ref, ln3_b_ref,
    w1_ref, b1_ref, w2_ref, b2_ref,
    o_ref,
    y_buf,                                   # VMEM scratch [T, C] f32
    *, n_head):
    f32, bf16 = jnp.float32, jnp.bfloat16

    x = x_ref[0].astype(f32)      # [T,  C]
    mem = mem_ref[0].astype(f32)  # [T2, C]
    T, C = x.shape
    hd = C // n_head
    scale = 1.0 / math.sqrt(hd)

    def _ln(v, g, b):
        mu = jnp.mean(v, axis=-1, keepdims=True)
        var = jnp.mean((v - mu) * (v - mu), axis=-1, keepdims=True)
        return (v - mu) * lax.rsqrt(var + 1e-5) * g + b

    # Additive causal bias (finite large-negative; only self-attention uses it).
    row = lax.broadcasted_iota(jnp.int32, (T, T), 0)
    col = lax.broadcasted_iota(jnp.int32, (T, T), 1)
    causal_bias = jnp.where(col <= row, 0.0, -1e30).astype(f32)

    def _heads_attn(q, k, v, wp_bf, bp, bias):
        # q: [T, C] f32 (pre-scaled by 1/sqrt(hd)); k, v: [T2, C] f32.
        q_bf, k_bf, v_bf = q.astype(bf16), k.astype(bf16), v.astype(bf16)
        for h in range(n_head):  # static unroll; per-head context stored lane-dense
            sl = slice(h * hd, (h + 1) * hd)
            # Contract last dims directly (no materialized k.T / XLU transpose).
            att = lax.dot_general(q_bf[:, sl], k_bf[:, sl],
                                  (((1,), (1,)), ((), ())),
                                  preferred_element_type=f32)   # [T, T2]
            if bias is not None:
                att = att + bias
            m = jnp.max(att, axis=-1, keepdims=True)
            e = jnp.exp(att - m)
            p = e * pl.reciprocal(jnp.sum(e, axis=-1, keepdims=True), approx=True)
            yh = jnp.dot(p.astype(bf16), v_bf[:, sl],
                         preferred_element_type=f32)            # [T, hd]
            y_buf[:, sl] = yh        # contiguous lane-range store; no concat/gather
        # Single K=C output projection for all heads.
        y = y_buf[...].astype(bf16)
        return jnp.dot(y, wp_bf, preferred_element_type=f32) + bp

    def _mlp(v):
        h = jnp.dot(v.astype(bf16), w1_ref[...],
                    preferred_element_type=f32) + b1_ref[...]
        # Exact erf GELU to match torch F.gelu default semantics.
        h = 0.5 * h * (1.0 + lax.erf(h * (1.0 / math.sqrt(2.0))))
        return jnp.dot(h.astype(bf16), w2_ref[...],
                       preferred_element_type=f32) + b2_ref[...]

    # ---- sub-layer 1: x = x + self_attn(ln1(x))  (causal) ----
    h1 = _ln(x, ln1_g_ref[...], ln1_b_ref[...])
    qkv = jnp.dot(h1.astype(bf16), a1_wqkv_ref[...],
                  preferred_element_type=f32) + a1_bqkv_ref[...]   # [T, 3C]
    q1 = qkv[:, :C] * scale
    k1 = qkv[:, C:2 * C]
    v1 = qkv[:, 2 * C:]
    x = x + _heads_attn(q1, k1, v1, a1_wp_ref[...], a1_bp_ref[...], causal_bias)

    # ---- sub-layer 2: x = x + cross_attn(ln2(x), mem)  (no mask) ----
    h2 = _ln(x, ln2_g_ref[...], ln2_b_ref[...])
    q2 = (jnp.dot(h2.astype(bf16), a2_wq_ref[...],
                  preferred_element_type=f32) + a2_bq_ref[...]) * scale
    kv = jnp.dot(mem.astype(bf16), a2_wkv_ref[...],
                 preferred_element_type=f32) + a2_bkv_ref[...]     # [T2, 2C]
    k2 = kv[:, :C]
    v2 = kv[:, C:]
    x = x + _heads_attn(q2, k2, v2, a2_wp_ref[...], a2_bp_ref[...], None)

    # ---- sub-layer 3: x = x + mlp(ln3(x)) ----
    h3 = _ln(x, ln3_g_ref[...], ln3_b_ref[...])
    x = x + _mlp(h3)

    o_ref[0] = x.astype(o_ref.dtype)


# ------------------------------ wrapper ----------------------------------- #

def decode_block(x, mem, P, n_head):
    B, T, C = x.shape
    T2 = mem.shape[1]
    assert C % n_head == 0
    a1, a2, m = P["attn1"], P["attn2"], P["mlp"]
    bf16 = jnp.bfloat16

    # Host-side weight prep: fuse QKV / KV projections, cast matmul weights to bf16.
    wqkv1 = jnp.concatenate([a1["wq_t"], a1["wk_t"], a1["wv_t"]], axis=1).astype(bf16)
    bqkv1 = jnp.concatenate([a1["bq"], a1["bk"], a1["bv"]], axis=1)
    wp1 = a1["wp_t"].astype(bf16)
    wq2 = a2["wq_t"].astype(bf16)
    wkv2 = jnp.concatenate([a2["wk_t"], a2["wv_t"]], axis=1).astype(bf16)
    bkv2 = jnp.concatenate([a2["bk"], a2["bv"]], axis=1)
    wp2 = a2["wp_t"].astype(bf16)
    w1 = m["w1_t"].astype(bf16)
    w2 = m["w2_t"].astype(bf16)

    kernel = functools.partial(decode_block_kernel, n_head=n_head)

    def rep2(shape):  # grid-invariant 2D operand (weights / biases / LN params)
        return pl.BlockSpec(shape, lambda b: (0, 0))

    out_x = pl.pallas_call(
        kernel,
        out_shape=jax.ShapeDtypeStruct((B, T, C), x.dtype),
        grid=(B,),
        in_specs=[
            pl.BlockSpec((1, T, C), lambda b: (b, 0, 0)),     # x
            pl.BlockSpec((1, T2, C), lambda b: (b, 0, 0)),    # mem
            rep2((1, C)), rep2((1, C)),                       # ln1 gamma/beta
            rep2((C, 3 * C)), rep2((1, 3 * C)),               # attn1 wqkv/bqkv
            rep2((C, C)), rep2((1, C)),                       # attn1 wp/bp
            rep2((1, C)), rep2((1, C)),                       # ln2 gamma/beta
            rep2((C, C)), rep2((1, C)),                       # attn2 wq/bq
            rep2((C, 2 * C)), rep2((1, 2 * C)),               # attn2 wkv/bkv
            rep2((C, C)), rep2((1, C)),                       # attn2 wp/bp
            rep2((1, C)), rep2((1, C)),                       # ln3 gamma/beta
            rep2((C, 2 * C)), rep2((1, 2 * C)),               # mlp w1/b1
            rep2((2 * C, C)), rep2((1, C)),                   # mlp w2/b2
        ],
        out_specs=pl.BlockSpec((1, T, C), lambda b: (b, 0, 0)),
        scratch_shapes=[pltpu.VMEM((T, C), jnp.float32)],     # per-head context buffer
        compiler_params=pltpu.CompilerParams(
            dimension_semantics=("parallel",),                # batch -> v7x megacore
            vmem_limit_bytes=64 * 1024 * 1024,                # raise v5e 16 MiB default
        ),
    )(x, mem,
      P["ln1_g"].reshape(1, C), P["ln1_b"].reshape(1, C),
      wqkv1, bqkv1, wp1, a1["bp"],
      P["ln2_g"].reshape(1, C), P["ln2_b"].reshape(1, C),
      wq2, a2["bq"], wkv2, bkv2, wp2, a2["bp"],
      P["ln3_g"].reshape(1, C), P["ln3_b"].reshape(1, C),
      w1, m["b1"], w2, m["b2"])
    return [out_x, mem]


# --------------------------- pure-JAX reference ----------------------------- #

def _ref_ln(x, g, b):
    mu = jnp.mean(x, axis=-1, keepdims=True)
    var = jnp.mean((x - mu) ** 2, axis=-1, keepdims=True)
    return (x - mu) / jnp.sqrt(var + 1e-5) * g + b


def _ref_attn(xq, xkv, p, n_head, causal):
    B, T, C = xq.shape
    T2 = xkv.shape[1]
    hd = C // n_head
    q = (xq @ p["wq_t"] + p["bq"]).reshape(B, T, n_head, hd).transpose(0, 2, 1, 3)
    k = (xkv @ p["wk_t"] + p["bk"]).reshape(B, T2, n_head, hd).transpose(0, 2, 1, 3)
    v = (xkv @ p["wv_t"] + p["bv"]).reshape(B, T2, n_head, hd).transpose(0, 2, 1, 3)
    att = jnp.einsum("bhtd,bhsd->bhts", q, k) / math.sqrt(hd)
    if causal:
        mask = jnp.tril(jnp.ones((T, T2), dtype=bool))
        att = jnp.where(mask[None, None], att, -jnp.inf)
    att = jax.nn.softmax(att, axis=-1)
    y = jnp.einsum("bhts,bhsd->bhtd", att, v).transpose(0, 2, 1, 3).reshape(B, T, C)
    return y @ p["wp_t"] + p["bp"]


def _ref_block(x, mem, P, n_head):
    h = _ref_ln(x, P["ln1_g"], P["ln1_b"])
    x = x + _ref_attn(h, h, P["attn1"], n_head, True)
    x = x + _ref_attn(_ref_ln(x, P["ln2_g"], P["ln2_b"]), mem, P["attn2"], n_head, False)
    h = _ref_ln(x, P["ln3_g"], P["ln3_b"])
    h1 = h @ P["mlp"]["w1_t"] + P["mlp"]["b1"]
    h1 = jax.nn.gelu(h1, approximate=False)
    x = x + (h1 @ P["mlp"]["w2_t"] + P["mlp"]["b2"])
    return x


# ---------------------------------- main ------------------------------------ #

def _make_attn_params(key, C):
    ks = jax.random.split(key, 8)
    mk = lambda k, shape: (0.02 * jax.random.normal(k, shape, jnp.float32))
    return {
        "wq_t": mk(ks[0], (C, C)), "bq": mk(ks[1], (1, C)),
        "wk_t": mk(ks[2], (C, C)), "bk": mk(ks[3], (1, C)),
        "wv_t": mk(ks[4], (C, C)), "bv": mk(ks[5], (1, C)),
        "wp_t": mk(ks[6], (C, C)), "bp": mk(ks[7], (1, C)),
    }


if __name__ == "__main__":
    B, T, C, H = 2, 8, 32, 4  # batch, seq (== block_size), n_embd, n_head
    key = jax.random.PRNGKey(0)
    (k_x, k_mem, k_ln1g, k_ln1b, k_ln2g, k_ln2b, k_ln3g, k_ln3b,
     k_a1, k_a2, k_w1, k_b1, k_w2, k_b2) = jax.random.split(key, 14)

    x = jax.random.normal(k_x, (B, T, C), jnp.float32)
    mem = jax.random.normal(k_mem, (B, T, C), jnp.float32)

    P = {
        "ln1_g": 1.0 + 0.1 * jax.random.normal(k_ln1g, (C,), jnp.float32),
        "ln1_b": 0.1 * jax.random.normal(k_ln1b, (C,), jnp.float32),
        "ln2_g": 1.0 + 0.1 * jax.random.normal(k_ln2g, (C,), jnp.float32),
        "ln2_b": 0.1 * jax.random.normal(k_ln2b, (C,), jnp.float32),
        "ln3_g": 1.0 + 0.1 * jax.random.normal(k_ln3g, (C,), jnp.float32),
        "ln3_b": 0.1 * jax.random.normal(k_ln3b, (C,), jnp.float32),
        "attn1": _make_attn_params(k_a1, C),
        "attn2": _make_attn_params(k_a2, C),
        "mlp": {
            "w1_t": 0.02 * jax.random.normal(k_w1, (C, 2 * C), jnp.float32),
            "b1": 0.02 * jax.random.normal(k_b1, (1, 2 * C), jnp.float32),
            "w2_t": 0.02 * jax.random.normal(k_w2, (2 * C, C), jnp.float32),
            "b2": 0.02 * jax.random.normal(k_b2, (1, C), jnp.float32),
        },
    }

    out_x, out_mem = decode_block(x, mem, P, H)
    jax.block_until_ready(out_x)
    jax.block_until_ready(out_mem)

    ref_x = _ref_block(x, mem, P, H)
    # bf16 MXU operands (f32 accumulation) -> ~1e-3-level deviations vs f32 reference.
    np.testing.assert_allclose(np.asarray(out_x), np.asarray(ref_x), atol=1e-2, rtol=1e-2)
    np.testing.assert_allclose(np.asarray(out_mem), np.asarray(mem), atol=0, rtol=0)

    print("KERNEL_OK")
</pallas_src>

<mosaic_0001>
module attributes {stable_mosaic.version = 11 : i64} {
  func.func @decode_block_kernel(%arg0: i32, %arg1: memref<1x8x32xf32, #tpu.memory_space<vmem>>, %arg2: memref<1x8x32xf32, #tpu.memory_space<vmem>>, %arg3: memref<1x32xf32, #tpu.memory_space<vmem>>, %arg4: memref<1x32xf32, #tpu.memory_space<vmem>>, %arg5: memref<32x96xbf16, #tpu.memory_space<vmem>>, %arg6: memref<1x96xf32, #tpu.memory_space<vmem>>, %arg7: memref<32x32xbf16, #tpu.memory_space<vmem>>, %arg8: memref<1x32xf32, #tpu.memory_space<vmem>>, %arg9: memref<1x32xf32, #tpu.memory_space<vmem>>, %arg10: memref<1x32xf32, #tpu.memory_space<vmem>>, %arg11: memref<32x32xbf16, #tpu.memory_space<vmem>>, %arg12: memref<1x32xf32, #tpu.memory_space<vmem>>, %arg13: memref<32x64xbf16, #tpu.memory_space<vmem>>, %arg14: memref<1x64xf32, #tpu.memory_space<vmem>>, %arg15: memref<32x32xbf16, #tpu.memory_space<vmem>>, %arg16: memref<1x32xf32, #tpu.memory_space<vmem>>, %arg17: memref<1x32xf32, #tpu.memory_space<vmem>>, %arg18: memref<1x32xf32, #tpu.memory_space<vmem>>, %arg19: memref<32x64xbf16, #tpu.memory_space<vmem>>, %arg20: memref<1x64xf32, #tpu.memory_space<vmem>>, %arg21: memref<64x32xbf16, #tpu.memory_space<vmem>>, %arg22: memref<1x32xf32, #tpu.memory_space<vmem>>, %arg23: memref<1x8x32xf32, #tpu.memory_space<vmem>>, %arg24: memref<8x32xf32, #tpu.memory_space<vmem>>) attributes {dimension_semantics = [#tpu.dimension_semantics<parallel>], iteration_bounds = array<i64: 2>, scalar_prefetch = 0 : i64, scratch_operands = 1 : i64, tpu.core_type = #tpu.core_type<tc>, window_params = [{transform_indices = @transform_0, window_bounds = array<i64: 1, 8, 32>}, {transform_indices = @transform_1, window_bounds = array<i64: 1, 8, 32>}, {pipeline_mode = #tpu.pipeline_mode<synchronous>, transform_indices = @transform_2, window_bounds = array<i64: 1, 32>}, {pipeline_mode = #tpu.pipeline_mode<synchronous>, transform_indices = @transform_3, window_bounds = array<i64: 1, 32>}, {pipeline_mode = #tpu.pipeline_mode<synchronous>, transform_indices = @transform_4, window_bounds = array<i64: 32, 96>}, {pipeline_mode = #tpu.pipeline_mode<synchronous>, transform_indices = @transform_5, window_bounds = array<i64: 1, 96>}, {pipeline_mode = #tpu.pipeline_mode<synchronous>, transform_indices = @transform_6, window_bounds = array<i64: 32, 32>}, {pipeline_mode = #tpu.pipeline_mode<synchronous>, transform_indices = @transform_7, window_bounds = array<i64: 1, 32>}, {pipeline_mode = #tpu.pipeline_mode<synchronous>, transform_indices = @transform_8, window_bounds = array<i64: 1, 32>}, {pipeline_mode = #tpu.pipeline_mode<synchronous>, transform_indices = @transform_9, window_bounds = array<i64: 1, 32>}, {pipeline_mode = #tpu.pipeline_mode<synchronous>, transform_indices = @transform_10, window_bounds = array<i64: 32, 32>}, {pipeline_mode = #tpu.pipeline_mode<synchronous>, transform_indices = @transform_11, window_bounds = array<i64: 1, 32>}, {pipeline_mode = #tpu.pipeline_mode<synchronous>, transform_indices = @transform_12, window_bounds = array<i64: 32, 64>}, {pipeline_mode = #tpu.pipeline_mode<synchronous>, transform_indices = @transform_13, window_bounds = array<i64: 1, 64>}, {pipeline_mode = #tpu.pipeline_mode<synchronous>, transform_indices = @transform_14, window_bounds = array<i64: 32, 32>}, {pipeline_mode = #tpu.pipeline_mode<synchronous>, transform_indices = @transform_15, window_bounds = array<i64: 1, 32>}, {pipeline_mode = #tpu.pipeline_mode<synchronous>, transform_indices = @transform_16, window_bounds = array<i64: 1, 32>}, {pipeline_mode = #tpu.pipeline_mode<synchronous>, transform_indices = @transform_17, window_bounds = array<i64: 1, 32>}, {pipeline_mode = #tpu.pipeline_mode<synchronous>, transform_indices = @transform_18, window_bounds = array<i64: 32, 64>}, {pipeline_mode = #tpu.pipeline_mode<synchronous>, transform_indices = @transform_19, window_bounds = array<i64: 1, 64>}, {pipeline_mode = #tpu.pipeline_mode<synchronous>, transform_indices = @transform_20, window_bounds = array<i64: 64, 32>}, {pipeline_mode = #tpu.pipeline_mode<synchronous>, transform_indices = @transform_21, window_bounds = array<i64: 1, 32>}, {transform_indices = @transform_22, window_bounds = array<i64: 1, 8, 32>}]} {
    %c0 = arith.constant 0 : index
    %c0_0 = arith.constant 0 : index
    %c0_1 = arith.constant 0 : index
    %0 = vector.load %arg1[%c0, %c0_0, %c0_1] : memref<1x8x32xf32, #tpu.memory_space<vmem>>, vector<1x8x32xf32>
    %1 = vector.shape_cast %0 : vector<1x8x32xf32> to vector<8x32xf32>
    %c0_2 = arith.constant 0 : index
    %c0_3 = arith.constant 0 : index
    %c0_4 = arith.constant 0 : index
    %2 = vector.load %arg2[%c0_2, %c0_3, %c0_4] : memref<1x8x32xf32, #tpu.memory_space<vmem>>, vector<1x8x32xf32>
    %3 = vector.shape_cast %2 : vector<1x8x32xf32> to vector<8x32xf32>
    %4 = tpu.iota {dimensions = array<i32: 0>} : vector<8x8xi32>
    %5 = tpu.iota {dimensions = array<i32: 1>} : vector<8x8xi32>
    %6 = arith.cmpi sle, %5, %4 : vector<8x8xi32>
    %cst = arith.constant 0.000000e+00 : f32
    %cst_5 = arith.constant -1.000000e+30 : f32
    %7 = vector.broadcast %cst : f32 to vector<8x8xf32>
    %8 = vector.broadcast %cst_5 : f32 to vector<8x8xf32>
    %9 = arith.select %6, %7, %8 : vector<8x8xi1>, vector<8x8xf32>
    %c0_6 = arith.constant 0 : index
    %c0_7 = arith.constant 0 : index
    %10 = vector.load %arg3[%c0_6, %c0_7] : memref<1x32xf32, #tpu.memory_space<vmem>>, vector<1x32xf32>
    %c0_8 = arith.constant 0 : index
    %c0_9 = arith.constant 0 : index
    %11 = vector.load %arg4[%c0_8, %c0_9] : memref<1x32xf32, #tpu.memory_space<vmem>>, vector<1x32xf32>
    %cst_10 = arith.constant dense<0.000000e+00> : vector<8xf32>
    %12 = vector.multi_reduction <add>, %1, %cst_10 [1] : vector<8x32xf32> to vector<8xf32>
    %13 = vector.shape_cast %12 : vector<8xf32> to vector<8x1xf32>
    %cst_11 = arith.constant 3.200000e+01 : f32
    %14 = vector.broadcast %cst_11 : f32 to vector<8x1xf32>
    %15 = arith.divf %13, %14 : vector<8x1xf32>
    %16 = vector.broadcast %15 : vector<8x1xf32> to vector<8x32xf32>
    %17 = arith.subf %1, %16 : vector<8x32xf32>
    %18 = vector.broadcast %15 : vector<8x1xf32> to vector<8x32xf32>
    %19 = arith.subf %1, %18 : vector<8x32xf32>
    %20 = arith.mulf %17, %19 : vector<8x32xf32>
    %cst_12 = arith.constant dense<0.000000e+00> : vector<8xf32>
    %21 = vector.multi_reduction <add>, %20, %cst_12 [1] : vector<8x32xf32> to vector<8xf32>
    %22 = vector.shape_cast %21 : vector<8xf32> to vector<8x1xf32>
    %cst_13 = arith.constant 3.200000e+01 : f32
    %23 = vector.broadcast %cst_13 : f32 to vector<8x1xf32>
    %24 = arith.divf %22, %23 : vector<8x1xf32>
    %25 = vector.broadcast %15 : vector<8x1xf32> to vector<8x32xf32>
    %26 = arith.subf %1, %25 : vector<8x32xf32>
    %cst_14 = arith.constant 9.99999974E-6 : f32
    %27 = vector.broadcast %cst_14 : f32 to vector<8x1xf32>
    %28 = arith.addf %24, %27 : vector<8x1xf32>
    %29 = math.rsqrt %28 : vector<8x1xf32>
    %30 = vector.broadcast %29 : vector<8x1xf32> to vector<8x32xf32>
    %31 = arith.mulf %26, %30 : vector<8x32xf32>
    %32 = vector.broadcast %10 : vector<1x32xf32> to vector<8x32xf32>
    %33 = arith.mulf %31, %32 : vector<8x32xf32>
    %34 = vector.broadcast %11 : vector<1x32xf32> to vector<8x32xf32>
    %35 = arith.addf %33, %34 : vector<8x32xf32>
    %36 = arith.truncf %35 : vector<8x32xf32> to vector<8x32xbf16>
    %c0_15 = arith.constant 0 : index
    %c0_16 = arith.constant 0 : index
    %37 = vector.load %arg5[%c0_15, %c0_16] : memref<32x96xbf16, #tpu.memory_space<vmem>>, vector<32x96xbf16>
    %cst_17 = arith.constant dense<0.000000e+00> : vector<8x96xf32>
    %38 = tpu.matmul %36, %37, %cst_17 {dimension_numbers = #tpu.dot_dimension_numbers<[1], [0], [0], [1], [0, 0, 1, 1], [], []>} : vector<8x32xbf16>, vector<32x96xbf16>, vector<8x96xf32> -> vector<8x96xf32>
    %c0_18 = arith.constant 0 : index
    %c0_19 = arith.constant 0 : index
    %39 = vector.load %arg6[%c0_18, %c0_19] : memref<1x96xf32, #tpu.memory_space<vmem>>, vector<1x96xf32>
    %40 = vector.broadcast %39 : vector<1x96xf32> to vector<8x96xf32>
    %41 = arith.addf %38, %40 : vector<8x96xf32>
    %42 = vector.extract_strided_slice %41 {offsets = [0, 0], sizes = [8, 32], strides = [1, 1]} : vector<8x96xf32> to vector<8x32xf32>
    %cst_20 = arith.constant 0.353553385 : f32
    %43 = vector.broadcast %cst_20 : f32 to vector<8x32xf32>
    %44 = arith.mulf %42, %43 : vector<8x32xf32>
    %45 = vector.extract_strided_slice %41 {offsets = [0, 32], sizes = [8, 32], strides = [1, 1]} : vector<8x96xf32> to vector<8x32xf32>
    %46 = vector.extract_strided_slice %41 {offsets = [0, 64], sizes = [8, 32], strides = [1, 1]} : vector<8x96xf32> to vector<8x32xf32>
    %c0_21 = arith.constant 0 : index
    %c0_22 = arith.constant 0 : index
    %47 = vector.load %arg7[%c0_21, %c0_22] : memref<32x32xbf16, #tpu.memory_space<vmem>>, vector<32x32xbf16>
    %c0_23 = arith.constant 0 : index
    %c0_24 = arith.constant 0 : index
    %48 = vector.load %arg8[%c0_23, %c0_24] : memref<1x32xf32, #tpu.memory_space<vmem>>, vector<1x32xf32>
    %49 = arith.truncf %44 : vector<8x32xf32> to vector<8x32xbf16>
    %50 = arith.truncf %45 : vector<8x32xf32> to vector<8x32xbf16>
    %51 = arith.truncf %46 : vector<8x32xf32> to vector<8x32xbf16>
    %52 = vector.extract_strided_slice %49 {offsets = [0, 0], sizes = [8, 8], strides = [1, 1]} : vector<8x32xbf16> to vector<8x8xbf16>
    %53 = vector.extract_strided_slice %50 {offsets = [0, 0], sizes = [8, 8], strides = [1, 1]} : vector<8x32xbf16> to vector<8x8xbf16>
    %cst_25 = arith.constant dense<0.000000e+00> : vector<8x8xf32>
    %54 = tpu.matmul %52, %53, %cst_25 {dimension_numbers = #tpu.dot_dimension_numbers<[1], [1], [0], [0], [0, 0, 1, 0], [], []>} : vector<8x8xbf16>, vector<8x8xbf16>, vector<8x8xf32> -> vector<8x8xf32>
    %55 = arith.addf %54, %9 : vector<8x8xf32>
    %cst_26 = arith.constant dense<0xFF800000> : vector<8xf32>
    %56 = vector.multi_reduction <maximumf>, %55, %cst_26 [1] : vector<8x8xf32> to vector<8xf32>
    %57 = vector.shape_cast %56 : vector<8xf32> to vector<8x1xf32>
    %58 = vector.broadcast %57 : vector<8x1xf32> to vector<8x8xf32>
    %59 = arith.subf %55, %58 : vector<8x8xf32>
    %60 = math.exp %59 : vector<8x8xf32>
    %cst_27 = arith.constant dense<0.000000e+00> : vector<8xf32>
    %61 = vector.multi_reduction <add>, %60, %cst_27 [1] : vector<8x8xf32> to vector<8xf32>
    %62 = vector.shape_cast %61 : vector<8xf32> to vector<8x1xf32>
    %63 = tpu.reciprocal %62 {approx = true} : vector<8x1xf32> -> vector<8x1xf32>
    %64 = vector.broadcast %63 : vector<8x1xf32> to vector<8x8xf32>
    %65 = arith.mulf %60, %64 : vector<8x8xf32>
    %66 = arith.truncf %65 : vector<8x8xf32> to vector<8x8xbf16>
    %67 = vector.extract_strided_slice %51 {offsets = [0, 0], sizes = [8, 8], strides = [1, 1]} : vector<8x32xbf16> to vector<8x8xbf16>
    %cst_28 = arith.constant dense<0.000000e+00> : vector<8x8xf32>
    %68 = tpu.matmul %66, %67, %cst_28 {dimension_numbers = #tpu.dot_dimension_numbers<[1], [0], [0], [1], [0, 0, 1, 1], [], []>} : vector<8x8xbf16>, vector<8x8xbf16>, vector<8x8xf32> -> vector<8x8xf32>
    %c0_29 = arith.constant 0 : index
    %c0_30 = arith.constant 0 : index
    %69 = vector.load %arg24[%c0_29, %c0_30] : memref<8x32xf32, #tpu.memory_space<vmem>>, vector<8x8xf32>
    tpu.vector_store %arg24[%c0_29, %c0_30], %68 {strides = array<i32>} : memref<8x32xf32, #tpu.memory_space<vmem>>, vector<8x8xf32>,
    %70 = vector.extract_strided_slice %49 {offsets = [0, 8], sizes = [8, 8], strides = [1, 1]} : vector<8x32xbf16> to vector<8x8xbf16>
    %71 = vector.extract_strided_slice %50 {offsets = [0, 8], sizes = [8, 8], strides = [1, 1]} : vector<8x32xbf16> to vector<8x8xbf16>
    %cst_31 = arith.constant dense<0.000000e+00> : vector<8x8xf32>
    %72 = tpu.matmul %70, %71, %cst_31 {dimension_numbers = #tpu.dot_dimension_numbers<[1], [1], [0], [0], [0, 0, 1, 0], [], []>} : vector<8x8xbf16>, vector<8x8xbf16>, vector<8x8xf32> -> vector<8x8xf32>
    %73 = arith.addf %72, %9 : vector<8x8xf32>
    %cst_32 = arith.constant dense<0xFF800000> : vector<8xf32>
    %74 = vector.multi_reduction <maximumf>, %73, %cst_32 [1] : vector<8x8xf32> to vector<8xf32>
    %75 = vector.shape_cast %74 : vector<8xf32> to vector<8x1xf32>
    %76 = vector.broadcast %75 : vector<8x1xf32> to vector<8x8xf32>
    %77 = arith.subf %73, %76 : vector<8x8xf32>
    %78 = math.exp %77 : vector<8x8xf32>
    %cst_33 = arith.constant dense<0.000000e+00> : vector<8xf32>
    %79 = vector.multi_reduction <add>, %78, %cst_33 [1] : vector<8x8xf32> to vector<8xf32>
    %80 = vector.shape_cast %79 : vector<8xf32> to vector<8x1xf32>
    %81 = tpu.reciprocal %80 {approx = true} : vector<8x1xf32> -> vector<8x1xf32>
    %82 = vector.broadcast %81 : vector<8x1xf32> to vector<8x8xf32>
    %83 = arith.mulf %78, %82 : vector<8x8xf32>
    %84 = arith.truncf %83 : vector<8x8xf32> to vector<8x8xbf16>
    %85 = vector.extract_strided_slice %51 {offsets = [0, 8], sizes = [8, 8], strides = [1, 1]} : vector<8x32xbf16> to vector<8x8xbf16>
    %cst_34 = arith.constant dense<0.000000e+00> : vector<8x8xf32>
    %86 = tpu.matmul %84, %85, %cst_34 {dimension_numbers = #tpu.dot_dimension_numbers<[1], [0], [0], [1], [0, 0, 1, 1], [], []>} : vector<8x8xbf16>, vector<8x8xbf16>, vector<8x8xf32> -> vector<8x8xf32>
    %c0_35 = arith.constant 0 : index
    %c8 = arith.constant 8 : index
    %87 = vector.load %arg24[%c0_35, %c8] : memref<8x32xf32, #tpu.memory_space<vmem>>, vector<8x8xf32>
    tpu.vector_store %arg24[%c0_35, %c8], %86 {strides = array<i32>} : memref<8x32xf32, #tpu.memory_space<vmem>>, vector<8x8xf32>,
    %88 = vector.extract_strided_slice %49 {offsets = [0, 16], sizes = [8, 8], strides = [1, 1]} : vector<8x32xbf16> to vector<8x8xbf16>
    %89 = vector.extract_strided_slice %50 {offsets = [0, 16], sizes = [8, 8], strides = [1, 1]} : vector<8x32xbf16> to vector<8x8xbf16>
    %cst_36 = arith.constant dense<0.000000e+00> : vector<8x8xf32>
    %90 = tpu.matmul %88, %89, %cst_36 {dimension_numbers = #tpu.dot_dimension_numbers<[1], [1], [0], [0], [0, 0, 1, 0], [], []>} : vector<8x8xbf16>, vector<8x8xbf16>, vector<8x8xf32> -> vector<8x8xf32>
    %91 = arith.addf %90, %9 : vector<8x8xf32>
    %cst_37 = arith.constant dense<0xFF800000> : vector<8xf32>
    %92 = vector.multi_reduction <maximumf>, %91, %cst_37 [1] : vector<8x8xf32> to vector<8xf32>
    %93 = vector.shape_cast %92 : vector<8xf32> to vector<8x1xf32>
    %94 = vector.broadcast %93 : vector<8x1xf32> to vector<8x8xf32>
    %95 = arith.subf %91, %94 : vector<8x8xf32>
    %96 = math.exp %95 : vector<8x8xf32>
    %cst_38 = arith.constant dense<0.000000e+00> : vector<8xf32>
    %97 = vector.multi_reduction <add>, %96, %cst_38 [1] : vector<8x8xf32> to vector<8xf32>
    %98 = vector.shape_cast %97 : vector<8xf32> to vector<8x1xf32>
    %99 = tpu.reciprocal %98 {approx = true} : vector<8x1xf32> -> vector<8x1xf32>
    %100 = vector.broadcast %99 : vector<8x1xf32> to vector<8x8xf32>
    %101 = arith.mulf %96, %100 : vector<8x8xf32>
    %102 = arith.truncf %101 : vector<8x8xf32> to vector<8x8xbf16>
    %103 = vector.extract_strided_slice %51 {offsets = [0, 16], sizes = [8, 8], strides = [1, 1]} : vector<8x32xbf16> to vector<8x8xbf16>
    %cst_39 = arith.constant dense<0.000000e+00> : vector<8x8xf32>
    %104 = tpu.matmul %102, %103, %cst_39 {dimension_numbers = #tpu.dot_dimension_numbers<[1], [0], [0], [1], [0, 0, 1, 1], [], []>} : vector<8x8xbf16>, vector<8x8xbf16>, vector<8x8xf32> -> vector<8x8xf32>
    %c0_40 = arith.constant 0 : index
    %c16 = arith.constant 16 : index
    %105 = vector.load %arg24[%c0_40, %c16] : memref<8x32xf32, #tpu.memory_space<vmem>>, vector<8x8xf32>
    tpu.vector_store %arg24[%c0_40, %c16], %104 {strides = array<i32>} : memref<8x32xf32, #tpu.memory_space<vmem>>, vector<8x8xf32>,
    %106 = vector.extract_strided_slice %49 {offsets = [0, 24], sizes = [8, 8], strides = [1, 1]} : vector<8x32xbf16> to vector<8x8xbf16>
    %107 = vector.extract_strided_slice %50 {offsets = [0, 24], sizes = [8, 8], strides = [1, 1]} : vector<8x32xbf16> to vector<8x8xbf16>
    %cst_41 = arith.constant dense<0.000000e+00> : vector<8x8xf32>
    %108 = tpu.matmul %106, %107, %cst_41 {dimension_numbers = #tpu.dot_dimension_numbers<[1], [1], [0], [0], [0, 0, 1, 0], [], []>} : vector<8x8xbf16>, vector<8x8xbf16>, vector<8x8xf32> -> vector<8x8xf32>
    %109 = arith.addf %108, %9 : vector<8x8xf32>
    %cst_42 = arith.constant dense<0xFF800000> : vector<8xf32>
    %110 = vector.multi_reduction <maximumf>, %109, %cst_42 [1] : vector<8x8xf32> to vector<8xf32>
    %111 = vector.shape_cast %110 : vector<8xf32> to vector<8x1xf32>
    %112 = vector.broadcast %111 : vector<8x1xf32> to vector<8x8xf32>
    %113 = arith.subf %109, %112 : vector<8x8xf32>
    %114 = math.exp %113 : vector<8x8xf32>
    %cst_43 = arith.constant dense<0.000000e+00> : vector<8xf32>
    %115 = vector.multi_reduction <add>, %114, %cst_43 [1] : vector<8x8xf32> to vector<8xf32>
    %116 = vector.shape_cast %115 : vector<8xf32> to vector<8x1xf32>
    %117 = tpu.reciprocal %116 {approx = true} : vector<8x1xf32> -> vector<8x1xf32>
    %118 = vector.broadcast %117 : vector<8x1xf32> to vector<8x8xf32>
    %119 = arith.mulf %114, %118 : vector<8x8xf32>
    %120 = arith.truncf %119 : vector<8x8xf32> to vector<8x8xbf16>
    %121 = vector.extract_strided_slice %51 {offsets = [0, 24], sizes = [8, 8], strides = [1, 1]} : vector<8x32xbf16> to vector<8x8xbf16>
    %cst_44 = arith.constant dense<0.000000e+00> : vector<8x8xf32>
    %122 = tpu.matmul %120, %121, %cst_44 {dimension_numbers = #tpu.dot_dimension_numbers<[1], [0], [0], [1], [0, 0, 1, 1], [], []>} : vector<8x8xbf16>, vector<8x8xbf16>, vector<8x8xf32> -> vector<8x8xf32>
    %c0_45 = arith.constant 0 : index
    %c24 = arith.constant 24 : index
    %123 = vector.load %arg24[%c0_45, %c24] : memref<8x32xf32, #tpu.memory_space<vmem>>, vector<8x8xf32>
    tpu.vector_store %arg24[%c0_45, %c24], %122 {strides = array<i32>} : memref<8x32xf32, #tpu.memory_space<vmem>>, vector<8x8xf32>,
    %c0_46 = arith.constant 0 : index
    %c0_47 = arith.constant 0 : index
    %124 = vector.load %arg24[%c0_46, %c0_47] : memref<8x32xf32, #tpu.memory_space<vmem>>, vector<8x32xf32>
    %125 = arith.truncf %124 : vector<8x32xf32> to vector<8x32xbf16>
    %cst_48 = arith.constant dense<0.000000e+00> : vector<8x32xf32>
    %126 = tpu.matmul %125, %47, %cst_48 {dimension_numbers = #tpu.dot_dimension_numbers<[1], [0], [0], [1], [0, 0, 1, 1], [], []>} : vector<8x32xbf16>, vector<32x32xbf16>, vector<8x32xf32> -> vector<8x32xf32>
    %127 = vector.broadcast %48 : vector<1x32xf32> to vector<8x32xf32>
    %128 = arith.addf %126, %127 : vector<8x32xf32>
    %129 = arith.addf %1, %128 : vector<8x32xf32>
    %c0_49 = arith.constant 0 : index
    %c0_50 = arith.constant 0 : index
    %130 = vector.load %arg9[%c0_49, %c0_50] : memref<1x32xf32, #tpu.memory_space<vmem>>, vector<1x32xf32>
    %c0_51 = arith.constant 0 : index
    %c0_52 = arith.constant 0 : index
    %131 = vector.load %arg10[%c0_51, %c0_52] : memref<1x32xf32, #tpu.memory_space<vmem>>, vector<1x32xf32>
    %cst_53 = arith.constant dense<0.000000e+00> : vector<8xf32>
    %132 = vector.multi_reduction <add>, %129, %cst_53 [1] : vector<8x32xf32> to vector<8xf32>
    %133 = vector.shape_cast %132 : vector<8xf32> to vector<8x1xf32>
    %cst_54 = arith.constant 3.200000e+01 : f32
    %134 = vector.broadcast %cst_54 : f32 to vector<8x1xf32>
    %135 = arith.divf %133, %134 : vector<8x1xf32>
    %136 = vector.broadcast %135 : vector<8x1xf32> to vector<8x32xf32>
    %137 = arith.subf %129, %136 : vector<8x32xf32>
    %138 = vector.broadcast %135 : vector<8x1xf32> to vector<8x32xf32>
    %139 = arith.subf %129, %138 : vector<8x32xf32>
    %140 = arith.mulf %137, %139 : vector<8x32xf32>
    %cst_55 = arith.constant dense<0.000000e+00> : vector<8xf32>
    %141 = vector.multi_reduction <add>, %140, %cst_55 [1] : vector<8x32xf32> to vector<8xf32>
    %142 = vector.shape_cast %141 : vector<8xf32> to vector<8x1xf32>
    %cst_56 = arith.constant 3.200000e+01 : f32
    %143 = vector.broadcast %cst_56 : f32 to vector<8x1xf32>
    %144 = arith.divf %142, %143 : vector<8x1xf32>
    %145 = vector.broadcast %135 : vector<8x1xf32> to vector<8x32xf32>
    %146 = arith.subf %129, %145 : vector<8x32xf32>
    %cst_57 = arith.constant 9.99999974E-6 : f32
    %147 = vector.broadcast %cst_57 : f32 to vector<8x1xf32>
    %148 = arith.addf %144, %147 : vector<8x1xf32>
    %149 = math.rsqrt %148 : vector<8x1xf32>
    %150 = vector.broadcast %149 : vector<8x1xf32> to vector<8x32xf32>
    %151 = arith.mulf %146, %150 : vector<8x32xf32>
    %152 = vector.broadcast %130 : vector<1x32xf32> to vector<8x32xf32>
    %153 = arith.mulf %151, %152 : vector<8x32xf32>
    %154 = vector.broadcast %131 : vector<1x32xf32> to vector<8x32xf32>
    %155 = arith.addf %153, %154 : vector<8x32xf32>
    %156 = arith.truncf %155 : vector<8x32xf32> to vector<8x32xbf16>
    %c0_58 = arith.constant 0 : index
    %c0_59 = arith.constant 0 : index
    %157 = vector.load %arg11[%c0_58, %c0_59] : memref<32x32xbf16, #tpu.memory_space<vmem>>, vector<32x32xbf16>
    %cst_60 = arith.constant dense<0.000000e+00> : vector<8x32xf32>
    %158 = tpu.matmul %156, %157, %cst_60 {dimension_numbers = #tpu.dot_dimension_numbers<[1], [0], [0], [1], [0, 0, 1, 1], [], []>} : vector<8x32xbf16>, vector<32x32xbf16>, vector<8x32xf32> -> vector<8x32xf32>
    %c0_61 = arith.constant 0 : index
    %c0_62 = arith.constant 0 : index
    %159 = vector.load %arg12[%c0_61, %c0_62] : memref<1x32xf32, #tpu.memory_space<vmem>>, vector<1x32xf32>
    %160 = vector.broadcast %159 : vector<1x32xf32> to vector<8x32xf32>
    %161 = arith.addf %158, %160 : vector<8x32xf32>
    %cst_63 = arith.constant 0.353553385 : f32
    %162 = vector.broadcast %cst_63 : f32 to vector<8x32xf32>
    %163 = arith.mulf %161, %162 : vector<8x32xf32>
    %164 = arith.truncf %3 : vector<8x32xf32> to vector<8x32xbf16>
    %c0_64 = arith.constant 0 : index
    %c0_65 = arith.constant 0 : index
    %165 = vector.load %arg13[%c0_64, %c0_65] : memref<32x64xbf16, #tpu.memory_space<vmem>>, vector<32x64xbf16>
    %cst_66 = arith.constant dense<0.000000e+00> : vector<8x64xf32>
    %166 = tpu.matmul %164, %165, %cst_66 {dimension_numbers = #tpu.dot_dimension_numbers<[1], [0], [0], [1], [0, 0, 1, 1], [], []>} : vector<8x32xbf16>, vector<32x64xbf16>, vector<8x64xf32> -> vector<8x64xf32>
    %c0_67 = arith.constant 0 : index
    %c0_68 = arith.constant 0 : index
    %167 = vector.load %arg14[%c0_67, %c0_68] : memref<1x64xf32, #tpu.memory_space<vmem>>, vector<1x64xf32>
    %168 = vector.broadcast %167 : vector<1x64xf32> to vector<8x64xf32>
    %169 = arith.addf %166, %168 : vector<8x64xf32>
    %170 = vector.extract_strided_slice %169 {offsets = [0, 0], sizes = [8, 32], strides = [1, 1]} : vector<8x64xf32> to vector<8x32xf32>
    %171 = vector.extract_strided_slice %169 {offsets = [0, 32], sizes = [8, 32], strides = [1, 1]} : vector<8x64xf32> to vector<8x32xf32>
    %c0_69 = arith.constant 0 : index
    %c0_70 = arith.constant 0 : index
    %172 = vector.load %arg15[%c0_69, %c0_70] : memref<32x32xbf16, #tpu.memory_space<vmem>>, vector<32x32xbf16>
    %c0_71 = arith.constant 0 : index
    %c0_72 = arith.constant 0 : index
    %173 = vector.load %arg16[%c0_71, %c0_72] : memref<1x32xf32, #tpu.memory_space<vmem>>, vector<1x32xf32>
    %174 = arith.truncf %163 : vector<8x32xf32> to vector<8x32xbf16>
    %175 = arith.truncf %170 : vector<8x32xf32> to vector<8x32xbf16>
    %176 = arith.truncf %171 : vector<8x32xf32> to vector<8x32xbf16>
    %177 = vector.extract_strided_slice %174 {offsets = [0, 0], sizes = [8, 8], strides = [1, 1]} : vector<8x32xbf16> to vector<8x8xbf16>
    %178 = vector.extract_strided_slice %175 {offsets = [0, 0], sizes = [8, 8], strides = [1, 1]} : vector<8x32xbf16> to vector<8x8xbf16>
    %cst_73 = arith.constant dense<0.000000e+00> : vector<8x8xf32>
    %179 = tpu.matmul %177, %178, %cst_73 {dimension_numbers = #tpu.dot_dimension_numbers<[1], [1], [0], [0], [0, 0, 1, 0], [], []>} : vector<8x8xbf16>, vector<8x8xbf16>, vector<8x8xf32> -> vector<8x8xf32>
    %cst_74 = arith.constant dense<0xFF800000> : vector<8xf32>
    %180 = vector.multi_reduction <maximumf>, %179, %cst_74 [1] : vector<8x8xf32> to vector<8xf32>
    %181 = vector.shape_cast %180 : vector<8xf32> to vector<8x1xf32>
    %182 = vector.broadcast %181 : vector<8x1xf32> to vector<8x8xf32>
    %183 = arith.subf %179, %182 : vector<8x8xf32>
    %184 = math.exp %183 : vector<8x8xf32>
    %cst_75 = arith.constant dense<0.000000e+00> : vector<8xf32>
    %185 = vector.multi_reduction <add>, %184, %cst_75 [1] : vector<8x8xf32> to vector<8xf32>
    %186 = vector.shape_cast %185 : vector<8xf32> to vector<8x1xf32>
    %187 = tpu.reciprocal %186 {approx = true} : vector<8x1xf32> -> vector<8x1xf32>
    %188 = vector.broadcast %187 : vector<8x1xf32> to vector<8x8xf32>
    %189 = arith.mulf %184, %188 : vector<8x8xf32>
    %190 = arith.truncf %189 : vector<8x8xf32> to vector<8x8xbf16>
    %191 = vector.extract_strided_slice %176 {offsets = [0, 0], sizes = [8, 8], strides = [1, 1]} : vector<8x32xbf16> to vector<8x8xbf16>
    %cst_76 = arith.constant dense<0.000000e+00> : vector<8x8xf32>
    %192 = tpu.matmul %190, %191, %cst_76 {dimension_numbers = #tpu.dot_dimension_numbers<[1], [0], [0], [1], [0, 0, 1, 1], [], []>} : vector<8x8xbf16>, vector<8x8xbf16>, vector<8x8xf32> -> vector<8x8xf32>
    %c0_77 = arith.constant 0 : index
    %c0_78 = arith.constant 0 : index
    %193 = vector.load %arg24[%c0_77, %c0_78] : memref<8x32xf32, #tpu.memory_space<vmem>>, vector<8x8xf32>
    tpu.vector_store %arg24[%c0_77, %c0_78], %192 {strides = array<i32>} : memref<8x32xf32, #tpu.memory_space<vmem>>, vector<8x8xf32>,
    %194 = vector.extract_strided_slice %174 {offsets = [0, 8], sizes = [8, 8], strides = [1, 1]} : vector<8x32xbf16> to vector<8x8xbf16>
    %195 = vector.extract_strided_slice %175 {offsets = [0, 8], sizes = [8, 8], strides = [1, 1]} : vector<8x32xbf16> to vector<8x8xbf16>
    %cst_79 = arith.constant dense<0.000000e+00> : vector<8x8xf32>
    %196 = tpu.matmul %194, %195, %cst_79 {dimension_numbers = #tpu.dot_dimension_numbers<[1], [1], [0], [0], [0, 0, 1, 0], [], []>} : vector<8x8xbf16>, vector<8x8xbf16>, vector<8x8xf32> -> vector<8x8xf32>
    %cst_80 = arith.constant dense<0xFF800000> : vector<8xf32>
    %197 = vector.multi_reduction <maximumf>, %196, %cst_80 [1] : vector<8x8xf32> to vector<8xf32>
    %198 = vector.shape_cast %197 : vector<8xf32> to vector<8x1xf32>
    %199 = vector.broadcast %198 : vector<8x1xf32> to vector<8x8xf32>
    %200 = arith.subf %196, %199 : vector<8x8xf32>
    %201 = math.exp %200 : vector<8x8xf32>
    %cst_81 = arith.constant dense<0.000000e+00> : vector<8xf32>
    %202 = vector.multi_reduction <add>, %201, %cst_81 [1] : vector<8x8xf32> to vector<8xf32>
    %203 = vector.shape_cast %202 : vector<8xf32> to vector<8x1xf32>
    %204 = tpu.reciprocal %203 {approx = true} : vector<8x1xf32> -> vector<8x1xf32>
    %205 = vector.broadcast %204 : vector<8x1xf32> to vector<8x8xf32>
    %206 = arith.mulf %201, %205 : vector<8x8xf32>
    %207 = arith.truncf %206 : vector<8x8xf32> to vector<8x8xbf16>
    %208 = vector.extract_strided_slice %176 {offsets = [0, 8], sizes = [8, 8], strides = [1, 1]} : vector<8x32xbf16> to vector<8x8xbf16>
    %cst_82 = arith.constant dense<0.000000e+00> : vector<8x8xf32>
    %209 = tpu.matmul %207, %208, %cst_82 {dimension_numbers = #tpu.dot_dimension_numbers<[1], [0], [0], [1], [0, 0, 1, 1], [], []>} : vector<8x8xbf16>, vector<8x8xbf16>, vector<8x8xf32> -> vector<8x8xf32>
    %c0_83 = arith.constant 0 : index
    %c8_84 = arith.constant 8 : index
    %210 = vector.load %arg24[%c0_83, %c8_84] : memref<8x32xf32, #tpu.memory_space<vmem>>, vector<8x8xf32>
    tpu.vector_store %arg24[%c0_83, %c8_84], %209 {strides = array<i32>} : memref<8x32xf32, #tpu.memory_space<vmem>>, vector<8x8xf32>,
    %211 = vector.extract_strided_slice %174 {offsets = [0, 16], sizes = [8, 8], strides = [1, 1]} : vector<8x32xbf16> to vector<8x8xbf16>
    %212 = vector.extract_strided_slice %175 {offsets = [0, 16], sizes = [8, 8], strides = [1, 1]} : vector<8x32xbf16> to vector<8x8xbf16>
    %cst_85 = arith.constant dense<0.000000e+00> : vector<8x8xf32>
    %213 = tpu.matmul %211, %212, %cst_85 {dimension_numbers = #tpu.dot_dimension_numbers<[1], [1], [0], [0], [0, 0, 1, 0], [], []>} : vector<8x8xbf16>, vector<8x8xbf16>, vector<8x8xf32> -> vector<8x8xf32>
    %cst_86 = arith.constant dense<0xFF800000> : vector<8xf32>
    %214 = vector.multi_reduction <maximumf>, %213, %cst_86 [1] : vector<8x8xf32> to vector<8xf32>
    %215 = vector.shape_cast %214 : vector<8xf32> to vector<8x1xf32>
    %216 = vector.broadcast %215 : vector<8x1xf32> to vector<8x8xf32>
    %217 = arith.subf %213, %216 : vector<8x8xf32>
    %218 = math.exp %217 : vector<8x8xf32>
    %cst_87 = arith.constant dense<0.000000e+00> : vector<8xf32>
    %219 = vector.multi_reduction <add>, %218, %cst_87 [1] : vector<8x8xf32> to vector<8xf32>
    %220 = vector.shape_cast %219 : vector<8xf32> to vector<8x1xf32>
    %221 = tpu.reciprocal %220 {approx = true} : vector<8x1xf32> -> vector<8x1xf32>
    %222 = vector.broadcast %221 : vector<8x1xf32> to vector<8x8xf32>
    %223 = arith.mulf %218, %222 : vector<8x8xf32>
    %224 = arith.truncf %223 : vector<8x8xf32> to vector<8x8xbf16>
    %225 = vector.extract_strided_slice %176 {offsets = [0, 16], sizes = [8, 8], strides = [1, 1]} : vector<8x32xbf16> to vector<8x8xbf16>
    %cst_88 = arith.constant dense<0.000000e+00> : vector<8x8xf32>
    %226 = tpu.matmul %224, %225, %cst_88 {dimension_numbers = #tpu.dot_dimension_numbers<[1], [0], [0], [1], [0, 0, 1, 1], [], []>} : vector<8x8xbf16>, vector<8x8xbf16>, vector<8x8xf32> -> vector<8x8xf32>
    %c0_89 = arith.constant 0 : index
    %c16_90 = arith.constant 16 : index
    %227 = vector.load %arg24[%c0_89, %c16_90] : memref<8x32xf32, #tpu.memory_space<vmem>>, vector<8x8xf32>
    tpu.vector_store %arg24[%c0_89, %c16_90], %226 {strides = array<i32>} : memref<8x32xf32, #tpu.memory_space<vmem>>, vector<8x8xf32>,
    %228 = vector.extract_strided_slice %174 {offsets = [0, 24], sizes = [8, 8], strides = [1, 1]} : vector<8x32xbf16> to vector<8x8xbf16>
    %229 = vector.extract_strided_slice %175 {offsets = [0, 24], sizes = [8, 8], strides = [1, 1]} : vector<8x32xbf16> to vector<8x8xbf16>
    %cst_91 = arith.constant dense<0.000000e+00> : vector<8x8xf32>
    %230 = tpu.matmul %228, %229, %cst_91 {dimension_numbers = #tpu.dot_dimension_numbers<[1], [1], [0], [0], [0, 0, 1, 0], [], []>} : vector<8x8xbf16>, vector<8x8xbf16>, vector<8x8xf32> -> vector<8x8xf32>
    %cst_92 = arith.constant dense<0xFF800000> : vector<8xf32>
    %231 = vector.multi_reduction <maximumf>, %230, %cst_92 [1] : vector<8x8xf32> to vector<8xf32>
    %232 = vector.shape_cast %231 : vector<8xf32> to vector<8x1xf32>
    %233 = vector.broadcast %232 : vector<8x1xf32> to vector<8x8xf32>
    %234 = arith.subf %230, %233 : vector<8x8xf32>
    %235 = math.exp %234 : vector<8x8xf32>
    %cst_93 = arith.constant dense<0.000000e+00> : vector<8xf32>
    %236 = vector.multi_reduction <add>, %235, %cst_93 [1] : vector<8x8xf32> to vector<8xf32>
    %237 = vector.shape_cast %236 : vector<8xf32> to vector<8x1xf32>
    %238 = tpu.reciprocal %237 {approx = true} : vector<8x1xf32> -> vector<8x1xf32>
    %239 = vector.broadcast %238 : vector<8x1xf32> to vector<8x8xf32>
    %240 = arith.mulf %235, %239 : vector<8x8xf32>
    %241 = arith.truncf %240 : vector<8x8xf32> to vector<8x8xbf16>
    %242 = vector.extract_strided_slice %176 {offsets = [0, 24], sizes = [8, 8], strides = [1, 1]} : vector<8x32xbf16> to vector<8x8xbf16>
    %cst_94 = arith.constant dense<0.000000e+00> : vector<8x8xf32>
    %243 = tpu.matmul %241, %242, %cst_94 {dimension_numbers = #tpu.dot_dimension_numbers<[1], [0], [0], [1], [0, 0, 1, 1], [], []>} : vector<8x8xbf16>, vector<8x8xbf16>, vector<8x8xf32> -> vector<8x8xf32>
    %c0_95 = arith.constant 0 : index
    %c24_96 = arith.constant 24 : index
    %244 = vector.load %arg24[%c0_95, %c24_96] : memref<8x32xf32, #tpu.memory_space<vmem>>, vector<8x8xf32>
    tpu.vector_store %arg24[%c0_95, %c24_96], %243 {strides = array<i32>} : memref<8x32xf32, #tpu.memory_space<vmem>>, vector<8x8xf32>,
    %c0_97 = arith.constant 0 : index
    %c0_98 = arith.constant 0 : index
    %245 = vector.load %arg24[%c0_97, %c0_98] : memref<8x32xf32, #tpu.memory_space<vmem>>, vector<8x32xf32>
    %246 = arith.truncf %245 : vector<8x32xf32> to vector<8x32xbf16>
    %cst_99 = arith.constant dense<0.000000e+00> : vector<8x32xf32>
    %247 = tpu.matmul %246, %172, %cst_99 {dimension_numbers = #tpu.dot_dimension_numbers<[1], [0], [0], [1], [0, 0, 1, 1], [], []>} : vector<8x32xbf16>, vector<32x32xbf16>, vector<8x32xf32> -> vector<8x32xf32>
    %248 = vector.broadcast %173 : vector<1x32xf32> to vector<8x32xf32>
    %249 = arith.addf %247, %248 : vector<8x32xf32>
    %250 = arith.addf %129, %249 : vector<8x32xf32>
    %c0_100 = arith.constant 0 : index
    %c0_101 = arith.constant 0 : index
    %251 = vector.load %arg17[%c0_100, %c0_101] : memref<1x32xf32, #tpu.memory_space<vmem>>, vector<1x32xf32>
    %c0_102 = arith.constant 0 : index
    %c0_103 = arith.constant 0 : index
    %252 = vector.load %arg18[%c0_102, %c0_103] : memref<1x32xf32, #tpu.memory_space<vmem>>, vector<1x32xf32>
    %cst_104 = arith.constant dense<0.000000e+00> : vector<8xf32>
    %253 = vector.multi_reduction <add>, %250, %cst_104 [1] : vector<8x32xf32> to vector<8xf32>
    %254 = vector.shape_cast %253 : vector<8xf32> to vector<8x1xf32>
    %cst_105 = arith.constant 3.200000e+01 : f32
    %255 = vector.broadcast %cst_105 : f32 to vector<8x1xf32>
    %256 = arith.divf %254, %255 : vector<8x1xf32>
    %257 = vector.broadcast %256 : vector<8x1xf32> to vector<8x32xf32>
    %258 = arith.subf %250, %257 : vector<8x32xf32>
    %259 = vector.broadcast %256 : vector<8x1xf32> to vector<8x32xf32>
    %260 = arith.subf %250, %259 : vector<8x32xf32>
    %261 = arith.mulf %258, %260 : vector<8x32xf32>
    %cst_106 = arith.constant dense<0.000000e+00> : vector<8xf32>
    %262 = vector.multi_reduction <add>, %261, %cst_106 [1] : vector<8x32xf32> to vector<8xf32>
    %263 = vector.shape_cast %262 : vector<8xf32> to vector<8x1xf32>
    %cst_107 = arith.constant 3.200000e+01 : f32
    %264 = vector.broadcast %cst_107 : f32 to vector<8x1xf32>
    %265 = arith.divf %263, %264 : vector<8x1xf32>
    %266 = vector.broadcast %256 : vector<8x1xf32> to vector<8x32xf32>
    %267 = arith.subf %250, %266 : vector<8x32xf32>
    %cst_108 = arith.constant 9.99999974E-6 : f32
    %268 = vector.broadcast %cst_108 : f32 to vector<8x1xf32>
    %269 = arith.addf %265, %268 : vector<8x1xf32>
    %270 = math.rsqrt %269 : vector<8x1xf32>
    %271 = vector.broadcast %270 : vector<8x1xf32> to vector<8x32xf32>
    %272 = arith.mulf %267, %271 : vector<8x32xf32>
    %273 = vector.broadcast %251 : vector<1x32xf32> to vector<8x32xf32>
    %274 = arith.mulf %272, %273 : vector<8x32xf32>
    %275 = vector.broadcast %252 : vector<1x32xf32> to vector<8x32xf32>
    %276 = arith.addf %274, %275 : vector<8x32xf32>
    %277 = arith.truncf %276 : vector<8x32xf32> to vector<8x32xbf16>
    %c0_109 = arith.constant 0 : index
    %c0_110 = arith.constant 0 : index
    %278 = vector.load %arg19[%c0_109, %c0_110] : memref<32x64xbf16, #tpu.memory_space<vmem>>, vector<32x64xbf16>
    %cst_111 = arith.constant dense<0.000000e+00> : vector<8x64xf32>
    %279 = tpu.matmul %277, %278, %cst_111 {dimension_numbers = #tpu.dot_dimension_numbers<[1], [0], [0], [1], [0, 0, 1, 1], [], []>} : vector<8x32xbf16>, vector<32x64xbf16>, vector<8x64xf32> -> vector<8x64xf32>
    %c0_112 = arith.constant 0 : index
    %c0_113 = arith.constant 0 : index
    %280 = vector.load %arg20[%c0_112, %c0_113] : memref<1x64xf32, #tpu.memory_space<vmem>>, vector<1x64xf32>
    %281 = vector.broadcast %280 : vector<1x64xf32> to vector<8x64xf32>
    %282 = arith.addf %279, %281 : vector<8x64xf32>
    %cst_114 = arith.constant 5.000000e-01 : f32
    %283 = vector.broadcast %cst_114 : f32 to vector<8x64xf32>
    %284 = arith.mulf %283, %282 : vector<8x64xf32>
    %cst_115 = arith.constant 0.707106769 : f32
    %285 = vector.broadcast %cst_115 : f32 to vector<8x64xf32>
    %286 = arith.mulf %282, %285 : vector<8x64xf32>
    %287 = math.erf %286 : vector<8x64xf32>
    %cst_116 = arith.constant 1.000000e+00 : f32
    %288 = vector.broadcast %cst_116 : f32 to vector<8x64xf32>
    %289 = arith.addf %288, %287 : vector<8x64xf32>
    %290 = arith.mulf %284, %289 : vector<8x64xf32>
    %291 = arith.truncf %290 : vector<8x64xf32> to vector<8x64xbf16>
    %c0_117 = arith.constant 0 : index
    %c0_118 = arith.constant 0 : index
    %292 = vector.load %arg21[%c0_117, %c0_118] : memref<64x32xbf16, #tpu.memory_space<vmem>>, vector<64x32xbf16>
    %cst_119 = arith.constant dense<0.000000e+00> : vector<8x32xf32>
    %293 = tpu.matmul %291, %292, %cst_119 {dimension_numbers = #tpu.dot_dimension_numbers<[1], [0], [0], [1], [0, 0, 1, 1], [], []>} : vector<8x64xbf16>, vector<64x32xbf16>, vector<8x32xf32> -> vector<8x32xf32>
    %c0_120 = arith.constant 0 : index
    %c0_121 = arith.constant 0 : index
    %294 = vector.load %arg22[%c0_120, %c0_121] : memref<1x32xf32, #tpu.memory_space<vmem>>, vector<1x32xf32>
    %295 = vector.broadcast %294 : vector<1x32xf32> to vector<8x32xf32>
    %296 = arith.addf %293, %295 : vector<8x32xf32>
    %297 = arith.addf %250, %296 : vector<8x32xf32>
    %c0_122 = arith.constant 0 : index
    %c0_123 = arith.constant 0 : index
    %c0_124 = arith.constant 0 : index
    %298 = vector.load %arg23[%c0_122, %c0_123, %c0_124] : memref<1x8x32xf32, #tpu.memory_space<vmem>>, vector<1x8x32xf32>
    %299 = vector.shape_cast %298 : vector<1x8x32xf32> to vector<8x32xf32>
    %300 = vector.shape_cast %297 : vector<8x32xf32> to vector<1x8x32xf32>
    tpu.vector_store %arg23[%c0_122, %c0_123, %c0_124], %300 {strides = array<i32>} : memref<1x8x32xf32, #tpu.memory_space<vmem>>, vector<1x8x32xf32>,
    return
  }
  func.func @transform_0(%arg0: i32) -> (i32, i32, i32) {
    %c0_i32 = arith.constant 0 : i32
    %c0_i32_0 = arith.constant 0 : i32
    %c0_i32_1 = arith.constant 0 : i32
    return %arg0, %c0_i32, %c0_i32_0 : i32, i32, i32
  }
  func.func @transform_1(%arg0: i32) -> (i32, i32, i32) {
    %c0_i32 = arith.constant 0 : i32
    %c0_i32_0 = arith.constant 0 : i32
    %c0_i32_1 = arith.constant 0 : i32
    return %arg0, %c0_i32, %c0_i32_0 : i32, i32, i32
  }
  func.func @transform_2(%arg0: i32) -> (i32, i32) {
    %c0_i32 = arith.constant 0 : i32
    %c0_i32_0 = arith.constant 0 : i32
    %c0_i32_1 = arith.constant 0 : i32
    return %c0_i32, %c0_i32_0 : i32, i32
  }
  func.func @transform_3(%arg0: i32) -> (i32, i32) {
    %c0_i32 = arith.constant 0 : i32
    %c0_i32_0 = arith.constant 0 : i32
    %c0_i32_1 = arith.constant 0 : i32
    return %c0_i32, %c0_i32_0 : i32, i32
  }
  func.func @transform_4(%arg0: i32) -> (i32, i32) {
    %c0_i32 = arith.constant 0 : i32
    %c0_i32_0 = arith.constant 0 : i32
    %c0_i32_1 = arith.constant 0 : i32
    return %c0_i32, %c0_i32_0 : i32, i32
  }
  func.func @transform_5(%arg0: i32) -> (i32, i32) {
    %c0_i32 = arith.constant 0 : i32
    %c0_i32_0 = arith.constant 0 : i32
    %c0_i32_1 = arith.constant 0 : i32
    return %c0_i32, %c0_i32_0 : i32, i32
  }
  func.func @transform_6(%arg0: i32) -> (i32, i32) {
    %c0_i32 = arith.constant 0 : i32
    %c0_i32_0 = arith.constant 0 : i32
    %c0_i32_1 = arith.constant 0 : i32
    return %c0_i32, %c0_i32_0 : i32, i32
  }
  func.func @transform_7(%arg0: i32) -> (i32, i32) {
    %c0_i32 = arith.constant 0 : i32
    %c0_i32_0 = arith.constant 0 : i32
    %c0_i32_1 = arith.constant 0 : i32
    return %c0_i32, %c0_i32_0 : i32, i32
  }
  func.func @transform_8(%arg0: i32) -> (i32, i32) {
    %c0_i32 = arith.constant 0 : i32
    %c0_i32_0 = arith.constant 0 : i32
    %c0_i32_1 = arith.constant 0 : i32
    return %c0_i32, %c0_i32_0 : i32, i32
  }
  func.func @transform_9(%arg0: i32) -> (i32, i32) {
    %c0_i32 = arith.constant 0 : i32
    %c0_i32_0 = arith.constant 0 : i32
    %c0_i32_1 = arith.constant 0 : i32
    return %c0_i32, %c0_i32_0 : i32, i32
  }
  func.func @transform_10(%arg0: i32) -> (i32, i32) {
    %c0_i32 = arith.constant 0 : i32
    %c0_i32_0 = arith.constant 0 : i32
    %c0_i32_1 = arith.constant 0 : i32
    return %c0_i32, %c0_i32_0 : i32, i32
  }
  func.func @transform_11(%arg0: i32) -> (i32, i32) {
    %c0_i32 = arith.constant 0 : i32
    %c0_i32_0 = arith.constant 0 : i32
    %c0_i32_1 = arith.constant 0 : i32
    return %c0_i32, %c0_i32_0 : i32, i32
  }
  func.func @transform_12(%arg0: i32) -> (i32, i32) {
    %c0_i32 = arith.constant 0 : i32
    %c0_i32_0 = arith.constant 0 : i32
    %c0_i32_1 = arith.constant 0 : i32
    return %c0_i32, %c0_i32_0 : i32, i32
  }
  func.func @transform_13(%arg0: i32) -> (i32, i32) {
    %c0_i32 = arith.constant 0 : i32
    %c0_i32_0 = arith.constant 0 : i32
    %c0_i32_1 = arith.constant 0 : i32
    return %c0_i32, %c0_i32_0 : i32, i32
  }
  func.func @transform_14(%arg0: i32) -> (i32, i32) {
    %c0_i32 = arith.constant 0 : i32
    %c0_i32_0 = arith.constant 0 : i32
    %c0_i32_1 = arith.constant 0 : i32
    return %c0_i32, %c0_i32_0 : i32, i32
  }
  func.func @transform_15(%arg0: i32) -> (i32, i32) {
    %c0_i32 = arith.constant 0 : i32
    %c0_i32_0 = arith.constant 0 : i32
    %c0_i32_1 = arith.constant 0 : i32
    return %c0_i32, %c0_i32_0 : i32, i32
  }
  func.func @transform_16(%arg0: i32) -> (i32, i32) {
    %c0_i32 = arith.constant 0 : i32
    %c0_i32_0 = arith.constant 0 : i32
    %c0_i32_1 = arith.constant 0 : i32
    return %c0_i32, %c0_i32_0 : i32, i32
  }
  func.func @transform_17(%arg0: i32) -> (i32, i32) {
    %c0_i32 = arith.constant 0 : i32
    %c0_i32_0 = arith.constant 0 : i32
    %c0_i32_1 = arith.constant 0 : i32
    return %c0_i32, %c0_i32_0 : i32, i32
  }
  func.func @transform_18(%arg0: i32) -> (i32, i32) {
    %c0_i32 = arith.constant 0 : i32
    %c0_i32_0 = arith.constant 0 : i32
    %c0_i32_1 = arith.constant 0 : i32
    return %c0_i32, %c0_i32_0 : i32, i32
  }
  func.func @transform_19(%arg0: i32) -> (i32, i32) {
    %c0_i32 = arith.constant 0 : i32
    %c0_i32_0 = arith.constant 0 : i32
    %c0_i32_1 = arith.constant 0 : i32
    return %c0_i32, %c0_i32_0 : i32, i32
  }
  func.func @transform_20(%arg0: i32) -> (i32, i32) {
    %c0_i32 = arith.constant 0 : i32
    %c0_i32_0 = arith.constant 0 : i32
    %c0_i32_1 = arith.constant 0 : i32
    return %c0_i32, %c0_i32_0 : i32, i32
  }
  func.func @transform_21(%arg0: i32) -> (i32, i32) {
    %c0_i32 = arith.constant 0 : i32
    %c0_i32_0 = arith.constant 0 : i32
    %c0_i32_1 = arith.constant 0 : i32
    return %c0_i32, %c0_i32_0 : i32, i32
  }
  func.func @transform_22(%arg0: i32) -> (i32, i32, i32) {
    %c0_i32 = arith.constant 0 : i32
    %c0_i32_0 = arith.constant 0 : i32
    %c0_i32_1 = arith.constant 0 : i32
    return %arg0, %c0_i32, %c0_i32_0 : i32, i32, i32
  }
}

</mosaic_0001>

<llo_original>
// kernel: tpu_custom_call.1
$region0: #{tpu_custom_call.1}
  #allocation0 [shape = 'u32[]', space=smem, size = 0x4, offset = 0x4, fixed_abs, tag = 'smem constant byte address 0x4 - core index']
  #allocation1 [shape = 'u32[144,128]{1,0:T(1,128)}', space=vmem, size = 0x12000, scoped, tag = 'internal scratch']
  #allocation2 [shape = 'f32[8,32]{1,0:T(8,128)}', space=vmem, size = 0x1000, scoped, tag = 'scratch operand']
  %s0 = inlined_call_operand.hbm [shape: f32[2,8,32], index: 0, kind: input, shape index: {}]
  %s1 = inlined_call_operand.hbm [shape: f32[2,8,32], index: 1, kind: input, shape index: {}]
  %s2 = inlined_call_operand.hbm [shape: f32[1,32], index: 2, kind: input, shape index: {}]
  %s3 = inlined_call_operand.hbm [shape: f32[1,32], index: 3, kind: input, shape index: {}]
  %s4 = inlined_call_operand.hbm [shape: bf16[32,96], index: 4, kind: input, shape index: {}]
  %s5 = inlined_call_operand.hbm [shape: f32[1,96], index: 5, kind: input, shape index: {}]
  %s6 = inlined_call_operand.hbm [shape: bf16[32,32], index: 6, kind: input, shape index: {}]
  %s7 = inlined_call_operand.hbm [shape: f32[1,32], index: 7, kind: input, shape index: {}]
  %s8 = inlined_call_operand.hbm [shape: f32[1,32], index: 8, kind: input, shape index: {}]
  %s9 = inlined_call_operand.hbm [shape: f32[1,32], index: 9, kind: input, shape index: {}]
  %s10 = inlined_call_operand.hbm [shape: bf16[32,32], index: 10, kind: input, shape index: {}]
  %s11 = inlined_call_operand.hbm [shape: f32[1,32], index: 11, kind: input, shape index: {}]
  %s12 = inlined_call_operand.hbm [shape: bf16[32,64], index: 12, kind: input, shape index: {}]
  %s13 = inlined_call_operand.hbm [shape: f32[1,64], index: 13, kind: input, shape index: {}]
  %s14 = inlined_call_operand.hbm [shape: bf16[32,32], index: 14, kind: input, shape index: {}]
  %s15 = inlined_call_operand.hbm [shape: f32[1,32], index: 15, kind: input, shape index: {}]
  %s16 = inlined_call_operand.hbm [shape: f32[1,32], index: 16, kind: input, shape index: {}]
  %s17 = inlined_call_operand.hbm [shape: f32[1,32], index: 17, kind: input, shape index: {}]
  %s18 = inlined_call_operand.hbm [shape: bf16[32,64], index: 18, kind: input, shape index: {}]
  %s19 = inlined_call_operand.hbm [shape: f32[1,64], index: 19, kind: input, shape index: {}]
  %s20 = inlined_call_operand.hbm [shape: bf16[64,32], index: 20, kind: input, shape index: {}]
  %s21 = inlined_call_operand.hbm [shape: f32[1,32], index: 21, kind: input, shape index: {}]
  %s22 = inlined_call_operand.hbm [shape: f32[2,8,32], index: 22, kind: output, shape index: {}]
  %s23 = sld [smem:[#allocation0]]
  $region209: #{tpu_custom_call.1} parent=0
    _
  %s25 = ssub.s32 1, %s23
  %s26 = scalar_select 0, %s25, %s23
  $region1: #{tpu_custom_call.1} parent=0
    #allocation3 [shape = 'u8[8192]{0}', space=vmem, size = 0x2000, scoped, tag = 'input window, operand 0']
    #allocation4 [shape = 's32[2]{0}', space=sflag, size = 0x8, scoped, tag = 'scoped memory for tpu_custom_call.1']
    #allocation5 [shape = 's32[2]{0}', space=sflag, size = 0x8, scoped, tag = 'scoped memory for tpu_custom_call.1']
    #allocation6 [shape = 'u8[8192]{0}', space=vmem, size = 0x2000, scoped, tag = 'input window, operand 1']
    #allocation7 [shape = 's32[2]{0}', space=sflag, size = 0x8, scoped, tag = 'scoped memory for tpu_custom_call.1']
    #allocation8 [shape = 'u8[512]{0}', space=vmem, size = 0x400, scoped, tag = 'input window, operand 2, single buffered']
    #allocation9 [shape = 'u8[512]{0}', space=vmem, size = 0x400, scoped, tag = 'input window, operand 3, single buffered']
    #allocation10 [shape = 's32[1]{0}', space=sflag, size = 0x4, scoped, tag = 'scoped memory for tpu_custom_call.1']
    #allocation11 [shape = 'u8[8192]{0}', space=vmem, size = 0x2000, scoped, tag = 'input window, operand 4, single buffered']
    #allocation12 [shape = 'u8[512]{0}', space=vmem, size = 0x400, scoped, tag = 'input window, operand 5, single buffered']
    #allocation13 [shape = 's32[1]{0}', space=sflag, size = 0x4, scoped, tag = 'scoped memory for tpu_custom_call.1']
    #allocation14 [shape = 'u8[8192]{0}', space=vmem, size = 0x2000, scoped, tag = 'input window, operand 6, single buffered']
    #allocation15 [shape = 'u8[512]{0}', space=vmem, size = 0x400, scoped, tag = 'input window, operand 7, single buffered']
    #allocation16 [shape = 's32[1]{0}', space=sflag, size = 0x4, scoped, tag = 'scoped memory for tpu_custom_call.1']
    #allocation17 [shape = 'u8[512]{0}', space=vmem, size = 0x400, scoped, tag = 'input window, operand 8, single buffered']
    #allocation18 [shape = 'u8[512]{0}', space=vmem, size = 0x400, scoped, tag = 'input window, operand 9, single buffered']
    #allocation19 [shape = 's32[1]{0}', space=sflag, size = 0x4, scoped, tag = 'scoped memory for tpu_custom_call.1']
    #allocation20 [shape = 'u8[8192]{0}', space=vmem, size = 0x2000, scoped, tag = 'input window, operand 10, single buffered']
    #allocation21 [shape = 'u8[512]{0}', space=vmem, size = 0x400, scoped, tag = 'input window, operand 11, single buffered']
    #allocation22 [shape = 's32[1]{0}', space=sflag, size = 0x4, scoped, tag = 'scoped memory for tpu_custom_call.1']
    #allocation23 [shape = 'u8[8192]{0}', space=vmem, size = 0x2000, scoped, tag = 'input window, operand 12, single buffered']
    #allocation24 [shape = 'u8[512]{0}', space=vmem, size = 0x400, scoped, tag = 'input window, operand 13, single buffered']
    #allocation25 [shape = 's32[1]{0}', space=sflag, size = 0x4, scoped, tag = 'scoped memory for tpu_custom_call.1']
    #allocation26 [shape = 'u8[8192]{0}', space=vmem, size = 0x2000, scoped, tag = 'input window, operand 14, single buffered']
    #allocation27 [shape = 'u8[512]{0}', space=vmem, size = 0x400, scoped, tag = 'input window, operand 15, single buffered']
    #allocation28 [shape = 's32[1]{0}', space=sflag, size = 0x4, scoped, tag = 'scoped memory for tpu_custom_call.1']
    #allocation29 [shape = 'u8[512]{0}', space=vmem, size = 0x400, scoped, tag = 'input window, operand 16, single buffered']
    #allocation30 [shape = 'u8[512]{0}', space=vmem, size = 0x400, scoped, tag = 'input window, operand 17, single buffered']
    #allocation31 [shape = 's32[1]{0}', space=sflag, size = 0x4, scoped, tag = 'scoped memory for tpu_custom_call.1']
    #allocation32 [shape = 'u8[8192]{0}', space=vmem, size = 0x2000, scoped, tag = 'input window, operand 18, single buffered']
    #allocation33 [shape = 'u8[512]{0}', space=vmem, size = 0x400, scoped, tag = 'input window, operand 19, single buffered']
    #allocation34 [shape = 's32[1]{0}', space=sflag, size = 0x4, scoped, tag = 'scoped memory for tpu_custom_call.1']
    #allocation35 [shape = 'u8[16384]{0}', space=vmem, size = 0x4000, scoped, tag = 'input window, operand 20, single buffered']
    #allocation36 [shape = 'u8[512]{0}', space=vmem, size = 0x400, scoped, tag = 'input window, operand 21, single buffered']
    #allocation37 [shape = 's32[1]{0}', space=sflag, size = 0x4, scoped, tag = 'scoped memory for tpu_custom_call.1']
    #allocation38 [shape = 'u8[8192]{0}', space=vmem, size = 0x2000, scoped, tag = 'output window, operand 0']
    %27 = vsyncpa [#allocation4], 0
    %s28 = scalar_lea.sflag [#allocation4], 1
    %29 = vsyncpa %s28, 0
    %30 = vsyncpa [#allocation7], 0
    %s31 = scalar_lea.sflag [#allocation7], 1
    %32 = vsyncpa %s31, 0
    %33 = vsyncpa [#allocation10], 0
    %34 = vsyncpa [#allocation13], 0
    %35 = vsyncpa [#allocation16], 0
    %36 = vsyncpa [#allocation19], 0
    %37 = vsyncpa [#allocation22], 0
    %38 = vsyncpa [#allocation25], 0
    %39 = vsyncpa [#allocation28], 0
    %40 = vsyncpa [#allocation31], 0
    %41 = vsyncpa [#allocation34], 0
    %42 = vsyncpa [#allocation37], 0
    %43 = vsyncpa [#allocation5], 0
    %s44 = scalar_lea.sflag [#allocation5], 1
    %45 = vsyncpa %s44, 0
    loop: start=0, step=1, limit=4
    $region2: #{tpu_custom_call.1} parent=1 // loop_pre_header
      _
    $region3: #{tpu_custom_call.1} parent=1 // loop_header
      %s47 = sphi 0, %s51
      %p48 = scmp.ge.s32.totalorder %s47, 4
      %s57 = sphi 0, %s59
      %s60 = sphi 0, %s57
      %s61 = sphi 0, %s60
      %s77 = sphi 0, %s61
      %s83 = sphi 0, %s85
      %s86 = sphi 0, %s83
      %s87 = sphi 0, %s86
      %s103 = sphi 0, %s87
      %s107 = sphi 0, %s107
      %s109 = sphi 0, %s107
      %s110 = sphi 0, %s109
      %s124 = sphi 0, %s110
      %s128 = sphi 0, %s128
      %s130 = sphi 0, %s128
      %s131 = sphi 0, %s130
      %s145 = sphi 0, %s131
      %s149 = sphi 0, %s149
      %s151 = sphi 0, %s149
      %s152 = sphi 0, %s151
      %s166 = sphi 0, %s152
      %s170 = sphi 0, %s170
      %s172 = sphi 0, %s170
      %s173 = sphi 0, %s172
      %s187 = sphi 0, %s173
      %s191 = sphi 0, %s191
      %s193 = sphi 0, %s191
      %s194 = sphi 0, %s193
      %s208 = sphi 0, %s194
      %s212 = sphi 0, %s212
      %s214 = sphi 0, %s212
      %s215 = sphi 0, %s214
      %s229 = sphi 0, %s215
      %s233 = sphi 0, %s233
      %s235 = sphi 0, %s233
      %s236 = sphi 0, %s235
      %s250 = sphi 0, %s236
      %s254 = sphi 0, %s254
      %s256 = sphi 0, %s254
      %s257 = sphi 0, %s256
      %s271 = sphi 0, %s257
      %s275 = sphi 0, %s275
      %s277 = sphi 0, %s275
      %s278 = sphi 0, %s277
      %s292 = sphi 0, %s278
      %s296 = sphi 0, %s296
      %s298 = sphi 0, %s296
      %s299 = sphi 0, %s298
      %s313 = sphi 0, %s299
      %s317 = sphi 0, %s317
      %s319 = sphi 0, %s317
      %s320 = sphi 0, %s319
      %s334 = sphi 0, %s320
      %s338 = sphi 0, %s338
      %s340 = sphi 0, %s338
      %s341 = sphi 0, %s340
      %s355 = sphi 0, %s341
      %s359 = sphi 0, %s359
      %s361 = sphi 0, %s359
      %s362 = sphi 0, %s361
      %s376 = sphi 0, %s362
      %s380 = sphi 0, %s380
      %s382 = sphi 0, %s380
      %s383 = sphi 0, %s382
      %s397 = sphi 0, %s383
      %s401 = sphi 0, %s401
      %s403 = sphi 0, %s401
      %s404 = sphi 0, %s403
      %s418 = sphi 0, %s404
      %s422 = sphi 0, %s422
      %s424 = sphi 0, %s422
      %s425 = sphi 0, %s424
      %s439 = sphi 0, %s425
      %s443 = sphi 0, %s443
      %s445 = sphi 0, %s443
      %s446 = sphi 0, %s445
      %s460 = sphi 0, %s446
      %s464 = sphi 0, %s464
      %s466 = sphi 0, %s464
      %s467 = sphi 0, %s466
      %s481 = sphi 0, %s467
      %s485 = sphi 0, %s485
      %s487 = sphi 0, %s485
      %s488 = sphi 0, %s487
      %s502 = sphi 0, %s488
      %s506 = sphi 0, %s506
      %s508 = sphi 0, %s506
      %s509 = sphi 0, %s508
      %s523 = sphi 0, %s509
      %s529 = sphi 0, %s531
      %s532 = sphi 0, %s529
      %s533 = sphi 0, %s532
      %s549 = sphi 0, %s533
    $region4: #{tpu_custom_call.1} parent=1 // loop_header_branch
      %50 = sbr.rel (%p48) target = $region8
    $region5: #{tpu_custom_call.1} parent=1 // loop_body
      %s52 = ssub.s32 %s47, 1
      %s53 = ssub.s32 %s47, 2
      %s54 = sadd.s32 %s47, 1
      %s55 = ssub.s32 %s47, %s54
      %p56 = scmp.eq.s32.totalorder %s55, 0
      %s58 = sadd.s32 %s57, 1
      %s59 = scalar_select %p56, %s57, %s58
      %p62 = pneg %p56
      %p63 = scmp.eq.s32.totalorder %s47, 1
      %p64 = por %p62, %p63
      %p65 = scmp.ne.s32.totalorder %s57, %s60
      %p66 = scmp.eq.s32.totalorder %s47, 0
      %p67 = por %p65, %p66
      %p68 = scmp.ne.s32.totalorder %s57, %s60
      %p69 = scmp.eq.s32.totalorder %s52, 1
      %p70 = por %p68, %p69
      %p71 = scmp.ne.s32.totalorder %s60, %s61
      %p72 = scmp.eq.s32.totalorder %s52, 0
      %p73 = por %p71, %p72
      %p74 = scmp.ne.s32.totalorder %s60, %s61
      %p75 = scmp.eq.s32.totalorder %s53, 1
      %p76 = por %p74, %p75
      %p78 = scmp.ne.s32.totalorder %s61, %s77
      %p79 = scmp.eq.s32.totalorder %s53, 0
      %p80 = por %p78, %p79
      %s81 = ssub.s32 %s47, %s54
      %p82 = scmp.eq.s32.totalorder %s81, 0
      %s84 = sadd.s32 %s83, 1
      %s85 = scalar_select %p82, %s83, %s84
      %p88 = pneg %p82
      %p89 = scmp.eq.s32.totalorder %s47, 1
      %p90 = por %p88, %p89
      %p91 = scmp.ne.s32.totalorder %s83, %s86
      %p92 = scmp.eq.s32.totalorder %s47, 0
      %p93 = por %p91, %p92
      %p94 = scmp.ne.s32.totalorder %s83, %s86
      %p95 = scmp.eq.s32.totalorder %s52, 1
      %p96 = por %p94, %p95
      %p97 = scmp.ne.s32.totalorder %s86, %s87
      %p98 = scmp.eq.s32.totalorder %s52, 0
      %p99 = por %p97, %p98
      %p100 = scmp.ne.s32.totalorder %s86, %s87
      %p101 = scmp.eq.s32.totalorder %s53, 1
      %p102 = por %p100, %p101
      %p104 = scmp.ne.s32.totalorder %s87, %s103
      %p105 = scmp.eq.s32.totalorder %s53, 0
      %p106 = por %p104, %p105
      %s108 = sadd.s32 %s107, 1
      %p111 = scmp.eq.s32.totalorder %s47, 1
      %p112 = scmp.ne.s32.totalorder %s107, %s109
      %p113 = scmp.eq.s32.totalorder %s47, 0
      %p114 = por %p112, %p113
      %p115 = scmp.ne.s32.totalorder %s107, %s109
      %p116 = scmp.eq.s32.totalorder %s52, 1
      %p117 = por %p115, %p116
      %p118 = scmp.ne.s32.totalorder %s109, %s110
      %p119 = scmp.eq.s32.totalorder %s52, 0
      %p120 = por %p118, %p119
      %p121 = scmp.ne.s32.totalorder %s109, %s110
      %p122 = scmp.eq.s32.totalorder %s53, 1
      %p123 = por %p121, %p122
      %p125 = scmp.ne.s32.totalorder %s110, %s124
      %p126 = scmp.eq.s32.totalorder %s53, 0
      %p127 = por %p125, %p126
      %s129 = sadd.s32 %s128, 1
      %p132 = scmp.eq.s32.totalorder %s47, 1
      %p133 = scmp.ne.s32.totalorder %s128, %s130
      %p134 = scmp.eq.s32.totalorder %s47, 0
      %p135 = por %p133, %p134
      %p136 = scmp.ne.s32.totalorder %s128, %s130
      %p137 = scmp.eq.s32.totalorder %s52, 1
      %p138 = por %p136, %p137
      %p139 = scmp.ne.s32.totalorder %s130, %s131
      %p140 = scmp.eq.s32.totalorder %s52, 0
      %p141 = por %p139, %p140
      %p142 = scmp.ne.s32.totalorder %s130, %s131
      %p143 = scmp.eq.s32.totalorder %s53, 1
      %p144 = por %p142, %p143
      %p146 = scmp.ne.s32.totalorder %s131, %s145
      %p147 = scmp.eq.s32.totalorder %s53, 0
      %p148 = por %p146, %p147
      %s150 = sadd.s32 %s149, 1
      %p153 = scmp.eq.s32.totalorder %s47, 1
      %p154 = scmp.ne.s32.totalorder %s149, %s151
      %p155 = scmp.eq.s32.totalorder %s47, 0
      %p156 = por %p154, %p155
      %p157 = scmp.ne.s32.totalorder %s149, %s151
      %p158 = scmp.eq.s32.totalorder %s52, 1
      %p159 = por %p157, %p158
      %p160 = scmp.ne.s32.totalorder %s151, %s152
      %p161 = scmp.eq.s32.totalorder %s52, 0
      %p162 = por %p160, %p161
      %p163 = scmp.ne.s32.totalorder %s151, %s152
      %p164 = scmp.eq.s32.totalorder %s53, 1
      %p165 = por %p163, %p164
      %p167 = scmp.ne.s32.totalorder %s152, %s166
      %p168 = scmp.eq.s32.totalorder %s53, 0
      %p169 = por %p167, %p168
      %s171 = sadd.s32 %s170, 1
      %p174 = scmp.eq.s32.totalorder %s47, 1
      %p175 = scmp.ne.s32.totalorder %s170, %s172
      %p176 = scmp.eq.s32.totalorder %s47, 0
      %p177 = por %p175, %p176
      %p178 = scmp.ne.s32.totalorder %s170, %s172
      %p179 = scmp.eq.s32.totalorder %s52, 1
      %p180 = por %p178, %p179
      %p181 = scmp.ne.s32.totalorder %s172, %s173
      %p182 = scmp.eq.s32.totalorder %s52, 0
      %p183 = por %p181, %p182
      %p184 = scmp.ne.s32.totalorder %s172, %s173
      %p185 = scmp.eq.s32.totalorder %s53, 1
      %p186 = por %p184, %p185
      %p188 = scmp.ne.s32.totalorder %s173, %s187
      %p189 = scmp.eq.s32.totalorder %s53, 0
      %p190 = por %p188, %p189
      %s192 = sadd.s32 %s191, 1
      %p195 = scmp.eq.s32.totalorder %s47, 1
      %p196 = scmp.ne.s32.totalorder %s191, %s193
      %p197 = scmp.eq.s32.totalorder %s47, 0
      %p198 = por %p196, %p197
      %p199 = scmp.ne.s32.totalorder %s191, %s193
      %p200 = scmp.eq.s32.totalorder %s52, 1
      %p201 = por %p199, %p200
      %p202 = scmp.ne.s32.totalorder %s193, %s194
      %p203 = scmp.eq.s32.totalorder %s52, 0
      %p204 = por %p202, %p203
      %p205 = scmp.ne.s32.totalorder %s193, %s194
      %p206 = scmp.eq.s32.totalorder %s53, 1
      %p207 = por %p205, %p206
      %p209 = scmp.ne.s32.totalorder %s194, %s208
      %p210 = scmp.eq.s32.totalorder %s53, 0
      %p211 = por %p209, %p210
      %s213 = sadd.s32 %s212, 1
      %p216 = scmp.eq.s32.totalorder %s47, 1
      %p217 = scmp.ne.s32.totalorder %s212, %s214
      %p218 = scmp.eq.s32.totalorder %s47, 0
      %p219 = por %p217, %p218
      %p220 = scmp.ne.s32.totalorder %s212, %s214
      %p221 = scmp.eq.s32.totalorder %s52, 1
      %p222 = por %p220, %p221
      %p223 = scmp.ne.s32.totalorder %s214, %s215
      %p224 = scmp.eq.s32.totalorder %s52, 0
      %p225 = por %p223, %p224
      %p226 = scmp.ne.s32.totalorder %s214, %s215
      %p227 = scmp.eq.s32.totalorder %s53, 1
      %p228 = por %p226, %p227
      %p230 = scmp.ne.s32.totalorder %s215, %s229
      %p231 = scmp.eq.s32.totalorder %s53, 0
      %p232 = por %p230, %p231
      %s234 = sadd.s32 %s233, 1
      %p237 = scmp.eq.s32.totalorder %s47, 1
      %p238 = scmp.ne.s32.totalorder %s233, %s235
      %p239 = scmp.eq.s32.totalorder %s47, 0
      %p240 = por %p238, %p239
      %p241 = scmp.ne.s32.totalorder %s233, %s235
      %p242 = scmp.eq.s32.totalorder %s52, 1
      %p243 = por %p241, %p242
      %p244 = scmp.ne.s32.totalorder %s235, %s236
      %p245 = scmp.eq.s32.totalorder %s52, 0
      %p246 = por %p244, %p245
      %p247 = scmp.ne.s32.totalorder %s235, %s236
      %p248 = scmp.eq.s32.totalorder %s53, 1
      %p249 = por %p247, %p248
      %p251 = scmp.ne.s32.totalorder %s236, %s250
      %p252 = scmp.eq.s32.totalorder %s53, 0
      %p253 = por %p251, %p252
      %s255 = sadd.s32 %s254, 1
      %p258 = scmp.eq.s32.totalorder %s47, 1
      %p259 = scmp.ne.s32.totalorder %s254, %s256
      %p260 = scmp.eq.s32.totalorder %s47, 0
      %p261 = por %p259, %p260
      %p262 = scmp.ne.s32.totalorder %s254, %s256
      %p263 = scmp.eq.s32.totalorder %s52, 1
      %p264 = por %p262, %p263
      %p265 = scmp.ne.s32.totalorder %s256, %s257
      %p266 = scmp.eq.s32.totalorder %s52, 0
      %p267 = por %p265, %p266
      %p268 = scmp.ne.s32.totalorder %s256, %s257
      %p269 = scmp.eq.s32.totalorder %s53, 1
      %p270 = por %p268, %p269
      %p272 = scmp.ne.s32.totalorder %s257, %s271
      %p273 = scmp.eq.s32.totalorder %s53, 0
      %p274 = por %p272, %p273
      %s276 = sadd.s32 %s275, 1
      %p279 = scmp.eq.s32.totalorder %s47, 1
      %p280 = scmp.ne.s32.totalorder %s275, %s277
      %p281 = scmp.eq.s32.totalorder %s47, 0
      %p282 = por %p280, %p281
      %p283 = scmp.ne.s32.totalorder %s275, %s277
      %p284 = scmp.eq.s32.totalorder %s52, 1
      %p285 = por %p283, %p284
      %p286 = scmp.ne.s32.totalorder %s277, %s278
      %p287 = scmp.eq.s32.totalorder %s52, 0
      %p288 = por %p286, %p287
      %p289 = scmp.ne.s32.totalorder %s277, %s278
      %p290 = scmp.eq.s32.totalorder %s53, 1
      %p291 = por %p289, %p290
      %p293 = scmp.ne.s32.totalorder %s278, %s292
      %p294 = scmp.eq.s32.totalorder %s53, 0
      %p295 = por %p293, %p294
      %s297 = sadd.s32 %s296, 1
      %p300 = scmp.eq.s32.totalorder %s47, 1
      %p301 = scmp.ne.s32.totalorder %s296, %s298
      %p302 = scmp.eq.s32.totalorder %s47, 0
      %p303 = por %p301, %p302
      %p304 = scmp.ne.s32.totalorder %s296, %s298
      %p305 = scmp.eq.s32.totalorder %s52, 1
      %p306 = por %p304, %p305
      %p307 = scmp.ne.s32.totalorder %s298, %s299
      %p308 = scmp.eq.s32.totalorder %s52, 0
      %p309 = por %p307, %p308
      %p310 = scmp.ne.s32.totalorder %s298, %s299
      %p311 = scmp.eq.s32.totalorder %s53, 1
      %p312 = por %p310, %p311
      %p314 = scmp.ne.s32.totalorder %s299, %s313
      %p315 = scmp.eq.s32.totalorder %s53, 0
      %p316 = por %p314, %p315
      %s318 = sadd.s32 %s317, 1
      %p321 = scmp.eq.s32.totalorder %s47, 1
      %p322 = scmp.ne.s32.totalorder %s317, %s319
      %p323 = scmp.eq.s32.totalorder %s47, 0
      %p324 = por %p322, %p323
      %p325 = scmp.ne.s32.totalorder %s317, %s319
      %p326 = scmp.eq.s32.totalorder %s52, 1
      %p327 = por %p325, %p326
      %p328 = scmp.ne.s32.totalorder %s319, %s320
      %p329 = scmp.eq.s32.totalorder %s52, 0
      %p330 = por %p328, %p329
      %p331 = scmp.ne.s32.totalorder %s319, %s320
      %p332 = scmp.eq.s32.totalorder %s53, 1
      %p333 = por %p331, %p332
      %p335 = scmp.ne.s32.totalorder %s320, %s334
      %p336 = scmp.eq.s32.totalorder %s53, 0
      %p337 = por %p335, %p336
      %s339 = sadd.s32 %s338, 1
      %p342 = scmp.eq.s32.totalorder %s47, 1
      %p343 = scmp.ne.s32.totalorder %s338, %s340
      %p344 = scmp.eq.s32.totalorder %s47, 0
      %p345 = por %p343, %p344
      %p346 = scmp.ne.s32.totalorder %s338, %s340
      %p347 = scmp.eq.s32.totalorder %s52, 1
      %p348 = por %p346, %p347
      %p349 = scmp.ne.s32.totalorder %s340, %s341
      %p350 = scmp.eq.s32.totalorder %s52, 0
      %p351 = por %p349, %p350
      %p352 = scmp.ne.s32.totalorder %s340, %s341
      %p353 = scmp.eq.s32.totalorder %s53, 1
      %p354 = por %p352, %p353
      %p356 = scmp.ne.s32.totalorder %s341, %s355
      %p357 = scmp.eq.s32.totalorder %s53, 0
      %p358 = por %p356, %p357
      %s360 = sadd.s32 %s359, 1
      %p363 = scmp.eq.s32.totalorder %s47, 1
      %p364 = scmp.ne.s32.totalorder %s359, %s361
      %p365 = scmp.eq.s32.totalorder %s47, 0
      %p366 = por %p364, %p365
      %p367 = scmp.ne.s32.totalorder %s359, %s361
      %p368 = scmp.eq.s32.totalorder %s52, 1
      %p369 = por %p367, %p368
      %p370 = scmp.ne.s32.totalorder %s361, %s362
      %p371 = scmp.eq.s32.totalorder %s52, 0
      %p372 = por %p370, %p371
      %p373 = scmp.ne.s32.totalorder %s361, %s362
      %p374 = scmp.eq.s32.totalorder %s53, 1
      %p375 = por %p373, %p374
      %p377 = scmp.ne.s32.totalorder %s362, %s376
      %p378 = scmp.eq.s32.totalorder %s53, 0
      %p379 = por %p377, %p378
      %s381 = sadd.s32 %s380, 1
      %p384 = scmp.eq.s32.totalorder %s47, 1
      %p385 = scmp.ne.s32.totalorder %s380, %s382
      %p386 = scmp.eq.s32.totalorder %s47, 0
      %p387 = por %p385, %p386
      %p388 = scmp.ne.s32.totalorder %s380, %s382
      %p389 = scmp.eq.s32.totalorder %s52, 1
      %p390 = por %p388, %p389
      %p391 = scmp.ne.s32.totalorder %s382, %s383
      %p392 = scmp.eq.s32.totalorder %s52, 0
      %p393 = por %p391, %p392
      %p394 = scmp.ne.s32.totalorder %s382, %s383
      %p395 = scmp.eq.s32.totalorder %s53, 1
      %p396 = por %p394, %p395
      %p398 = scmp.ne.s32.totalorder %s383, %s397
      %p399 = scmp.eq.s32.totalorder %s53, 0
      %p400 = por %p398, %p399
      %s402 = sadd.s32 %s401, 1
      %p405 = scmp.eq.s32.totalorder %s47, 1
      %p406 = scmp.ne.s32.totalorder %s401, %s403
      %p407 = scmp.eq.s32.totalorder %s47, 0
      %p408 = por %p406, %p407
      %p409 = scmp.ne.s32.totalorder %s401, %s403
      %p410 = scmp.eq.s32.totalorder %s52, 1
      %p411 = por %p409, %p410
      %p412 = scmp.ne.s32.totalorder %s403, %s404
      %p413 = scmp.eq.s32.totalorder %s52, 0
      %p414 = por %p412, %p413
      %p415 = scmp.ne.s32.totalorder %s403, %s404
      %p416 = scmp.eq.s32.totalorder %s53, 1
      %p417 = por %p415, %p416
      %p419 = scmp.ne.s32.totalorder %s404, %s418
      %p420 = scmp.eq.s32.totalorder %s53, 0
      %p421 = por %p419, %p420
      %s423 = sadd.s32 %s422, 1
      %p426 = scmp.eq.s32.totalorder %s47, 1
      %p427 = scmp.ne.s32.totalorder %s422, %s424
      %p428 = scmp.eq.s32.totalorder %s47, 0
      %p429 = por %p427, %p428
      %p430 = scmp.ne.s32.totalorder %s422, %s424
      %p431 = scmp.eq.s32.totalorder %s52, 1
      %p432 = por %p430, %p431
      %p433 = scmp.ne.s32.totalorder %s424, %s425
      %p434 = scmp.eq.s32.totalorder %s52, 0
      %p435 = por %p433, %p434
      %p436 = scmp.ne.s32.totalorder %s424, %s425
      %p437 = scmp.eq.s32.totalorder %s53, 1
      %p438 = por %p436, %p437
      %p440 = scmp.ne.s32.totalorder %s425, %s439
      %p441 = scmp.eq.s32.totalorder %s53, 0
      %p442 = por %p440, %p441
      %s444 = sadd.s32 %s443, 1
      %p447 = scmp.eq.s32.totalorder %s47, 1
      %p448 = scmp.ne.s32.totalorder %s443, %s445
      %p449 = scmp.eq.s32.totalorder %s47, 0
      %p450 = por %p448, %p449
      %p451 = scmp.ne.s32.totalorder %s443, %s445
      %p452 = scmp.eq.s32.totalorder %s52, 1
      %p453 = por %p451, %p452
      %p454 = scmp.ne.s32.totalorder %s445, %s446
      %p455 = scmp.eq.s32.totalorder %s52, 0
      %p456 = por %p454, %p455
      %p457 = scmp.ne.s32.totalorder %s445, %s446
      %p458 = scmp.eq.s32.totalorder %s53, 1
      %p459 = por %p457, %p458
      %p461 = scmp.ne.s32.totalorder %s446, %s460
      %p462 = scmp.eq.s32.totalorder %s53, 0
      %p463 = por %p461, %p462
      %s465 = sadd.s32 %s464, 1
      %p468 = scmp.eq.s32.totalorder %s47, 1
      %p469 = scmp.ne.s32.totalorder %s464, %s466
      %p470 = scmp.eq.s32.totalorder %s47, 0
      %p471 = por %p469, %p470
      %p472 = scmp.ne.s32.totalorder %s464, %s466
      %p473 = scmp.eq.s32.totalorder %s52, 1
      %p474 = por %p472, %p473
      %p475 = scmp.ne.s32.totalorder %s466, %s467
      %p476 = scmp.eq.s32.totalorder %s52, 0
      %p477 = por %p475, %p476
      %p478 = scmp.ne.s32.totalorder %s466, %s467
      %p479 = scmp.eq.s32.totalorder %s53, 1
      %p480 = por %p478, %p479
      %p482 = scmp.ne.s32.totalorder %s467, %s481
      %p483 = scmp.eq.s32.totalorder %s53, 0
      %p484 = por %p482, %p483
      %s486 = sadd.s32 %s485, 1
      %p489 = scmp.eq.s32.totalorder %s47, 1
      %p490 = scmp.ne.s32.totalorder %s485, %s487
      %p491 = scmp.eq.s32.totalorder %s47, 0
      %p492 = por %p490, %p491
      %p493 = scmp.ne.s32.totalorder %s485, %s487
      %p494 = scmp.eq.s32.totalorder %s52, 1
      %p495 = por %p493, %p494
      %p496 = scmp.ne.s32.totalorder %s487, %s488
      %p497 = scmp.eq.s32.totalorder %s52, 0
      %p498 = por %p496, %p497
      %p499 = scmp.ne.s32.totalorder %s487, %s488
      %p500 = scmp.eq.s32.totalorder %s53, 1
      %p501 = por %p499, %p500
      %p503 = scmp.ne.s32.totalorder %s488, %s502
      %p504 = scmp.eq.s32.totalorder %s53, 0
      %p505 = por %p503, %p504
      %s507 = sadd.s32 %s506, 1
      %p510 = scmp.eq.s32.totalorder %s47, 1
      %p511 = scmp.ne.s32.totalorder %s506, %s508
      %p512 = scmp.eq.s32.totalorder %s47, 0
      %p513 = por %p511, %p512
      %p514 = scmp.ne.s32.totalorder %s506, %s508
      %p515 = scmp.eq.s32.totalorder %s52, 1
      %p516 = por %p514, %p515
      %p517 = scmp.ne.s32.totalorder %s508, %s509
      %p518 = scmp.eq.s32.totalorder %s52, 0
      %p519 = por %p517, %p518
      %p520 = scmp.ne.s32.totalorder %s508, %s509
      %p521 = scmp.eq.s32.totalorder %s53, 1
      %p522 = por %p520, %p521
      %p524 = scmp.ne.s32.totalorder %s509, %s523
      %p525 = scmp.eq.s32.totalorder %s53, 0
      %p526 = por %p524, %p525
      %s527 = ssub.s32 %s47, %s54
      %p528 = scmp.eq.s32.totalorder %s527, 0
      %s530 = sadd.s32 %s529, 1
      %s531 = scalar_select %p528, %s529, %s530
      %p534 = pneg %p528
      %p535 = scmp.eq.s32.totalorder %s47, 1
      %p536 = por %p534, %p535
      %p537 = scmp.ne.s32.totalorder %s529, %s532
      %p538 = scmp.eq.s32.totalorder %s47, 0
      %p539 = por %p537, %p538
      %p540 = scmp.ne.s32.totalorder %s529, %s532
      %p541 = scmp.eq.s32.totalorder %s52, 1
      %p542 = por %p540, %p541
      %p543 = scmp.ne.s32.totalorder %s532, %s533
      %p544 = scmp.eq.s32.totalorder %s52, 0
      %p545 = por %p543, %p544
      %p546 = scmp.ne.s32.totalorder %s532, %s533
      %p547 = scmp.eq.s32.totalorder %s53, 1
      %p548 = por %p546, %p547
      %p550 = scmp.ne.s32.totalorder %s533, %s549
      %p551 = scmp.eq.s32.totalorder %s53, 0
      %p552 = por %p550, %p551
      %p553 = scmp.le.s32.totalorder 1, %s47
      %p554 = scmp.lt.s32.totalorder %s47, 3
      %p555 = pnand %p553, %p554
      %p556 = pneg %p555
      // Predicated region
      $region9: #{tpu_custom_call.1} parent=5 // pred_check
        _
      $region10: #{tpu_custom_call.1} parent=5 // pred_check_branch
        %558 = sbr.rel (%p555) target = $region12
      $region11: #{tpu_custom_call.1} parent=5 // pred_region
        %s559 = ssub.s32 %s47, 1
        // Predicated region
        $region13: #{tpu_custom_call.1} parent=11 // pred_check
          %p560 = pneg %p120
        $region14: #{tpu_custom_call.1} parent=11 // pred_check_branch
          %562 = sbr.rel (%p560) target = $region16
        $region15: #{tpu_custom_call.1} parent=11 // pred_region
          %s564 = ssub.s32 16, 16
          %565 = vsyncadd [#allocation7], %s564
          %s567 = sshll.u32 [#allocation8], 4
          %s568 = int_to_ptr.vmem [resolvable:$true] %s567
          %570 = dma.hbm_to_vmem [thread:$0]  %s2, 16, %s568, [#allocation7]
        $region16: #{tpu_custom_call.1} parent=11 // pred_fallthru
          _
        // Predicated region
        $region17: #{tpu_custom_call.1} parent=11 // pred_check
          %p571 = pneg %p141
        $region18: #{tpu_custom_call.1} parent=11 // pred_check_branch
          %573 = sbr.rel (%p571) target = $region20
        $region19: #{tpu_custom_call.1} parent=11 // pred_region
          %s575 = ssub.s32 16, 16
          %576 = vsyncadd [#allocation10], %s575
          %s578 = sshll.u32 [#allocation9], 4
          %s579 = int_to_ptr.vmem [resolvable:$true] %s578
          %581 = dma.hbm_to_vmem [thread:$0]  %s3, 16, %s579, [#allocation10]
        $region20: #{tpu_custom_call.1} parent=11 // pred_fallthru
          _
        // Predicated region
        $region21: #{tpu_custom_call.1} parent=11 // pred_check
          %p582 = pneg %p162
        $region22: #{tpu_custom_call.1} parent=11 // pred_check_branch
          %584 = sbr.rel (%p582) target = $region24
        $region23: #{tpu_custom_call.1} parent=11 // pred_region
          %s586 = ssub.s32 256, 256
          %587 = vsyncadd [#allocation10], %s586
          %s588 = sshll.u32 [#allocation11], 4
          %s589 = int_to_ptr.vmem [resolvable:$true] %s588
          %594 = dma.hbm_to_vmem [thread:$0]  %s4, 256, %s589, [#allocation10], 64, 64, 4
        $region24: #{tpu_custom_call.1} parent=11 // pred_fallthru
          _
        // Predicated region
        $region25: #{tpu_custom_call.1} parent=11 // pred_check
          %p595 = pneg %p183
        $region26: #{tpu_custom_call.1} parent=11 // pred_check_branch
          %597 = sbr.rel (%p595) target = $region28
        $region27: #{tpu_custom_call.1} parent=11 // pred_region
          %s599 = ssub.s32 16, 16
          %600 = vsyncadd [#allocation13], %s599
          %s602 = sshll.u32 [#allocation12], 4
          %s603 = int_to_ptr.vmem [resolvable:$true] %s602
          %605 = dma.hbm_to_vmem [thread:$0]  %s5, 16, %s603, [#allocation13]
        $region28: #{tpu_custom_call.1} parent=11 // pred_fallthru
          _
        // Predicated region
        $region29: #{tpu_custom_call.1} parent=11 // pred_check
          %p606 = pneg %p204
        $region30: #{tpu_custom_call.1} parent=11 // pred_check_branch
          %608 = sbr.rel (%p606) target = $region32
        $region31: #{tpu_custom_call.1} parent=11 // pred_region
          %s610 = ssub.s32 256, 256
          %611 = vsyncadd [#allocation13], %s610
          %s612 = sshll.u32 [#allocation14], 4
          %s613 = int_to_ptr.vmem [resolvable:$true] %s612
          %618 = dma.hbm_to_vmem [thread:$0]  %s6, 256, %s613, [#allocation13], 64, 64, 4
        $region32: #{tpu_custom_call.1} parent=11 // pred_fallthru
          _
        // Predicated region
        $region33: #{tpu_custom_call.1} parent=11 // pred_check
          %p619 = pneg %p225
        $region34: #{tpu_custom_call.1} parent=11 // pred_check_branch
          %621 = sbr.rel (%p619) target = $region36
        $region35: #{tpu_custom_call.1} parent=11 // pred_region
          %s623 = ssub.s32 16, 16
          %624 = vsyncadd [#allocation16], %s623
          %s626 = sshll.u32 [#allocation15], 4
          %s627 = int_to_ptr.vmem [resolvable:$true] %s626
          %629 = dma.hbm_to_vmem [thread:$0]  %s7, 16, %s627, [#allocation16]
        $region36: #{tpu_custom_call.1} parent=11 // pred_fallthru
          _
        // Predicated region
        $region37: #{tpu_custom_call.1} parent=11 // pred_check
          %p630 = pneg %p246
        $region38: #{tpu_custom_call.1} parent=11 // pred_check_branch
          %632 = sbr.rel (%p630) target = $region40
        $region39: #{tpu_custom_call.1} parent=11 // pred_region
          %s634 = ssub.s32 16, 16
          %635 = vsyncadd [#allocation16], %s634
          %s637 = sshll.u32 [#allocation17], 4
          %s638 = int_to_ptr.vmem [resolvable:$true] %s637
          %640 = dma.hbm_to_vmem [thread:$0]  %s8, 16, %s638, [#allocation16]
        $region40: #{tpu_custom_call.1} parent=11 // pred_fallthru
          _
        // Predicated region
        $region41: #{tpu_custom_call.1} parent=11 // pred_check
          %p641 = pneg %p267
        $region42: #{tpu_custom_call.1} parent=11 // pred_check_branch
          %643 = sbr.rel (%p641) target = $region44
        $region43: #{tpu_custom_call.1} parent=11 // pred_region
          %s645 = ssub.s32 16, 16
          %646 = vsyncadd [#allocation19], %s645
          %s648 = sshll.u32 [#allocation18], 4
          %s649 = int_to_ptr.vmem [resolvable:$true] %s648
          %651 = dma.hbm_to_vmem [thread:$0]  %s9, 16, %s649, [#allocation19]
        $region44: #{tpu_custom_call.1} parent=11 // pred_fallthru
          _
        // Predicated region
        $region45: #{tpu_custom_call.1} parent=11 // pred_check
          %p652 = pneg %p288
        $region46: #{tpu_custom_call.1} parent=11 // pred_check_branch
          %654 = sbr.rel (%p652) target = $region48
        $region47: #{tpu_custom_call.1} parent=11 // pred_region
          %s656 = ssub.s32 256, 256
          %657 = vsyncadd [#allocation19], %s656
          %s658 = sshll.u32 [#allocation20], 4
          %s659 = int_to_ptr.vmem [resolvable:$true] %s658
          %664 = dma.hbm_to_vmem [thread:$0]  %s10, 256, %s659, [#allocation19], 64, 64, 4
        $region48: #{tpu_custom_call.1} parent=11 // pred_fallthru
          _
        // Predicated region
        $region49: #{tpu_custom_call.1} parent=11 // pred_check
          %p665 = pneg %p309
        $region50: #{tpu_custom_call.1} parent=11 // pred_check_branch
          %667 = sbr.rel (%p665) target = $region52
        $region51: #{tpu_custom_call.1} parent=11 // pred_region
          %s669 = ssub.s32 16, 16
          %670 = vsyncadd [#allocation22], %s669
          %s672 = sshll.u32 [#allocation21], 4
          %s673 = int_to_ptr.vmem [resolvable:$true] %s672
          %675 = dma.hbm_to_vmem [thread:$0]  %s11, 16, %s673, [#allocation22]
        $region52: #{tpu_custom_call.1} parent=11 // pred_fallthru
          _
        // Predicated region
        $region53: #{tpu_custom_call.1} parent=11 // pred_check
          %p676 = pneg %p330
        $region54: #{tpu_custom_call.1} parent=11 // pred_check_branch
          %678 = sbr.rel (%p676) target = $region56
        $region55: #{tpu_custom_call.1} parent=11 // pred_region
          %s680 = ssub.s32 256, 256
          %681 = vsyncadd [#allocation22], %s680
          %s682 = sshll.u32 [#allocation23], 4
          %s683 = int_to_ptr.vmem [resolvable:$true] %s682
          %688 = dma.hbm_to_vmem [thread:$0]  %s12, 256, %s683, [#allocation22], 64, 64, 4
        $region56: #{tpu_custom_call.1} parent=11 // pred_fallthru
          _
        // Predicated region
        $region57: #{tpu_custom_call.1} parent=11 // pred_check
          %p689 = pneg %p351
        $region58: #{tpu_custom_call.1} parent=11 // pred_check_branch
          %691 = sbr.rel (%p689) target = $region60
        $region59: #{tpu_custom_call.1} parent=11 // pred_region
          %s693 = ssub.s32 16, 16
          %694 = vsyncadd [#allocation25], %s693
          %s696 = sshll.u32 [#allocation24], 4
          %s697 = int_to_ptr.vmem [resolvable:$true] %s696
          %699 = dma.hbm_to_vmem [thread:$0]  %s13, 16, %s697, [#allocation25]
        $region60: #{tpu_custom_call.1} parent=11 // pred_fallthru
          _
        // Predicated region
        $region61: #{tpu_custom_call.1} parent=11 // pred_check
          %p700 = pneg %p372
        $region62: #{tpu_custom_call.1} parent=11 // pred_check_branch
          %702 = sbr.rel (%p700) target = $region64
        $region63: #{tpu_custom_call.1} parent=11 // pred_region
          %s704 = ssub.s32 256, 256
          %705 = vsyncadd [#allocation25], %s704
          %s706 = sshll.u32 [#allocation26], 4
          %s707 = int_to_ptr.vmem [resolvable:$true] %s706
          %712 = dma.hbm_to_vmem [thread:$0]  %s14, 256, %s707, [#allocation25], 64, 64, 4
        $region64: #{tpu_custom_call.1} parent=11 // pred_fallthru
          _
        // Predicated region
        $region65: #{tpu_custom_call.1} parent=11 // pred_check
          %p713 = pneg %p393
        $region66: #{tpu_custom_call.1} parent=11 // pred_check_branch
          %715 = sbr.rel (%p713) target = $region68
        $region67: #{tpu_custom_call.1} parent=11 // pred_region
          %s717 = ssub.s32 16, 16
          %718 = vsyncadd [#allocation28], %s717
          %s720 = sshll.u32 [#allocation27], 4
          %s721 = int_to_ptr.vmem [resolvable:$true] %s720
          %723 = dma.hbm_to_vmem [thread:$0]  %s15, 16, %s721, [#allocation28]
        $region68: #{tpu_custom_call.1} parent=11 // pred_fallthru
          _
        // Predicated region
        $region69: #{tpu_custom_call.1} parent=11 // pred_check
          %p724 = pneg %p414
        $region70: #{tpu_custom_call.1} parent=11 // pred_check_branch
          %726 = sbr.rel (%p724) target = $region72
        $region71: #{tpu_custom_call.1} parent=11 // pred_region
          %s728 = ssub.s32 16, 16
          %729 = vsyncadd [#allocation28], %s728
          %s731 = sshll.u32 [#allocation29], 4
          %s732 = int_to_ptr.vmem [resolvable:$true] %s731
          %734 = dma.hbm_to_vmem [thread:$0]  %s16, 16, %s732, [#allocation28]
        $region72: #{tpu_custom_call.1} parent=11 // pred_fallthru
          _
        // Predicated region
        $region73: #{tpu_custom_call.1} parent=11 // pred_check
          %p735 = pneg %p435
        $region74: #{tpu_custom_call.1} parent=11 // pred_check_branch
          %737 = sbr.rel (%p735) target = $region76
        $region75: #{tpu_custom_call.1} parent=11 // pred_region
          %s739 = ssub.s32 16, 16
          %740 = vsyncadd [#allocation31], %s739
          %s742 = sshll.u32 [#allocation30], 4
          %s743 = int_to_ptr.vmem [resolvable:$true] %s742
          %745 = dma.hbm_to_vmem [thread:$0]  %s17, 16, %s743, [#allocation31]
        $region76: #{tpu_custom_call.1} parent=11 // pred_fallthru
          _
        // Predicated region
        $region77: #{tpu_custom_call.1} parent=11 // pred_check
          %p746 = pneg %p456
        $region78: #{tpu_custom_call.1} parent=11 // pred_check_branch
          %748 = sbr.rel (%p746) target = $region80
        $region79: #{tpu_custom_call.1} parent=11 // pred_region
          %s750 = ssub.s32 256, 256
          %751 = vsyncadd [#allocation31], %s750
          %s752 = sshll.u32 [#allocation32], 4
          %s753 = int_to_ptr.vmem [resolvable:$true] %s752
          %758 = dma.hbm_to_vmem [thread:$0]  %s18, 256, %s753, [#allocation31], 64, 64, 4
        $region80: #{tpu_custom_call.1} parent=11 // pred_fallthru
          _
        // Predicated region
        $region81: #{tpu_custom_call.1} parent=11 // pred_check
          %p759 = pneg %p477
        $region82: #{tpu_custom_call.1} parent=11 // pred_check_branch
          %761 = sbr.rel (%p759) target = $region84
        $region83: #{tpu_custom_call.1} parent=11 // pred_region
          %s763 = ssub.s32 16, 16
          %764 = vsyncadd [#allocation34], %s763
          %s766 = sshll.u32 [#allocation33], 4
          %s767 = int_to_ptr.vmem [resolvable:$true] %s766
          %769 = dma.hbm_to_vmem [thread:$0]  %s19, 16, %s767, [#allocation34]
        $region84: #{tpu_custom_call.1} parent=11 // pred_fallthru
          _
        // Predicated region
        $region85: #{tpu_custom_call.1} parent=11 // pred_check
          %p770 = pneg %p498
        $region86: #{tpu_custom_call.1} parent=11 // pred_check_branch
          %772 = sbr.rel (%p770) target = $region88
        $region87: #{tpu_custom_call.1} parent=11 // pred_region
          %s774 = ssub.s32 512, 512
          %775 = vsyncadd [#allocation34], %s774
          %s776 = sshll.u32 [#allocation35], 4
          %s777 = int_to_ptr.vmem [resolvable:$true] %s776
          %782 = dma.hbm_to_vmem [thread:$0]  %s20, 512, %s777, [#allocation34], 64, 64, 4
        $region88: #{tpu_custom_call.1} parent=11 // pred_fallthru
          _
        // Predicated region
        $region89: #{tpu_custom_call.1} parent=11 // pred_check
          %p783 = pneg %p519
        $region90: #{tpu_custom_call.1} parent=11 // pred_check_branch
          %785 = sbr.rel (%p783) target = $region92
        $region91: #{tpu_custom_call.1} parent=11 // pred_region
          %s787 = ssub.s32 16, 16
          %788 = vsyncadd [#allocation37], %s787
          %s790 = sshll.u32 [#allocation36], 4
          %s791 = int_to_ptr.vmem [resolvable:$true] %s790
          %793 = dma.hbm_to_vmem [thread:$0]  %s21, 16, %s791, [#allocation37]
        $region92: #{tpu_custom_call.1} parent=11 // pred_fallthru
          _
      $region12: #{tpu_custom_call.1} parent=5 // pred_fallthru
        _
      %p794 = scmp.lt.s32.totalorder %s47, 2
      // Predicated region
      $region93: #{tpu_custom_call.1} parent=5 // pred_check
        %p795 = pneg %p794
      $region94: #{tpu_custom_call.1} parent=5 // pred_check_branch
        %797 = sbr.rel (%p795) target = $region96
      $region95: #{tpu_custom_call.1} parent=5 // pred_region
        // Predicated region
        $region97: #{tpu_custom_call.1} parent=95 // pred_check
          %p798 = pneg %p67
        $region98: #{tpu_custom_call.1} parent=95 // pred_check_branch
          %800 = sbr.rel (%p798) target = $region100
        $region99: #{tpu_custom_call.1} parent=95 // pred_region
          %s801 = sand.u32 %s57, 1
          %s802 = scalar_lea.sflag [#allocation4], %s801
          %s803 = sand.u32 %s57, 1
          %s804 = smul.addr %s803, 8
          %s805 = scalar_lea.vmem [#allocation3], %s804
          %s807 = ssub.s32 128, 128
          %808 = vsyncadd %s802, %s807
          %s809 = smul.addr %s47, 128
          %s810 = scalar_lea.hbm %s0, %s809
          %s812 = sshll.u32 %s805, 4
          %s813 = int_to_ptr.vmem [resolvable:$true] %s812
          %815 = dma.hbm_to_vmem [thread:$0]  %s810, 128, %s813, %s802
        $region100: #{tpu_custom_call.1} parent=95 // pred_fallthru
          _
        // Predicated region
        $region101: #{tpu_custom_call.1} parent=95 // pred_check
          %p816 = pneg %p93
        $region102: #{tpu_custom_call.1} parent=95 // pred_check_branch
          %818 = sbr.rel (%p816) target = $region104
        $region103: #{tpu_custom_call.1} parent=95 // pred_region
          %s819 = sand.u32 %s47, 1
          %s820 = scalar_lea.sflag [#allocation7], %s819
          %s821 = sand.u32 %s83, 1
          %s822 = smul.addr %s821, 8
          %s823 = scalar_lea.vmem [#allocation6], %s822
          %s825 = ssub.s32 128, 128
          %826 = vsyncadd %s820, %s825
          %s827 = smul.addr %s47, 128
          %s828 = scalar_lea.hbm %s1, %s827
          %s830 = sshll.u32 %s823, 4
          %s831 = int_to_ptr.vmem [resolvable:$true] %s830
          %833 = dma.hbm_to_vmem [thread:$0]  %s828, 128, %s831, %s820
        $region104: #{tpu_custom_call.1} parent=95 // pred_fallthru
          _
      $region96: #{tpu_custom_call.1} parent=5 // pred_fallthru
        _
      %p834 = scmp.le.s32.totalorder 1, %s47
      %p835 = scmp.lt.s32.totalorder %s47, 3
      %p836 = pnand %p834, %p835
      %p837 = pneg %p836
      // Predicated region
      $region105: #{tpu_custom_call.1} parent=5 // pred_check
        _
      $region106: #{tpu_custom_call.1} parent=5 // pred_check_branch
        %839 = sbr.rel (%p836) target = $region108
      $region107: #{tpu_custom_call.1} parent=5 // pred_region
        %s840 = ssub.s32 %s47, 1
        %s841 = sand.u32 %s60, 1
        %s842 = scalar_lea.sflag [#allocation4], %s841
        %s843 = sand.u32 %s60, 1
        %s844 = smul.addr %s843, 8
        %s845 = scalar_lea.vmem [#allocation3], %s844
        // Predicated region
        $region109: #{tpu_custom_call.1} parent=107 // pred_check
          %p846 = pneg %p73
        $region110: #{tpu_custom_call.1} parent=107 // pred_check_branch
          %848 = sbr.rel (%p846) target = $region112
        $region111: #{tpu_custom_call.1} parent=107 // pred_region
          %849 = dma.done %s842, 128
        $region112: #{tpu_custom_call.1} parent=107 // pred_fallthru
          _
        %s850 = sand.u32 %s52, 1
        %s851 = scalar_lea.sflag [#allocation7], %s850
        %s852 = sand.u32 %s86, 1
        %s853 = smul.addr %s852, 8
        %s854 = scalar_lea.vmem [#allocation6], %s853
        // Predicated region
        $region113: #{tpu_custom_call.1} parent=107 // pred_check
          %p855 = pneg %p99
        $region114: #{tpu_custom_call.1} parent=107 // pred_check_branch
          %857 = sbr.rel (%p855) target = $region116
        $region115: #{tpu_custom_call.1} parent=107 // pred_region
          %858 = dma.done %s851, 128
        $region116: #{tpu_custom_call.1} parent=107 // pred_fallthru
          _
        // Predicated region
        $region117: #{tpu_custom_call.1} parent=107 // pred_check
          %p859 = pneg %p120
        $region118: #{tpu_custom_call.1} parent=107 // pred_check_branch
          %861 = sbr.rel (%p859) target = $region120
        $region119: #{tpu_custom_call.1} parent=107 // pred_region
          %862 = dma.done [#allocation7], 16
        $region120: #{tpu_custom_call.1} parent=107 // pred_fallthru
          _
        // Predicated region
        $region121: #{tpu_custom_call.1} parent=107 // pred_check
          %p863 = pneg %p141
        $region122: #{tpu_custom_call.1} parent=107 // pred_check_branch
          %865 = sbr.rel (%p863) target = $region124
        $region123: #{tpu_custom_call.1} parent=107 // pred_region
          %866 = dma.done [#allocation10], 16
        $region124: #{tpu_custom_call.1} parent=107 // pred_fallthru
          _
        // Predicated region
        $region125: #{tpu_custom_call.1} parent=107 // pred_check
          %p867 = pneg %p162
        $region126: #{tpu_custom_call.1} parent=107 // pred_check_branch
          %869 = sbr.rel (%p867) target = $region128
        $region127: #{tpu_custom_call.1} parent=107 // pred_region
          %870 = dma.done [#allocation10], 256
        $region128: #{tpu_custom_call.1} parent=107 // pred_fallthru
          _
        // Predicated region
        $region129: #{tpu_custom_call.1} parent=107 // pred_check
          %p871 = pneg %p183
        $region130: #{tpu_custom_call.1} parent=107 // pred_check_branch
          %873 = sbr.rel (%p871) target = $region132
        $region131: #{tpu_custom_call.1} parent=107 // pred_region
          %874 = dma.done [#allocation13], 16
        $region132: #{tpu_custom_call.1} parent=107 // pred_fallthru
          _
        // Predicated region
        $region133: #{tpu_custom_call.1} parent=107 // pred_check
          %p875 = pneg %p204
        $region134: #{tpu_custom_call.1} parent=107 // pred_check_branch
          %877 = sbr.rel (%p875) target = $region136
        $region135: #{tpu_custom_call.1} parent=107 // pred_region
          %878 = dma.done [#allocation13], 256
        $region136: #{tpu_custom_call.1} parent=107 // pred_fallthru
          _
        // Predicated region
        $region137: #{tpu_custom_call.1} parent=107 // pred_check
          %p879 = pneg %p225
        $region138: #{tpu_custom_call.1} parent=107 // pred_check_branch
          %881 = sbr.rel (%p879) target = $region140
        $region139: #{tpu_custom_call.1} parent=107 // pred_region
          %882 = dma.done [#allocation16], 16
        $region140: #{tpu_custom_call.1} parent=107 // pred_fallthru
          _
        // Predicated region
        $region141: #{tpu_custom_call.1} parent=107 // pred_check
          %p883 = pneg %p246
        $region142: #{tpu_custom_call.1} parent=107 // pred_check_branch
          %885 = sbr.rel (%p883) target = $region144
        $region143: #{tpu_custom_call.1} parent=107 // pred_region
          %886 = dma.done [#allocation16], 16
        $region144: #{tpu_custom_call.1} parent=107 // pred_fallthru
          _
        // Predicated region
        $region145: #{tpu_custom_call.1} parent=107 // pred_check
          %p887 = pneg %p267
        $region146: #{tpu_custom_call.1} parent=107 // pred_check_branch
          %889 = sbr.rel (%p887) target = $region148
        $region147: #{tpu_custom_call.1} parent=107 // pred_region
          %890 = dma.done [#allocation19], 16
        $region148: #{tpu_custom_call.1} parent=107 // pred_fallthru
          _
        // Predicated region
        $region149: #{tpu_custom_call.1} parent=107 // pred_check
          %p891 = pneg %p288
        $region150: #{tpu_custom_call.1} parent=107 // pred_check_branch
          %893 = sbr.rel (%p891) target = $region152
        $region151: #{tpu_custom_call.1} parent=107 // pred_region
          %894 = dma.done [#allocation19], 256
        $region152: #{tpu_custom_call.1} parent=107 // pred_fallthru
          _
        // Predicated region
        $region153: #{tpu_custom_call.1} parent=107 // pred_check
          %p895 = pneg %p309
        $region154: #{tpu_custom_call.1} parent=107 // pred_check_branch
          %897 = sbr.rel (%p895) target = $region156
        $region155: #{tpu_custom_call.1} parent=107 // pred_region
          %898 = dma.done [#allocation22], 16
        $region156: #{tpu_custom_call.1} parent=107 // pred_fallthru
          _
        // Predicated region
        $region157: #{tpu_custom_call.1} parent=107 // pred_check
          %p899 = pneg %p330
        $region158: #{tpu_custom_call.1} parent=107 // pred_check_branch
          %901 = sbr.rel (%p899) target = $region160
        $region159: #{tpu_custom_call.1} parent=107 // pred_region
          %902 = dma.done [#allocation22], 256
        $region160: #{tpu_custom_call.1} parent=107 // pred_fallthru
          _
        // Predicated region
        $region161: #{tpu_custom_call.1} parent=107 // pred_check
          %p903 = pneg %p351
        $region162: #{tpu_custom_call.1} parent=107 // pred_check_branch
          %905 = sbr.rel (%p903) target = $region164
        $region163: #{tpu_custom_call.1} parent=107 // pred_region
          %906 = dma.done [#allocation25], 16
        $region164: #{tpu_custom_call.1} parent=107 // pred_fallthru
          _
        // Predicated region
        $region165: #{tpu_custom_call.1} parent=107 // pred_check
          %p907 = pneg %p372
        $region166: #{tpu_custom_call.1} parent=107 // pred_check_branch
          %909 = sbr.rel (%p907) target = $region168
        $region167: #{tpu_custom_call.1} parent=107 // pred_region
          %910 = dma.done [#allocation25], 256
        $region168: #{tpu_custom_call.1} parent=107 // pred_fallthru
          _
        // Predicated region
        $region169: #{tpu_custom_call.1} parent=107 // pred_check
          %p911 = pneg %p393
        $region170: #{tpu_custom_call.1} parent=107 // pred_check_branch
          %913 = sbr.rel (%p911) target = $region172
        $region171: #{tpu_custom_call.1} parent=107 // pred_region
          %914 = dma.done [#allocation28], 16
        $region172: #{tpu_custom_call.1} parent=107 // pred_fallthru
          _
        // Predicated region
        $region173: #{tpu_custom_call.1} parent=107 // pred_check
          %p915 = pneg %p414
        $region174: #{tpu_custom_call.1} parent=107 // pred_check_branch
          %917 = sbr.rel (%p915) target = $region176
        $region175: #{tpu_custom_call.1} parent=107 // pred_region
          %918 = dma.done [#allocation28], 16
        $region176: #{tpu_custom_call.1} parent=107 // pred_fallthru
          _
        // Predicated region
        $region177: #{tpu_custom_call.1} parent=107 // pred_check
          %p919 = pneg %p435
        $region178: #{tpu_custom_call.1} parent=107 // pred_check_branch
          %921 = sbr.rel (%p919) target = $region180
        $region179: #{tpu_custom_call.1} parent=107 // pred_region
          %922 = dma.done [#allocation31], 16
        $region180: #{tpu_custom_call.1} parent=107 // pred_fallthru
          _
        // Predicated region
        $region181: #{tpu_custom_call.1} parent=107 // pred_check
          %p923 = pneg %p456
        $region182: #{tpu_custom_call.1} parent=107 // pred_check_branch
          %925 = sbr.rel (%p923) target = $region184
        $region183: #{tpu_custom_call.1} parent=107 // pred_region
          %926 = dma.done [#allocation31], 256
        $region184: #{tpu_custom_call.1} parent=107 // pred_fallthru
          _
        // Predicated region
        $region185: #{tpu_custom_call.1} parent=107 // pred_check
          %p927 = pneg %p477
        $region186: #{tpu_custom_call.1} parent=107 // pred_check_branch
          %929 = sbr.rel (%p927) target = $region188
        $region187: #{tpu_custom_call.1} parent=107 // pred_region
          %930 = dma.done [#allocation34], 16
        $region188: #{tpu_custom_call.1} parent=107 // pred_fallthru
          _
        // Predicated region
        $region189: #{tpu_custom_call.1} parent=107 // pred_check
          %p931 = pneg %p498
        $region190: #{tpu_custom_call.1} parent=107 // pred_check_branch
          %933 = sbr.rel (%p931) target = $region192
        $region191: #{tpu_custom_call.1} parent=107 // pred_region
          %934 = dma.done [#allocation34], 512
        $region192: #{tpu_custom_call.1} parent=107 // pred_fallthru
          _
        // Predicated region
        $region193: #{tpu_custom_call.1} parent=107 // pred_check
          %p935 = pneg %p519
        $region194: #{tpu_custom_call.1} parent=107 // pred_check_branch
          %937 = sbr.rel (%p935) target = $region196
        $region195: #{tpu_custom_call.1} parent=107 // pred_region
          %938 = dma.done [#allocation37], 16
        $region196: #{tpu_custom_call.1} parent=107 // pred_fallthru
          _
        %s939 = sand.u32 %s60, 1
        %s940 = scalar_lea.sflag [#allocation4], %s939
        %s941 = sand.u32 %s60, 1
        %s942 = smul.addr %s941, 8
        %s943 = scalar_lea.vmem [#allocation3], %s942
        %p944 = pneg %p73
        %p945 = pneg %p70
        %s946 = sand.u32 %s52, 1
        %s947 = scalar_lea.sflag [#allocation7], %s946
        %s948 = sand.u32 %s86, 1
        %s949 = smul.addr %s948, 8
        %s950 = scalar_lea.vmem [#allocation6], %s949
        %p951 = pneg %p99
        %p952 = pneg %p96
        %p953 = pneg %p120
        %p954 = pneg %p117
        %p955 = pneg %p141
        %p956 = pneg %p138
        %p957 = pneg %p162
        %p958 = pneg %p159
        %p959 = pneg %p183
        %p960 = pneg %p180
        %p961 = pneg %p204
        %p962 = pneg %p201
        %p963 = pneg %p225
        %p964 = pneg %p222
        %p965 = pneg %p246
        %p966 = pneg %p243
        %p967 = pneg %p267
        %p968 = pneg %p264
        %p969 = pneg %p288
        %p970 = pneg %p285
        %p971 = pneg %p309
        %p972 = pneg %p306
        %p973 = pneg %p330
        %p974 = pneg %p327
        %p975 = pneg %p351
        %p976 = pneg %p348
        %p977 = pneg %p372
        %p978 = pneg %p369
        %p979 = pneg %p393
        %p980 = pneg %p390
        %p981 = pneg %p414
        %p982 = pneg %p411
        %p983 = pneg %p435
        %p984 = pneg %p432
        %p985 = pneg %p456
        %p986 = pneg %p453
        %p987 = pneg %p477
        %p988 = pneg %p474
        %p989 = pneg %p498
        %p990 = pneg %p495
        %p991 = pneg %p519
        %p992 = pneg %p516
        %p993 = pneg %p545
        %p994 = pneg %p542
        %s995 = sand.u32 %s532, 1
        %s996 = scalar_lea.sflag [#allocation5], %s995
        %s997 = sand.u32 %s532, 1
        %s998 = smul.addr %s997, 8
        %s999 = scalar_lea.vmem [#allocation38], %s998
        %v1001 = vld [vmem:[%s845] sm:$0xff]
        %v1002 = vld [vmem:[%s854] sm:$0xff]
        %v1003 = vlaneseq
        %v1004 = vshrl.u32 %v1003, 7
        %v1005 = vlaneseq
        %v1006 = vand.u32 %v1005, 127
        %vm1007 = vcmp.le.s32.totalorder %v1006, %v1004
        %v1008 = vsel %vm1007, 0.0, -1e+30
        %v1009 = vld [vmem:[#allocation8] sm:$0x1]
        %v1010 = vld [vmem:[#allocation9] sm:$0x1]
        %vm1011 = vcmask 261120
        %v1012 = vsel %vm1011, %v1001, 0.0
        %1013 = vadd.xlane.f32.xlu0 %v1012
        %v1014 = vpop.xlane.xlu0 %1013
        %v1015 = vrcp.pop 32.0
        %v1016 = vmul.f32 %v1014, %v1015
        %v1017 = vsub.f32 %v1001, %v1016
        %v1018 = vmul.f32 %v1017, %v1017
        %v1019 = vsel %vm1011, %v1018, 0.0
        %1020 = vadd.xlane.f32.xlu0 %v1019
        %v1021 = vpop.xlane.xlu0 %1020
        %v1022 = vmul.f32 %v1021, %v1015
        %v1023 = vadd.f32 %v1022, 1e-05
        %v1024 = vrsqrt.pop %v1023
        %v1025 = vmul.f32 %v1017, %v1024
        %v1027 = vlaneseq
        %v1028 = vshrl.u32 %v1027, 7
        %v1029 = vsub.s32 0, %v1028
        %v1030 = vrot.slane %v1009, %v1029
        %v1032 = vmul.f32 %v1025, %v1030
        %v1034 = vlaneseq
        %v1035 = vshrl.u32 %v1034, 7
        %v1036 = vsub.s32 0, %v1035
        %v1037 = vrot.slane %v1010, %v1036
        %v1039 = vadd.f32 %v1032, %v1037
        %v1040 = vpack.c.bf16 %v1039, %v1039
        %v1041 = vld [vmem:[#allocation11] sm:$0xf]
        %v1042 = vld [vmem:[#allocation11 + $0x4] sm:$0xf]
        %v1043 = vld [vmem:[#allocation11 + $0x8] sm:$0xf]
        %v1044 = vld [vmem:[#allocation11 + $0xc] sm:$0xf]
        %v1045 = vld [vmem:[#allocation12] sm:$0x1]
        %v1047 = vlaneseq
        %v1048 = vshrl.u32 %v1047, 7
        %v1049 = vsub.s32 0, %v1048
        %v1050 = vrot.slane %v1045, %v1049
        %v1056 = vunpack.c.l.b16 %v1041
        %v1057 = vunpack.c.l.b16 %v1042
        %v1058 = vunpack.c.l.b16 %v1043
        %v1059 = vunpack.c.l.b16 %v1044
        %v1060 = vpack.c.b16 %v1057, %v1056
        %v1061 = vpack.c.b16 %v1059, %v1058
        %v1065 = vsel %vm1011, %v1040, 0
        %1067 = vmatprep.subr.bf16.mxu0 0
        %1068 = vmatpush1.bf16.msra.mxu0 %v1060
        %1069 = vmatprep.subr.bf16.mxu0 0
        %1070 = vmatpush1.bf16.msra.mxu0 %v1061
        %1071 = vmatprep.subr.bf16.mxu0 0
        %1072 = vmatpush1.bf16.msra.mxu0 0
        %1073 = vmatprep.subr.bf16.mxu0 0
        %1074 = vmatpush1.bf16.msra.mxu0 0
        %1075 = vmatprep.subr.bf16.mxu0 0
        %1076 = vmatpush1.bf16.msra.mxu0 0
        %1077 = vmatprep.subr.bf16.mxu0 0
        %1078 = vmatpush1.bf16.msra.mxu0 0
        %1079 = vmatprep.subr.bf16.mxu0 0
        %1080 = vmatpush1.bf16.msra.mxu0 0
        %1081 = vmatprep.subr.bf16.mxu0 0
        %1082 = vmatpush1.bf16.msra.mxu0 0
        %1083 = vmatprep.subr.bf16.mxu0 0
        %1084 = vmatpush1.bf16.msra.mxu0 0
        %1085 = vmatprep.subr.bf16.mxu0 0
        %1086 = vmatpush1.bf16.msra.mxu0 0
        %1087 = vmatprep.subr.bf16.mxu0 0
        %1088 = vmatpush1.bf16.msra.mxu0 0
        %1089 = vmatprep.subr.bf16.mxu0 0
        %1090 = vmatpush1.bf16.msra.mxu0 0
        %1091 = vmatprep.subr.bf16.mxu0 0
        %1092 = vmatpush1.bf16.msra.mxu0 0
        %1093 = vmatprep.subr.bf16.mxu0 0
        %1094 = vmatpush1.bf16.msra.mxu0 0
        %1095 = vmatprep.subr.bf16.mxu0 0
        %1096 = vmatpush1.bf16.msra.mxu0 0
        %1097 = vmatprep.subr.bf16.mxu0 0
        %1098 = vmatpush1.bf16.msra.mxu0 0
        %1099 = vmatprep.mubr.bf16.mxu0 0
        %1100 = vmatmul.mubr.bf16.gmra.mrb[0].mxu0 %v1065
        %v1101 = vpop.f32.mrb[0].mxu0
        %v1102 = vadd.f32 %v1050, %v1101
        %v1103 = vpop.f32.mrb[0].mxu0
        %v1104 = vpop.f32.mrb[0].mxu0
        %v1105 = vpop.f32.mrb[0].mxu0
        %1106 = vdwg.mxu0
        %v1107 = vmul.f32 %v1102, 0.35355338
        %v1108 = vld [vmem:[#allocation14] sm:$0xf]
        %v1109 = vld [vmem:[#allocation14 + $0x4] sm:$0xf]
        %v1110 = vld [vmem:[#allocation14 + $0x8] sm:$0xf]
        %v1111 = vld [vmem:[#allocation14 + $0xc] sm:$0xf]
        %v1112 = vld [vmem:[#allocation15] sm:$0x1]
        %v1113 = vpack.c.bf16 %v1107, %v1107
        %v1114 = vpack.c.bf16 %v1102, %v1102
        %1116 = vrot.lane.b32.xlu0 %v1114, 96
        %v1117 = vpop.permute.xlu0 %1116
        %vm1118 = vcmask 64512
        %v1120 = vsel %vm1118, %v1113, 0
        %v1123 = vsel %vm1118, %v1117, 0
        %1125 = vmatprep.subr.bf16.mxu0 0
        %1126 = vmatpush1.bf16.xpose.msra.mxu0 %v1123
        %1127 = vmatprep.subr.bf16.mxu0 0
        %1128 = vmatpush1.bf16.xpose.msra.mxu0 0
        %1129 = vmatprep.subr.bf16.mxu0 0
        %1130 = vmatpush1.bf16.xpose.msra.mxu0 0
        %1131 = vmatprep.subr.bf16.mxu0 0
        %1132 = vmatpush1.bf16.xpose.msra.mxu0 0
        %1133 = vmatprep.subr.bf16.mxu0 0
        %1134 = vmatpush1.bf16.xpose.msra.mxu0 0
        %1135 = vmatprep.subr.bf16.mxu0 0
        %1136 = vmatpush1.bf16.xpose.msra.mxu0 0
        %1137 = vmatprep.subr.bf16.mxu0 0
        %1138 = vmatpush1.bf16.xpose.msra.mxu0 0
        %1139 = vmatprep.subr.bf16.mxu0 0
        %1140 = vmatpush1.bf16.xpose.msra.mxu0 0
        %1141 = vmatprep.subr.bf16.mxu0 0
        %1142 = vmatpush1.bf16.xpose.msra.mxu0 0
        %1143 = vmatprep.subr.bf16.mxu0 0
        %1144 = vmatpush1.bf16.xpose.msra.mxu0 0
        %1145 = vmatprep.subr.bf16.mxu0 0
        %1146 = vmatpush1.bf16.xpose.msra.mxu0 0
        %1147 = vmatprep.subr.bf16.mxu0 0
        %1148 = vmatpush1.bf16.xpose.msra.mxu0 0
        %1149 = vmatprep.subr.bf16.mxu0 0
        %1150 = vmatpush1.bf16.xpose.msra.mxu0 0
        %1151 = vmatprep.subr.bf16.mxu0 0
        %1152 = vmatpush1.bf16.xpose.msra.mxu0 0
        %1153 = vmatprep.subr.bf16.mxu0 0
        %1154 = vmatpush1.bf16.xpose.msra.mxu0 0
        %1155 = vmatprep.subr.bf16.mxu0 0
        %1156 = vmatpush1.bf16.xpose.msra.mxu0 0
        %1157 = vmatprep.mubr.bf16.mxu0 0
        %1158 = vmatmul.mubr.bf16.gmra.mrb[0].mxu0 %v1120
        %v1159 = vpop.f32.mrb[0].mxu0
        %v1160 = vadd.f32 %v1008, %v1159
        %v1161 = vpop.f32.mrb[0].mxu0
        %v1162 = vpop.f32.mrb[0].mxu0
        %v1163 = vpop.f32.mrb[0].mxu0
        %1164 = vdwg.mxu0
        %v1165 = vsel %vm1118, %v1160, -inf
        %1166 = vmax.xlane.f32.xlu0 %v1165
        %v1167 = vpop.xlane.xlu0 %1166
        %v1168 = vsub.f32 %v1160, %v1167
        %v1169 = vmul.f32 %v1168, 1.442695
        %v1170 = vpow.pop %v1169
        %v1171 = vsel %vm1118, %v1170, 0.0
        %1172 = vadd.xlane.f32.xlu0 %v1171
        %v1173 = vpop.xlane.xlu0 %1172
        %v1174 = vrcp.pop %v1173
        %v1175 = vmul.f32 %v1170, %v1174
        %v1176 = vpack.c.bf16 %v1175, %v1175
        %1177 = vrot.lane.b32.xlu0 %v1114, 64
        %v1178 = vpop.permute.xlu0 %1177
        %v1180 = vsel %vm1118, %v1176, 0
        %vm1182 = vcmask 1043456
        %v1184 = vsel %vm1182, %v1178, 0
        %1186 = vmatprep.subr.bf16.mxu0 0
        %1187 = vmatpush1.bf16.msra.mxu0 %v1184
        %1188 = vmatprep.subr.bf16.mxu0 0
        %1189 = vmatpush1.bf16.msra.mxu0 0
        %1190 = vmatprep.subr.bf16.mxu0 0
        %1191 = vmatpush1.bf16.msra.mxu0 0
        %1192 = vmatprep.subr.bf16.mxu0 0
        %1193 = vmatpush1.bf16.msra.mxu0 0
        %1194 = vmatprep.subr.bf16.mxu0 0
        %1195 = vmatpush1.bf16.msra.mxu0 0
        %1196 = vmatprep.subr.bf16.mxu0 0
        %1197 = vmatpush1.bf16.msra.mxu0 0
        %1198 = vmatprep.subr.bf16.mxu0 0
        %1199 = vmatpush1.bf16.msra.mxu0 0
        %1200 = vmatprep.subr.bf16.mxu0 0
        %1201 = vmatpush1.bf16.msra.mxu0 0
        %1202 = vmatprep.subr.bf16.mxu0 0
        %1203 = vmatpush1.bf16.msra.mxu0 0
        %1204 = vmatprep.subr.bf16.mxu0 0
        %1205 = vmatpush1.bf16.msra.mxu0 0
        %1206 = vmatprep.subr.bf16.mxu0 0
        %1207 = vmatpush1.bf16.msra.mxu0 0
        %1208 = vmatprep.subr.bf16.mxu0 0
        %1209 = vmatpush1.bf16.msra.mxu0 0
        %1210 = vmatprep.subr.bf16.mxu0 0
        %1211 = vmatpush1.bf16.msra.mxu0 0
        %1212 = vmatprep.subr.bf16.mxu0 0
        %1213 = vmatpush1.bf16.msra.mxu0 0
        %1214 = vmatprep.subr.bf16.mxu0 0
        %1215 = vmatpush1.bf16.msra.mxu0 0
        %1216 = vmatprep.subr.bf16.mxu0 0
        %1217 = vmatpush1.bf16.msra.mxu0 0
        %1218 = vmatprep.mubr.bf16.mxu0 0
        %1219 = vmatmul.mubr.bf16.gmra.mrb[0].mxu0 %v1180
        %v1220 = vpop.f32.mrb[0].mxu0
        %v1221 = vadd.f32 0.0, %v1220
        %v1222 = vpop.f32.mrb[0].mxu0
        %v1223 = vpop.f32.mrb[0].mxu0
        %v1224 = vpop.f32.mrb[0].mxu0
        %1225 = vdwg.mxu0
        %1226 = vst.msk [vmem:[#allocation2] sm:$0xff] %vm1118, %v1221
        %1228 = vrot.lane.b32.xlu0 %v1113, 120
        %v1229 = vpop.permute.xlu0 %1228
        %1230 = vrot.lane.b32.xlu0 %v1114, 88
        %v1231 = vpop.permute.xlu0 %1230
        %v1233 = vsel %vm1118, %v1229, 0
        %v1236 = vsel %vm1118, %v1231, 0
        %1238 = vmatprep.subr.bf16.mxu0 0
        %1239 = vmatpush1.bf16.xpose.msra.mxu0 %v1236
        %1240 = vmatprep.subr.bf16.mxu0 0
        %1241 = vmatpush1.bf16.xpose.msra.mxu0 0
        %1242 = vmatprep.subr.bf16.mxu0 0
        %1243 = vmatpush1.bf16.xpose.msra.mxu0 0
        %1244 = vmatprep.subr.bf16.mxu0 0
        %1245 = vmatpush1.bf16.xpose.msra.mxu0 0
        %1246 = vmatprep.subr.bf16.mxu0 0
        %1247 = vmatpush1.bf16.xpose.msra.mxu0 0
        %1248 = vmatprep.subr.bf16.mxu0 0
        %1249 = vmatpush1.bf16.xpose.msra.mxu0 0
        %1250 = vmatprep.subr.bf16.mxu0 0
        %1251 = vmatpush1.bf16.xpose.msra.mxu0 0
        %1252 = vmatprep.subr.bf16.mxu0 0
        %1253 = vmatpush1.bf16.xpose.msra.mxu0 0
        %1254 = vmatprep.subr.bf16.mxu0 0
        %1255 = vmatpush1.bf16.xpose.msra.mxu0 0
        %1256 = vmatprep.subr.bf16.mxu0 0
        %1257 = vmatpush1.bf16.xpose.msra.mxu0 0
        %1258 = vmatprep.subr.bf16.mxu0 0
        %1259 = vmatpush1.bf16.xpose.msra.mxu0 0
        %1260 = vmatprep.subr.bf16.mxu0 0
        %1261 = vmatpush1.bf16.xpose.msra.mxu0 0
        %1262 = vmatprep.subr.bf16.mxu0 0
        %1263 = vmatpush1.bf16.xpose.msra.mxu0 0
        %1264 = vmatprep.subr.bf16.mxu0 0
        %1265 = vmatpush1.bf16.xpose.msra.mxu0 0
        %1266 = vmatprep.subr.bf16.mxu0 0
        %1267 = vmatpush1.bf16.xpose.msra.mxu0 0
        %1268 = vmatprep.subr.bf16.mxu0 0
        %1269 = vmatpush1.bf16.xpose.msra.mxu0 0
        %1270 = vmatprep.mubr.bf16.mxu0 0
        %1271 = vmatmul.mubr.bf16.gmra.mrb[0].mxu0 %v1233
        %v1272 = vpop.f32.mrb[0].mxu0
        %v1273 = vadd.f32 %v1008, %v1272
        %v1274 = vpop.f32.mrb[0].mxu0
        %v1275 = vpop.f32.mrb[0].mxu0
        %v1276 = vpop.f32.mrb[0].mxu0
        %1277 = vdwg.mxu0
        %v1278 = vsel %vm1118, %v1273, -inf
        %1279 = vmax.xlane.f32.xlu0 %v1278
        %v1280 = vpop.xlane.xlu0 %1279
        %v1281 = vsub.f32 %v1273, %v1280
        %v1282 = vmul.f32 %v1281, 1.442695
        %v1283 = vpow.pop %v1282
        %v1284 = vsel %vm1118, %v1283, 0.0
        %1285 = vadd.xlane.f32.xlu0 %v1284
        %v1286 = vpop.xlane.xlu0 %1285
        %v1287 = vrcp.pop %v1286
        %v1288 = vmul.f32 %v1283, %v1287
        %v1289 = vpack.c.bf16 %v1288, %v1288
        %1290 = vrot.lane.b32.xlu0 %v1114, 56
        %v1291 = vpop.permute.xlu0 %1290
        %v1293 = vsel %vm1118, %v1289, 0
        %v1296 = vsel %vm1182, %v1291, 0
        %1298 = vmatprep.subr.bf16.mxu0 0
        %1299 = vmatpush1.bf16.msra.mxu0 %v1296
        %1300 = vmatprep.subr.bf16.mxu0 0
        %1301 = vmatpush1.bf16.msra.mxu0 0
        %1302 = vmatprep.subr.bf16.mxu0 0
        %1303 = vmatpush1.bf16.msra.mxu0 0
        %1304 = vmatprep.subr.bf16.mxu0 0
        %1305 = vmatpush1.bf16.msra.mxu0 0
        %1306 = vmatprep.subr.bf16.mxu0 0
        %1307 = vmatpush1.bf16.msra.mxu0 0
        %1308 = vmatprep.subr.bf16.mxu0 0
        %1309 = vmatpush1.bf16.msra.mxu0 0
        %1310 = vmatprep.subr.bf16.mxu0 0
        %1311 = vmatpush1.bf16.msra.mxu0 0
        %1312 = vmatprep.subr.bf16.mxu0 0
        %1313 = vmatpush1.bf16.msra.mxu0 0
        %1314 = vmatprep.subr.bf16.mxu0 0
        %1315 = vmatpush1.bf16.msra.mxu0 0
        %1316 = vmatprep.subr.bf16.mxu0 0
        %1317 = vmatpush1.bf16.msra.mxu0 0
        %1318 = vmatprep.subr.bf16.mxu0 0
        %1319 = vmatpush1.bf16.msra.mxu0 0
        %1320 = vmatprep.subr.bf16.mxu0 0
        %1321 = vmatpush1.bf16.msra.mxu0 0
        %1322 = vmatprep.subr.bf16.mxu0 0
        %1323 = vmatpush1.bf16.msra.mxu0 0
        %1324 = vmatprep.subr.bf16.mxu0 0
        %1325 = vmatpush1.bf16.msra.mxu0 0
        %1326 = vmatprep.subr.bf16.mxu0 0
        %1327 = vmatpush1.bf16.msra.mxu0 0
        %1328 = vmatprep.subr.bf16.mxu0 0
        %1329 = vmatpush1.bf16.msra.mxu0 0
        %1330 = vmatprep.mubr.bf16.mxu0 0
        %1331 = vmatmul.mubr.bf16.gmra.mrb[0].mxu0 %v1293
        %v1332 = vpop.f32.mrb[0].mxu0
        %v1333 = vadd.f32 0.0, %v1332
        %v1334 = vpop.f32.mrb[0].mxu0
        %v1335 = vpop.f32.mrb[0].mxu0
        %v1336 = vpop.f32.mrb[0].mxu0
        %1337 = vdwg.mxu0
        %1339 = vrot.lane.b32.xlu0 %v1333, 8
        %v1340 = vpop.permute.xlu0 %1339
        %vm1342 = vcmask 130112
        %1343 = vst.msk [vmem:[#allocation2] sm:$0xff] %vm1342, %v1340
        %1344 = vrot.lane.b32.xlu0 %v1113, 112
        %v1345 = vpop.permute.xlu0 %1344
        %1346 = vrot.lane.b32.xlu0 %v1114, 80
        %v1347 = vpop.permute.xlu0 %1346
        %v1349 = vsel %vm1118, %v1345, 0
        %v1352 = vsel %vm1118, %v1347, 0
        %1354 = vmatprep.subr.bf16.mxu0 0
        %1355 = vmatpush1.bf16.xpose.msra.mxu0 %v1352
        %1356 = vmatprep.subr.bf16.mxu0 0
        %1357 = vmatpush1.bf16.xpose.msra.mxu0 0
        %1358 = vmatprep.subr.bf16.mxu0 0
        %1359 = vmatpush1.bf16.xpose.msra.mxu0 0
        %1360 = vmatprep.subr.bf16.mxu0 0
        %1361 = vmatpush1.bf16.xpose.msra.mxu0 0
        %1362 = vmatprep.subr.bf16.mxu0 0
        %1363 = vmatpush1.bf16.xpose.msra.mxu0 0
        %1364 = vmatprep.subr.bf16.mxu0 0
        %1365 = vmatpush1.bf16.xpose.msra.mxu0 0
        %1366 = vmatprep.subr.bf16.mxu0 0
        %1367 = vmatpush1.bf16.xpose.msra.mxu0 0
        %1368 = vmatprep.subr.bf16.mxu0 0
        %1369 = vmatpush1.bf16.xpose.msra.mxu0 0
        %1370 = vmatprep.subr.bf16.mxu0 0
        %1371 = vmatpush1.bf16.xpose.msra.mxu0 0
        %1372 = vmatprep.subr.bf16.mxu0 0
        %1373 = vmatpush1.bf16.xpose.msra.mxu0 0
        %1374 = vmatprep.subr.bf16.mxu0 0
        %1375 = vmatpush1.bf16.xpose.msra.mxu0 0
        %1376 = vmatprep.subr.bf16.mxu0 0
        %1377 = vmatpush1.bf16.xpose.msra.mxu0 0
        %1378 = vmatprep.subr.bf16.mxu0 0
        %1379 = vmatpush1.bf16.xpose.msra.mxu0 0
        %1380 = vmatprep.subr.bf16.mxu0 0
        %1381 = vmatpush1.bf16.xpose.msra.mxu0 0
        %1382 = vmatprep.subr.bf16.mxu0 0
        %1383 = vmatpush1.bf16.xpose.msra.mxu0 0
        %1384 = vmatprep.subr.bf16.mxu0 0
        %1385 = vmatpush1.bf16.xpose.msra.mxu0 0
        %1386 = vmatprep.mubr.bf16.mxu0 0
        %1387 = vmatmul.mubr.bf16.gmra.mrb[0].mxu0 %v1349
        %v1388 = vpop.f32.mrb[0].mxu0
        %v1389 = vadd.f32 %v1008, %v1388
        %v1390 = vpop.f32.mrb[0].mxu0
        %v1391 = vpop.f32.mrb[0].mxu0
        %v1392 = vpop.f32.mrb[0].mxu0
        %1393 = vdwg.mxu0
        %v1394 = vsel %vm1118, %v1389, -inf
        %1395 = vmax.xlane.f32.xlu0 %v1394
        %v1396 = vpop.xlane.xlu0 %1395
        %v1397 = vsub.f32 %v1389, %v1396
        %v1398 = vmul.f32 %v1397, 1.442695
        %v1399 = vpow.pop %v1398
        %v1400 = vsel %vm1118, %v1399, 0.0
        %1401 = vadd.xlane.f32.xlu0 %v1400
        %v1402 = vpop.xlane.xlu0 %1401
        %v1403 = vrcp.pop %v1402
        %v1404 = vmul.f32 %v1399, %v1403
        %v1405 = vpack.c.bf16 %v1404, %v1404
        %1406 = vrot.lane.b32.xlu0 %v1114, 48
        %v1407 = vpop.permute.xlu0 %1406
        %v1409 = vsel %vm1118, %v1405, 0
        %v1412 = vsel %vm1182, %v1407, 0
        %1414 = vmatprep.subr.bf16.mxu0 0
        %1415 = vmatpush1.bf16.msra.mxu0 %v1412
        %1416 = vmatprep.subr.bf16.mxu0 0
        %1417 = vmatpush1.bf16.msra.mxu0 0
        %1418 = vmatprep.subr.bf16.mxu0 0
        %1419 = vmatpush1.bf16.msra.mxu0 0
        %1420 = vmatprep.subr.bf16.mxu0 0
        %1421 = vmatpush1.bf16.msra.mxu0 0
        %1422 = vmatprep.subr.bf16.mxu0 0
        %1423 = vmatpush1.bf16.msra.mxu0 0
        %1424 = vmatprep.subr.bf16.mxu0 0
        %1425 = vmatpush1.bf16.msra.mxu0 0
        %1426 = vmatprep.subr.bf16.mxu0 0
        %1427 = vmatpush1.bf16.msra.mxu0 0
        %1428 = vmatprep.subr.bf16.mxu0 0
        %1429 = vmatpush1.bf16.msra.mxu0 0
        %1430 = vmatprep.subr.bf16.mxu0 0
        %1431 = vmatpush1.bf16.msra.mxu0 0
        %1432 = vmatprep.subr.bf16.mxu0 0
        %1433 = vmatpush1.bf16.msra.mxu0 0
        %1434 = vmatprep.subr.bf16.mxu0 0
        %1435 = vmatpush1.bf16.msra.mxu0 0
        %1436 = vmatprep.subr.bf16.mxu0 0
        %1437 = vmatpush1.bf16.msra.mxu0 0
        %1438 = vmatprep.subr.bf16.mxu0 0
        %1439 = vmatpush1.bf16.msra.mxu0 0
        %1440 = vmatprep.subr.bf16.mxu0 0
        %1441 = vmatpush1.bf16.msra.mxu0 0
        %1442 = vmatprep.subr.bf16.mxu0 0
        %1443 = vmatpush1.bf16.msra.mxu0 0
        %1444 = vmatprep.subr.bf16.mxu0 0
        %1445 = vmatpush1.bf16.msra.mxu0 0
        %1446 = vmatprep.mubr.bf16.mxu0 0
        %1447 = vmatmul.mubr.bf16.gmra.mrb[0].mxu0 %v1409
        %v1448 = vpop.f32.mrb[0].mxu0
        %v1449 = vadd.f32 0.0, %v1448
        %v1450 = vpop.f32.mrb[0].mxu0
        %v1451 = vpop.f32.mrb[0].mxu0
        %v1452 = vpop.f32.mrb[0].mxu0
        %1453 = vdwg.mxu0
        %1455 = vrot.lane.b32.xlu0 %v1449, 16
        %v1456 = vpop.permute.xlu0 %1455
        %vm1458 = vcmask 195712
        %1459 = vst.msk [vmem:[#allocation2] sm:$0xff] %vm1458, %v1456
        %1460 = vrot.lane.b32.xlu0 %v1113, 104
        %v1461 = vpop.permute.xlu0 %1460
        %1462 = vrot.lane.b32.xlu0 %v1114, 72
        %v1463 = vpop.permute.xlu0 %1462
        %v1465 = vsel %vm1118, %v1461, 0
        %v1468 = vsel %vm1118, %v1463, 0
        %1470 = vmatprep.subr.bf16.mxu0 0
        %1471 = vmatpush1.bf16.xpose.msra.mxu0 %v1468
        %1472 = vmatprep.subr.bf16.mxu0 0
        %1473 = vmatpush1.bf16.xpose.msra.mxu0 0
        %1474 = vmatprep.subr.bf16.mxu0 0
        %1475 = vmatpush1.bf16.xpose.msra.mxu0 0
        %1476 = vmatprep.subr.bf16.mxu0 0
        %1477 = vmatpush1.bf16.xpose.msra.mxu0 0
        %1478 = vmatprep.subr.bf16.mxu0 0
        %1479 = vmatpush1.bf16.xpose.msra.mxu0 0
        %1480 = vmatprep.subr.bf16.mxu0 0
        %1481 = vmatpush1.bf16.xpose.msra.mxu0 0
        %1482 = vmatprep.subr.bf16.mxu0 0
        %1483 = vmatpush1.bf16.xpose.msra.mxu0 0
        %1484 = vmatprep.subr.bf16.mxu0 0
        %1485 = vmatpush1.bf16.xpose.msra.mxu0 0
        %1486 = vmatprep.subr.bf16.mxu0 0
        %1487 = vmatpush1.bf16.xpose.msra.mxu0 0
        %1488 = vmatprep.subr.bf16.mxu0 0
        %1489 = vmatpush1.bf16.xpose.msra.mxu0 0
        %1490 = vmatprep.subr.bf16.mxu0 0
        %1491 = vmatpush1.bf16.xpose.msra.mxu0 0
        %1492 = vmatprep.subr.bf16.mxu0 0
        %1493 = vmatpush1.bf16.xpose.msra.mxu0 0
        %1494 = vmatprep.subr.bf16.mxu0 0
        %1495 = vmatpush1.bf16.xpose.msra.mxu0 0
        %1496 = vmatprep.subr.bf16.mxu0 0
        %1497 = vmatpush1.bf16.xpose.msra.mxu0 0
        %1498 = vmatprep.subr.bf16.mxu0 0
        %1499 = vmatpush1.bf16.xpose.msra.mxu0 0
        %1500 = vmatprep.subr.bf16.mxu0 0
        %1501 = vmatpush1.bf16.xpose.msra.mxu0 0
        %1502 = vmatprep.mubr.bf16.mxu0 0
        %1503 = vmatmul.mubr.bf16.gmra.mrb[0].mxu0 %v1465
        %v1504 = vpop.f32.mrb[0].mxu0
        %v1505 = vadd.f32 %v1008, %v1504
        %v1506 = vpop.f32.mrb[0].mxu0
        %v1507 = vpop.f32.mrb[0].mxu0
        %v1508 = vpop.f32.mrb[0].mxu0
        %1509 = vdwg.mxu0
        %v1510 = vsel %vm1118, %v1505, -inf
        %1511 = vmax.xlane.f32.xlu0 %v1510
        %v1512 = vpop.xlane.xlu0 %1511
        %v1513 = vsub.f32 %v1505, %v1512
        %v1514 = vmul.f32 %v1513, 1.442695
        %v1515 = vpow.pop %v1514
        %v1516 = vsel %vm1118, %v1515, 0.0
        %1517 = vadd.xlane.f32.xlu0 %v1516
        %v1518 = vpop.xlane.xlu0 %1517
        %v1519 = vrcp.pop %v1518
        %v1520 = vmul.f32 %v1515, %v1519
        %v1521 = vpack.c.bf16 %v1520, %v1520
        %1522 = vrot.lane.b32.xlu0 %v1114, 40
        %v1523 = vpop.permute.xlu0 %1522
        %v1525 = vsel %vm1118, %v1521, 0
        %v1528 = vsel %vm1182, %v1523, 0
        %1530 = vmatprep.subr.bf16.mxu0 0
        %1531 = vmatpush1.bf16.msra.mxu0 %v1528
        %1532 = vmatprep.subr.bf16.mxu0 0
        %1533 = vmatpush1.bf16.msra.mxu0 0
        %1534 = vmatprep.subr.bf16.mxu0 0
        %1535 = vmatpush1.bf16.msra.mxu0 0
        %1536 = vmatprep.subr.bf16.mxu0 0
        %1537 = vmatpush1.bf16.msra.mxu0 0
        %1538 = vmatprep.subr.bf16.mxu0 0
        %1539 = vmatpush1.bf16.msra.mxu0 0
        %1540 = vmatprep.subr.bf16.mxu0 0
        %1541 = vmatpush1.bf16.msra.mxu0 0
        %1542 = vmatprep.subr.bf16.mxu0 0
        %1543 = vmatpush1.bf16.msra.mxu0 0
        %1544 = vmatprep.subr.bf16.mxu0 0
        %1545 = vmatpush1.bf16.msra.mxu0 0
        %1546 = vmatprep.subr.bf16.mxu0 0
        %1547 = vmatpush1.bf16.msra.mxu0 0
        %1548 = vmatprep.subr.bf16.mxu0 0
        %1549 = vmatpush1.bf16.msra.mxu0 0
        %1550 = vmatprep.subr.bf16.mxu0 0
        %1551 = vmatpush1.bf16.msra.mxu0 0
        %1552 = vmatprep.subr.bf16.mxu0 0
        %1553 = vmatpush1.bf16.msra.mxu0 0
        %1554 = vmatprep.subr.bf16.mxu0 0
        %1555 = vmatpush1.bf16.msra.mxu0 0
        %1556 = vmatprep.subr.bf16.mxu0 0
        %1557 = vmatpush1.bf16.msra.mxu0 0
        %1558 = vmatprep.subr.bf16.mxu0 0
        %1559 = vmatpush1.bf16.msra.mxu0 0
        %1560 = vmatprep.subr.bf16.mxu0 0
        %1561 = vmatpush1.bf16.msra.mxu0 0
        %1562 = vmatprep.mubr.bf16.mxu0 0
        %1563 = vmatmul.mubr.bf16.gmra.mrb[0].mxu0 %v1525
        %v1564 = vpop.f32.mrb[0].mxu0
        %v1565 = vadd.f32 0.0, %v1564
        %v1566 = vpop.f32.mrb[0].mxu0
        %v1567 = vpop.f32.mrb[0].mxu0
        %v1568 = vpop.f32.mrb[0].mxu0
        %1569 = vdwg.mxu0
        %1571 = vrot.lane.b32.xlu0 %v1565, 24
        %v1572 = vpop.permute.xlu0 %1571
        %vm1574 = vcmask 261312
        %1575 = vst.msk [vmem:[#allocation2] sm:$0xff] %vm1574, %v1572
        %v1576 = vld [vmem:[#allocation2] sm:$0xff]
        %v1577 = vpack.c.bf16 %v1576, %v1576
        %v1579 = vlaneseq
        %v1580 = vshrl.u32 %v1579, 7
        %v1581 = vsub.s32 0, %v1580
        %v1582 = vrot.slane %v1112, %v1581
        %v1588 = vunpack.c.l.b16 %v1108
        %v1589 = vunpack.c.l.b16 %v1109
        %v1590 = vunpack.c.l.b16 %v1110
        %v1591 = vunpack.c.l.b16 %v1111
        %v1592 = vpack.c.b16 %v1589, %v1588
        %v1593 = vpack.c.b16 %v1591, %v1590
        %v1597 = vsel %vm1011, %v1577, 0
        %1599 = vmatprep.subr.bf16.mxu0 0
        %1600 = vmatpush1.bf16.msra.mxu0 %v1592
        %1601 = vmatprep.subr.bf16.mxu0 0
        %1602 = vmatpush1.bf16.msra.mxu0 %v1593
        %1603 = vmatprep.subr.bf16.mxu0 0
        %1604 = vmatpush1.bf16.msra.mxu0 0
        %1605 = vmatprep.subr.bf16.mxu0 0
        %1606 = vmatpush1.bf16.msra.mxu0 0
        %1607 = vmatprep.subr.bf16.mxu0 0
        %1608 = vmatpush1.bf16.msra.mxu0 0
        %1609 = vmatprep.subr.bf16.mxu0 0
        %1610 = vmatpush1.bf16.msra.mxu0 0
        %1611 = vmatprep.subr.bf16.mxu0 0
        %1612 = vmatpush1.bf16.msra.mxu0 0
        %1613 = vmatprep.subr.bf16.mxu0 0
        %1614 = vmatpush1.bf16.msra.mxu0 0
        %1615 = vmatprep.subr.bf16.mxu0 0
        %1616 = vmatpush1.bf16.msra.mxu0 0
        %1617 = vmatprep.subr.bf16.mxu0 0
        %1618 = vmatpush1.bf16.msra.mxu0 0
        %1619 = vmatprep.subr.bf16.mxu0 0
        %1620 = vmatpush1.bf16.msra.mxu0 0
        %1621 = vmatprep.subr.bf16.mxu0 0
        %1622 = vmatpush1.bf16.msra.mxu0 0
        %1623 = vmatprep.subr.bf16.mxu0 0
        %1624 = vmatpush1.bf16.msra.mxu0 0
        %1625 = vmatprep.subr.bf16.mxu0 0
        %1626 = vmatpush1.bf16.msra.mxu0 0
        %1627 = vmatprep.subr.bf16.mxu0 0
        %1628 = vmatpush1.bf16.msra.mxu0 0
        %1629 = vmatprep.subr.bf16.mxu0 0
        %1630 = vmatpush1.bf16.msra.mxu0 0
        %1631 = vmatprep.mubr.bf16.mxu0 0
        %1632 = vmatmul.mubr.bf16.gmra.mrb[0].mxu0 %v1597
        %v1633 = vpop.f32.mrb[0].mxu0
        %v1634 = vadd.f32 %v1582, %v1633
        %v1635 = vpop.f32.mrb[0].mxu0
        %v1636 = vpop.f32.mrb[0].mxu0
        %v1637 = vpop.f32.mrb[0].mxu0
        %1638 = vdwg.mxu0
        %v1639 = vadd.f32 %v1001, %v1634
        %v1640 = vld [vmem:[#allocation17] sm:$0x1]
        %v1641 = vld [vmem:[#allocation18] sm:$0x1]
        %v1642 = vsel %vm1011, %v1639, 0.0
        %1643 = vadd.xlane.f32.xlu0 %v1642
        %v1644 = vpop.xlane.xlu0 %1643
        %v1645 = vmul.f32 %v1644, %v1015
        %v1646 = vsub.f32 %v1639, %v1645
        %v1647 = vmul.f32 %v1646, %v1646
        %v1648 = vsel %vm1011, %v1647, 0.0
        %1649 = vadd.xlane.f32.xlu0 %v1648
        %v1650 = vpop.xlane.xlu0 %1649
        %v1651 = vmul.f32 %v1650, %v1015
        %v1652 = vadd.f32 %v1651, 1e-05
        %v1653 = vrsqrt.pop %v1652
        %v1654 = vmul.f32 %v1646, %v1653
        %v1656 = vlaneseq
        %v1657 = vshrl.u32 %v1656, 7
        %v1658 = vsub.s32 0, %v1657
        %v1659 = vrot.slane %v1640, %v1658
        %v1661 = vmul.f32 %v1654, %v1659
        %v1663 = vlaneseq
        %v1664 = vshrl.u32 %v1663, 7
        %v1665 = vsub.s32 0, %v1664
        %v1666 = vrot.slane %v1641, %v1665
        %v1668 = vadd.f32 %v1661, %v1666
        %v1669 = vpack.c.bf16 %v1668, %v1668
        %v1670 = vld [vmem:[#allocation20] sm:$0xf]
        %v1671 = vld [vmem:[#allocation20 + $0x4] sm:$0xf]
        %v1672 = vld [vmem:[#allocation20 + $0x8] sm:$0xf]
        %v1673 = vld [vmem:[#allocation20 + $0xc] sm:$0xf]
        %v1674 = vld [vmem:[#allocation21] sm:$0x1]
        %v1676 = vlaneseq
        %v1677 = vshrl.u32 %v1676, 7
        %v1678 = vsub.s32 0, %v1677
        %v1679 = vrot.slane %v1674, %v1678
        %v1685 = vunpack.c.l.b16 %v1670
        %v1686 = vunpack.c.l.b16 %v1671
        %v1687 = vunpack.c.l.b16 %v1672
        %v1688 = vunpack.c.l.b16 %v1673
        %v1689 = vpack.c.b16 %v1686, %v1685
        %v1690 = vpack.c.b16 %v1688, %v1687
        %v1694 = vsel %vm1011, %v1669, 0
        %1696 = vmatprep.subr.bf16.mxu0 0
        %1697 = vmatpush1.bf16.msra.mxu0 %v1689
        %1698 = vmatprep.subr.bf16.mxu0 0
        %1699 = vmatpush1.bf16.msra.mxu0 %v1690
        %1700 = vmatprep.subr.bf16.mxu0 0
        %1701 = vmatpush1.bf16.msra.mxu0 0
        %1702 = vmatprep.subr.bf16.mxu0 0
        %1703 = vmatpush1.bf16.msra.mxu0 0
        %1704 = vmatprep.subr.bf16.mxu0 0
        %1705 = vmatpush1.bf16.msra.mxu0 0
        %1706 = vmatprep.subr.bf16.mxu0 0
        %1707 = vmatpush1.bf16.msra.mxu0 0
        %1708 = vmatprep.subr.bf16.mxu0 0
        %1709 = vmatpush1.bf16.msra.mxu0 0
        %1710 = vmatprep.subr.bf16.mxu0 0
        %1711 = vmatpush1.bf16.msra.mxu0 0
        %1712 = vmatprep.subr.bf16.mxu0 0
        %1713 = vmatpush1.bf16.msra.mxu0 0
        %1714 = vmatprep.subr.bf16.mxu0 0
        %1715 = vmatpush1.bf16.msra.mxu0 0
        %1716 = vmatprep.subr.bf16.mxu0 0
        %1717 = vmatpush1.bf16.msra.mxu0 0
        %1718 = vmatprep.subr.bf16.mxu0 0
        %1719 = vmatpush1.bf16.msra.mxu0 0
        %1720 = vmatprep.subr.bf16.mxu0 0
        %1721 = vmatpush1.bf16.msra.mxu0 0
        %1722 = vmatprep.subr.bf16.mxu0 0
        %1723 = vmatpush1.bf16.msra.mxu0 0
        %1724 = vmatprep.subr.bf16.mxu0 0
        %1725 = vmatpush1.bf16.msra.mxu0 0
        %1726 = vmatprep.subr.bf16.mxu0 0
        %1727 = vmatpush1.bf16.msra.mxu0 0
        %1728 = vmatprep.mubr.bf16.mxu0 0
        %1729 = vmatmul.mubr.bf16.gmra.mrb[0].mxu0 %v1694
        %v1730 = vpop.f32.mrb[0].mxu0
        %v1731 = vadd.f32 %v1679, %v1730
        %v1732 = vpop.f32.mrb[0].mxu0
        %v1733 = vpop.f32.mrb[0].mxu0
        %v1734 = vpop.f32.mrb[0].mxu0
        %1735 = vdwg.mxu0
        %v1736 = vmul.f32 %v1731, 0.35355338
        %v1737 = vpack.c.bf16 %v1002, %v1002
        %v1738 = vld [vmem:[#allocation23] sm:$0xf]
        %v1739 = vld [vmem:[#allocation23 + $0x4] sm:$0xf]
        %v1740 = vld [vmem:[#allocation23 + $0x8] sm:$0xf]
        %v1741 = vld [vmem:[#allocation23 + $0xc] sm:$0xf]
        %v1742 = vld [vmem:[#allocation24] sm:$0x1]
        %v1744 = vlaneseq
        %v1745 = vshrl.u32 %v1744, 7
        %v1746 = vsub.s32 0, %v1745
        %v1747 = vrot.slane %v1742, %v1746
        %v1753 = vunpack.c.l.b16 %v1738
        %v1754 = vunpack.c.l.b16 %v1739
        %v1755 = vunpack.c.l.b16 %v1740
        %v1756 = vunpack.c.l.b16 %v1741
        %v1757 = vpack.c.b16 %v1754, %v1753
        %v1758 = vpack.c.b16 %v1756, %v1755
        %v1762 = vsel %vm1011, %v1737, 0
        %1764 = vmatprep.subr.bf16.mxu0 0
        %1765 = vmatpush1.bf16.msra.mxu0 %v1757
        %1766 = vmatprep.subr.bf16.mxu0 0
        %1767 = vmatpush1.bf16.msra.mxu0 %v1758
        %1768 = vmatprep.subr.bf16.mxu0 0
        %1769 = vmatpush1.bf16.msra.mxu0 0
        %1770 = vmatprep.subr.bf16.mxu0 0
        %1771 = vmatpush1.bf16.msra.mxu0 0
        %1772 = vmatprep.subr.bf16.mxu0 0
        %1773 = vmatpush1.bf16.msra.mxu0 0
        %1774 = vmatprep.subr.bf16.mxu0 0
        %1775 = vmatpush1.bf16.msra.mxu0 0
        %1776 = vmatprep.subr.bf16.mxu0 0
        %1777 = vmatpush1.bf16.msra.mxu0 0
        %1778 = vmatprep.subr.bf16.mxu0 0
        %1779 = vmatpush1.bf16.msra.mxu0 0
        %1780 = vmatprep.subr.bf16.mxu0 0
        %1781 = vmatpush1.bf16.msra.mxu0 0
        %1782 = vmatprep.subr.bf16.mxu0 0
        %1783 = vmatpush1.bf16.msra.mxu0 0
        %1784 = vmatprep.subr.bf16.mxu0 0
        %1785 = vmatpush1.bf16.msra.mxu0 0
        %1786 = vmatprep.subr.bf16.mxu0 0
        %1787 = vmatpush1.bf16.msra.mxu0 0
        %1788 = vmatprep.subr.bf16.mxu0 0
        %1789 = vmatpush1.bf16.msra.mxu0 0
        %1790 = vmatprep.subr.bf16.mxu0 0
        %1791 = vmatpush1.bf16.msra.mxu0 0
        %1792 = vmatprep.subr.bf16.mxu0 0
        %1793 = vmatpush1.bf16.msra.mxu0 0
        %1794 = vmatprep.subr.bf16.mxu0 0
        %1795 = vmatpush1.bf16.msra.mxu0 0
        %1796 = vmatprep.mubr.bf16.mxu0 0
        %1797 = vmatmul.mubr.bf16.gmra.mrb[0].mxu0 %v1762
        %v1798 = vpop.f32.mrb[0].mxu0
        %v1799 = vadd.f32 %v1747, %v1798
        %v1800 = vpop.f32.mrb[0].mxu0
        %v1801 = vpop.f32.mrb[0].mxu0
        %v1802 = vpop.f32.mrb[0].mxu0
        %1803 = vdwg.mxu0
        %v1804 = vld [vmem:[#allocation26] sm:$0xf]
        %v1805 = vld [vmem:[#allocation26 + $0x4] sm:$0xf]
        %v1806 = vld [vmem:[#allocation26 + $0x8] sm:$0xf]
        %v1807 = vld [vmem:[#allocation26 + $0xc] sm:$0xf]
        %v1808 = vld [vmem:[#allocation27] sm:$0x1]
        %v1809 = vpack.c.bf16 %v1736, %v1736
        %v1810 = vpack.c.bf16 %v1799, %v1799
        %v1812 = vsel %vm1118, %v1809, 0
        %v1815 = vsel %vm1118, %v1810, 0
        %1817 = vmatprep.subr.bf16.mxu0 0
        %1818 = vmatpush1.bf16.xpose.msra.mxu0 %v1815
        %1819 = vmatprep.subr.bf16.mxu0 0
        %1820 = vmatpush1.bf16.xpose.msra.mxu0 0
        %1821 = vmatprep.subr.bf16.mxu0 0
        %1822 = vmatpush1.bf16.xpose.msra.mxu0 0
        %1823 = vmatprep.subr.bf16.mxu0 0
        %1824 = vmatpush1.bf16.xpose.msra.mxu0 0
        %1825 = vmatprep.subr.bf16.mxu0 0
        %1826 = vmatpush1.bf16.xpose.msra.mxu0 0
        %1827 = vmatprep.subr.bf16.mxu0 0
        %1828 = vmatpush1.bf16.xpose.msra.mxu0 0
        %1829 = vmatprep.subr.bf16.mxu0 0
        %1830 = vmatpush1.bf16.xpose.msra.mxu0 0
        %1831 = vmatprep.subr.bf16.mxu0 0
        %1832 = vmatpush1.bf16.xpose.msra.mxu0 0
        %1833 = vmatprep.subr.bf16.mxu0 0
        %1834 = vmatpush1.bf16.xpose.msra.mxu0 0
        %1835 = vmatprep.subr.bf16.mxu0 0
        %1836 = vmatpush1.bf16.xpose.msra.mxu0 0
        %1837 = vmatprep.subr.bf16.mxu0 0
        %1838 = vmatpush1.bf16.xpose.msra.mxu0 0
        %1839 = vmatprep.subr.bf16.mxu0 0
        %1840 = vmatpush1.bf16.xpose.msra.mxu0 0
        %1841 = vmatprep.subr.bf16.mxu0 0
        %1842 = vmatpush1.bf16.xpose.msra.mxu0 0
        %1843 = vmatprep.subr.bf16.mxu0 0
        %1844 = vmatpush1.bf16.xpose.msra.mxu0 0
        %1845 = vmatprep.subr.bf16.mxu0 0
        %1846 = vmatpush1.bf16.xpose.msra.mxu0 0
        %1847 = vmatprep.subr.bf16.mxu0 0
        %1848 = vmatpush1.bf16.xpose.msra.mxu0 0
        %1849 = vmatprep.mubr.bf16.mxu0 0
        %1850 = vmatmul.mubr.bf16.gmra.mrb[0].mxu0 %v1812
        %v1851 = vpop.f32.mrb[0].mxu0
        %v1852 = vadd.f32 0.0, %v1851
        %v1853 = vpop.f32.mrb[0].mxu0
        %v1854 = vpop.f32.mrb[0].mxu0
        %v1855 = vpop.f32.mrb[0].mxu0
        %1856 = vdwg.mxu0
        %v1857 = vsel %vm1118, %v1852, -inf
        %1858 = vmax.xlane.f32.xlu0 %v1857
        %v1859 = vpop.xlane.xlu0 %1858
        %v1860 = vsub.f32 %v1852, %v1859
        %v1861 = vmul.f32 %v1860, 1.442695
        %v1862 = vpow.pop %v1861
        %v1863 = vsel %vm1118, %v1862, 0.0
        %1864 = vadd.xlane.f32.xlu0 %v1863
        %v1865 = vpop.xlane.xlu0 %1864
        %v1866 = vrcp.pop %v1865
        %v1867 = vmul.f32 %v1862, %v1866
        %v1868 = vpack.c.bf16 %v1867, %v1867
        %1870 = vrot.lane.b32.xlu0 %v1810, 96
        %v1871 = vpop.permute.xlu0 %1870
        %v1873 = vsel %vm1118, %v1868, 0
        %v1876 = vsel %vm1182, %v1871, 0
        %1878 = vmatprep.subr.bf16.mxu0 0
        %1879 = vmatpush1.bf16.msra.mxu0 %v1876
        %1880 = vmatprep.subr.bf16.mxu0 0
        %1881 = vmatpush1.bf16.msra.mxu0 0
        %1882 = vmatprep.subr.bf16.mxu0 0
        %1883 = vmatpush1.bf16.msra.mxu0 0
        %1884 = vmatprep.subr.bf16.mxu0 0
        %1885 = vmatpush1.bf16.msra.mxu0 0
        %1886 = vmatprep.subr.bf16.mxu0 0
        %1887 = vmatpush1.bf16.msra.mxu0 0
        %1888 = vmatprep.subr.bf16.mxu0 0
        %1889 = vmatpush1.bf16.msra.mxu0 0
        %1890 = vmatprep.subr.bf16.mxu0 0
        %1891 = vmatpush1.bf16.msra.mxu0 0
        %1892 = vmatprep.subr.bf16.mxu0 0
        %1893 = vmatpush1.bf16.msra.mxu0 0
        %1894 = vmatprep.subr.bf16.mxu0 0
        %1895 = vmatpush1.bf16.msra.mxu0 0
        %1896 = vmatprep.subr.bf16.mxu0 0
        %1897 = vmatpush1.bf16.msra.mxu0 0
        %1898 = vmatprep.subr.bf16.mxu0 0
        %1899 = vmatpush1.bf16.msra.mxu0 0
        %1900 = vmatprep.subr.bf16.mxu0 0
        %1901 = vmatpush1.bf16.msra.mxu0 0
        %1902 = vmatprep.subr.bf16.mxu0 0
        %1903 = vmatpush1.bf16.msra.mxu0 0
        %1904 = vmatprep.subr.bf16.mxu0 0
        %1905 = vmatpush1.bf16.msra.mxu0 0
        %1906 = vmatprep.subr.bf16.mxu0 0
        %1907 = vmatpush1.bf16.msra.mxu0 0
        %1908 = vmatprep.subr.bf16.mxu0 0
        %1909 = vmatpush1.bf16.msra.mxu0 0
        %1910 = vmatprep.mubr.bf16.mxu0 0
        %1911 = vmatmul.mubr.bf16.gmra.mrb[0].mxu0 %v1873
        %v1912 = vpop.f32.mrb[0].mxu0
        %v1913 = vadd.f32 0.0, %v1912
        %v1914 = vpop.f32.mrb[0].mxu0
        %v1915 = vpop.f32.mrb[0].mxu0
        %v1916 = vpop.f32.mrb[0].mxu0
        %1917 = vdwg.mxu0
        %1918 = vst.msk [vmem:[#allocation2] sm:$0xff] %vm1118, %v1913
        %1920 = vrot.lane.b32.xlu0 %v1809, 120
        %v1921 = vpop.permute.xlu0 %1920
        %1922 = vrot.lane.b32.xlu0 %v1810, 120
        %v1923 = vpop.permute.xlu0 %1922
        %v1925 = vsel %vm1118, %v1921, 0
        %v1928 = vsel %vm1118, %v1923, 0
        %1930 = vmatprep.subr.bf16.mxu0 0
        %1931 = vmatpush1.bf16.xpose.msra.mxu0 %v1928
        %1932 = vmatprep.subr.bf16.mxu0 0
        %1933 = vmatpush1.bf16.xpose.msra.mxu0 0
        %1934 = vmatprep.subr.bf16.mxu0 0
        %1935 = vmatpush1.bf16.xpose.msra.mxu0 0
        %1936 = vmatprep.subr.bf16.mxu0 0
        %1937 = vmatpush1.bf16.xpose.msra.mxu0 0
        %1938 = vmatprep.subr.bf16.mxu0 0
        %1939 = vmatpush1.bf16.xpose.msra.mxu0 0
        %1940 = vmatprep.subr.bf16.mxu0 0
        %1941 = vmatpush1.bf16.xpose.msra.mxu0 0
        %1942 = vmatprep.subr.bf16.mxu0 0
        %1943 = vmatpush1.bf16.xpose.msra.mxu0 0
        %1944 = vmatprep.subr.bf16.mxu0 0
        %1945 = vmatpush1.bf16.xpose.msra.mxu0 0
        %1946 = vmatprep.subr.bf16.mxu0 0
        %1947 = vmatpush1.bf16.xpose.msra.mxu0 0
        %1948 = vmatprep.subr.bf16.mxu0 0
        %1949 = vmatpush1.bf16.xpose.msra.mxu0 0
        %1950 = vmatprep.subr.bf16.mxu0 0
        %1951 = vmatpush1.bf16.xpose.msra.mxu0 0
        %1952 = vmatprep.subr.bf16.mxu0 0
        %1953 = vmatpush1.bf16.xpose.msra.mxu0 0
        %1954 = vmatprep.subr.bf16.mxu0 0
        %1955 = vmatpush1.bf16.xpose.msra.mxu0 0
        %1956 = vmatprep.subr.bf16.mxu0 0
        %1957 = vmatpush1.bf16.xpose.msra.mxu0 0
        %1958 = vmatprep.subr.bf16.mxu0 0
        %1959 = vmatpush1.bf16.xpose.msra.mxu0 0
        %1960 = vmatprep.subr.bf16.mxu0 0
        %1961 = vmatpush1.bf16.xpose.msra.mxu0 0
        %1962 = vmatprep.mubr.bf16.mxu0 0
        %1963 = vmatmul.mubr.bf16.gmra.mrb[0].mxu0 %v1925
        %v1964 = vpop.f32.mrb[0].mxu0
        %v1965 = vadd.f32 0.0, %v1964
        %v1966 = vpop.f32.mrb[0].mxu0
        %v1967 = vpop.f32.mrb[0].mxu0
        %v1968 = vpop.f32.mrb[0].mxu0
        %1969 = vdwg.mxu0
        %v1970 = vsel %vm1118, %v1965, -inf
        %1971 = vmax.xlane.f32.xlu0 %v1970
        %v1972 = vpop.xlane.xlu0 %1971
        %v1973 = vsub.f32 %v1965, %v1972
        %v1974 = vmul.f32 %v1973, 1.442695
        %v1975 = vpow.pop %v1974
        %v1976 = vsel %vm1118, %v1975, 0.0
        %1977 = vadd.xlane.f32.xlu0 %v1976
        %v1978 = vpop.xlane.xlu0 %1977
        %v1979 = vrcp.pop %v1978
        %v1980 = vmul.f32 %v1975, %v1979
        %v1981 = vpack.c.bf16 %v1980, %v1980
        %1982 = vrot.lane.b32.xlu0 %v1810, 88
        %v1983 = vpop.permute.xlu0 %1982
        %v1985 = vsel %vm1118, %v1981, 0
        %v1988 = vsel %vm1182, %v1983, 0
        %1990 = vmatprep.subr.bf16.mxu0 0
        %1991 = vmatpush1.bf16.msra.mxu0 %v1988
        %1992 = vmatprep.subr.bf16.mxu0 0
        %1993 = vmatpush1.bf16.msra.mxu0 0
        %1994 = vmatprep.subr.bf16.mxu0 0
        %1995 = vmatpush1.bf16.msra.mxu0 0
        %1996 = vmatprep.subr.bf16.mxu0 0
        %1997 = vmatpush1.bf16.msra.mxu0 0
        %1998 = vmatprep.subr.bf16.mxu0 0
        %1999 = vmatpush1.bf16.msra.mxu0 0
        %2000 = vmatprep.subr.bf16.mxu0 0
        %2001 = vmatpush1.bf16.msra.mxu0 0
        %2002 = vmatprep.subr.bf16.mxu0 0
        %2003 = vmatpush1.bf16.msra.mxu0 0
        %2004 = vmatprep.subr.bf16.mxu0 0
        %2005 = vmatpush1.bf16.msra.mxu0 0
        %2006 = vmatprep.subr.bf16.mxu0 0
        %2007 = vmatpush1.bf16.msra.mxu0 0
        %2008 = vmatprep.subr.bf16.mxu0 0
        %2009 = vmatpush1.bf16.msra.mxu0 0
        %2010 = vmatprep.subr.bf16.mxu0 0
        %2011 = vmatpush1.bf16.msra.mxu0 0
        %2012 = vmatprep.subr.bf16.mxu0 0
        %2013 = vmatpush1.bf16.msra.mxu0 0
        %2014 = vmatprep.subr.bf16.mxu0 0
        %2015 = vmatpush1.bf16.msra.mxu0 0
        %2016 = vmatprep.subr.bf16.mxu0 0
        %2017 = vmatpush1.bf16.msra.mxu0 0
        %2018 = vmatprep.subr.bf16.mxu0 0
        %2019 = vmatpush1.bf16.msra.mxu0 0
        %2020 = vmatprep.subr.bf16.mxu0 0
        %2021 = vmatpush1.bf16.msra.mxu0 0
        %2022 = vmatprep.mubr.bf16.mxu0 0
        %2023 = vmatmul.mubr.bf16.gmra.mrb[0].mxu0 %v1985
        %v2024 = vpop.f32.mrb[0].mxu0
        %v2025 = vadd.f32 0.0, %v2024
        %v2026 = vpop.f32.mrb[0].mxu0
        %v2027 = vpop.f32.mrb[0].mxu0
        %v2028 = vpop.f32.mrb[0].mxu0
        %2029 = vdwg.mxu0
        %2031 = vrot.lane.b32.xlu0 %v2025, 8
        %v2032 = vpop.permute.xlu0 %2031
        %2034 = vst.msk [vmem:[#allocation2] sm:$0xff] %vm1342, %v2032
        %2035 = vrot.lane.b32.xlu0 %v1809, 112
        %v2036 = vpop.permute.xlu0 %2035
        %2037 = vrot.lane.b32.xlu0 %v1810, 112
        %v2038 = vpop.permute.xlu0 %2037
        %v2040 = vsel %vm1118, %v2036, 0
        %v2043 = vsel %vm1118, %v2038, 0
        %2045 = vmatprep.subr.bf16.mxu0 0
        %2046 = vmatpush1.bf16.xpose.msra.mxu0 %v2043
        %2047 = vmatprep.subr.bf16.mxu0 0
        %2048 = vmatpush1.bf16.xpose.msra.mxu0 0
        %2049 = vmatprep.subr.bf16.mxu0 0
        %2050 = vmatpush1.bf16.xpose.msra.mxu0 0
        %2051 = vmatprep.subr.bf16.mxu0 0
        %2052 = vmatpush1.bf16.xpose.msra.mxu0 0
        %2053 = vmatprep.subr.bf16.mxu0 0
        %2054 = vmatpush1.bf16.xpose.msra.mxu0 0
        %2055 = vmatprep.subr.bf16.mxu0 0
        %2056 = vmatpush1.bf16.xpose.msra.mxu0 0
        %2057 = vmatprep.subr.bf16.mxu0 0
        %2058 = vmatpush1.bf16.xpose.msra.mxu0 0
        %2059 = vmatprep.subr.bf16.mxu0 0
        %2060 = vmatpush1.bf16.xpose.msra.mxu0 0
        %2061 = vmatprep.subr.bf16.mxu0 0
        %2062 = vmatpush1.bf16.xpose.msra.mxu0 0
        %2063 = vmatprep.subr.bf16.mxu0 0
        %2064 = vmatpush1.bf16.xpose.msra.mxu0 0
        %2065 = vmatprep.subr.bf16.mxu0 0
        %2066 = vmatpush1.bf16.xpose.msra.mxu0 0
        %2067 = vmatprep.subr.bf16.mxu0 0
        %2068 = vmatpush1.bf16.xpose.msra.mxu0 0
        %2069 = vmatprep.subr.bf16.mxu0 0
        %2070 = vmatpush1.bf16.xpose.msra.mxu0 0
        %2071 = vmatprep.subr.bf16.mxu0 0
        %2072 = vmatpush1.bf16.xpose.msra.mxu0 0
        %2073 = vmatprep.subr.bf16.mxu0 0
        %2074 = vmatpush1.bf16.xpose.msra.mxu0 0
        %2075 = vmatprep.subr.bf16.mxu0 0
        %2076 = vmatpush1.bf16.xpose.msra.mxu0 0
        %2077 = vmatprep.mubr.bf16.mxu0 0
        %2078 = vmatmul.mubr.bf16.gmra.mrb[0].mxu0 %v2040
        %v2079 = vpop.f32.mrb[0].mxu0
        %v2080 = vadd.f32 0.0, %v2079
        %v2081 = vpop.f32.mrb[0].mxu0
        %v2082 = vpop.f32.mrb[0].mxu0
        %v2083 = vpop.f32.mrb[0].mxu0
        %2084 = vdwg.mxu0
        %v2085 = vsel %vm1118, %v2080, -inf
        %2086 = vmax.xlane.f32.xlu0 %v2085
        %v2087 = vpop.xlane.xlu0 %2086
        %v2088 = vsub.f32 %v2080, %v2087
        %v2089 = vmul.f32 %v2088, 1.442695
        %v2090 = vpow.pop %v2089
        %v2091 = vsel %vm1118, %v2090, 0.0
        %2092 = vadd.xlane.f32.xlu0 %v2091
        %v2093 = vpop.xlane.xlu0 %2092
        %v2094 = vrcp.pop %v2093
        %v2095 = vmul.f32 %v2090, %v2094
        %v2096 = vpack.c.bf16 %v2095, %v2095
        %2097 = vrot.lane.b32.xlu0 %v1810, 80
        %v2098 = vpop.permute.xlu0 %2097
        %v2100 = vsel %vm1118, %v2096, 0
        %v2103 = vsel %vm1182, %v2098, 0
        %2105 = vmatprep.subr.bf16.mxu0 0
        %2106 = vmatpush1.bf16.msra.mxu0 %v2103
        %2107 = vmatprep.subr.bf16.mxu0 0
        %2108 = vmatpush1.bf16.msra.mxu0 0
        %2109 = vmatprep.subr.bf16.mxu0 0
        %2110 = vmatpush1.bf16.msra.mxu0 0
        %2111 = vmatprep.subr.bf16.mxu0 0
        %2112 = vmatpush1.bf16.msra.mxu0 0
        %2113 = vmatprep.subr.bf16.mxu0 0
        %2114 = vmatpush1.bf16.msra.mxu0 0
        %2115 = vmatprep.subr.bf16.mxu0 0
        %2116 = vmatpush1.bf16.msra.mxu0 0
        %2117 = vmatprep.subr.bf16.mxu0 0
        %2118 = vmatpush1.bf16.msra.mxu0 0
        %2119 = vmatprep.subr.bf16.mxu0 0
        %2120 = vmatpush1.bf16.msra.mxu0 0
        %2121 = vmatprep.subr.bf16.mxu0 0
        %2122 = vmatpush1.bf16.msra.mxu0 0
        %2123 = vmatprep.subr.bf16.mxu0 0
        %2124 = vmatpush1.bf16.msra.mxu0 0
        %2125 = vmatprep.subr.bf16.mxu0 0
        %2126 = vmatpush1.bf16.msra.mxu0 0
        %2127 = vmatprep.subr.bf16.mxu0 0
        %2128 = vmatpush1.bf16.msra.mxu0 0
        %2129 = vmatprep.subr.bf16.mxu0 0
        %2130 = vmatpush1.bf16.msra.mxu0 0
        %2131 = vmatprep.subr.bf16.mxu0 0
        %2132 = vmatpush1.bf16.msra.mxu0 0
        %2133 = vmatprep.subr.bf16.mxu0 0
        %2134 = vmatpush1.bf16.msra.mxu0 0
        %2135 = vmatprep.subr.bf16.mxu0 0
        %2136 = vmatpush1.bf16.msra.mxu0 0
        %2137 = vmatprep.mubr.bf16.mxu0 0
        %2138 = vmatmul.mubr.bf16.gmra.mrb[0].mxu0 %v2100
        %v2139 = vpop.f32.mrb[0].mxu0
        %v2140 = vadd.f32 0.0, %v2139
        %v2141 = vpop.f32.mrb[0].mxu0
        %v2142 = vpop.f32.mrb[0].mxu0
        %v2143 = vpop.f32.mrb[0].mxu0
        %2144 = vdwg.mxu0
        %2146 = vrot.lane.b32.xlu0 %v2140, 16
        %v2147 = vpop.permute.xlu0 %2146
        %2149 = vst.msk [vmem:[#allocation2] sm:$0xff] %vm1458, %v2147
        %2150 = vrot.lane.b32.xlu0 %v1809, 104
        %v2151 = vpop.permute.xlu0 %2150
        %2152 = vrot.lane.b32.xlu0 %v1810, 104
        %v2153 = vpop.permute.xlu0 %2152
        %v2155 = vsel %vm1118, %v2151, 0
        %v2158 = vsel %vm1118, %v2153, 0
        %2160 = vmatprep.subr.bf16.mxu0 0
        %2161 = vmatpush1.bf16.xpose.msra.mxu0 %v2158
        %2162 = vmatprep.subr.bf16.mxu0 0
        %2163 = vmatpush1.bf16.xpose.msra.mxu0 0
        %2164 = vmatprep.subr.bf16.mxu0 0
        %2165 = vmatpush1.bf16.xpose.msra.mxu0 0
        %2166 = vmatprep.subr.bf16.mxu0 0
        %2167 = vmatpush1.bf16.xpose.msra.mxu0 0
        %2168 = vmatprep.subr.bf16.mxu0 0
        %2169 = vmatpush1.bf16.xpose.msra.mxu0 0
        %2170 = vmatprep.subr.bf16.mxu0 0
        %2171 = vmatpush1.bf16.xpose.msra.mxu0 0
        %2172 = vmatprep.subr.bf16.mxu0 0
        %2173 = vmatpush1.bf16.xpose.msra.mxu0 0
        %2174 = vmatprep.subr.bf16.mxu0 0
        %2175 = vmatpush1.bf16.xpose.msra.mxu0 0
        %2176 = vmatprep.subr.bf16.mxu0 0
        %2177 = vmatpush1.bf16.xpose.msra.mxu0 0
        %2178 = vmatprep.subr.bf16.mxu0 0
        %2179 = vmatpush1.bf16.xpose.msra.mxu0 0
        %2180 = vmatprep.subr.bf16.mxu0 0
        %2181 = vmatpush1.bf16.xpose.msra.mxu0 0
        %2182 = vmatprep.subr.bf16.mxu0 0
        %2183 = vmatpush1.bf16.xpose.msra.mxu0 0
        %2184 = vmatprep.subr.bf16.mxu0 0
        %2185 = vmatpush1.bf16.xpose.msra.mxu0 0
        %2186 = vmatprep.subr.bf16.mxu0 0
        %2187 = vmatpush1.bf16.xpose.msra.mxu0 0
        %2188 = vmatprep.subr.bf16.mxu0 0
        %2189 = vmatpush1.bf16.xpose.msra.mxu0 0
        %2190 = vmatprep.subr.bf16.mxu0 0
        %2191 = vmatpush1.bf16.xpose.msra.mxu0 0
        %2192 = vmatprep.mubr.bf16.mxu0 0
        %2193 = vmatmul.mubr.bf16.gmra.mrb[0].mxu0 %v2155
        %v2194 = vpop.f32.mrb[0].mxu0
        %v2195 = vadd.f32 0.0, %v2194
        %v2196 = vpop.f32.mrb[0].mxu0
        %v2197 = vpop.f32.mrb[0].mxu0
        %v2198 = vpop.f32.mrb[0].mxu0
        %2199 = vdwg.mxu0
        %v2200 = vsel %vm1118, %v2195, -inf
        %2201 = vmax.xlane.f32.xlu0 %v2200
        %v2202 = vpop.xlane.xlu0 %2201
        %v2203 = vsub.f32 %v2195, %v2202
        %v2204 = vmul.f32 %v2203, 1.442695
        %v2205 = vpow.pop %v2204
        %v2206 = vsel %vm1118, %v2205, 0.0
        %2207 = vadd.xlane.f32.xlu0 %v2206
        %v2208 = vpop.xlane.xlu0 %2207
        %v2209 = vrcp.pop %v2208
        %v2210 = vmul.f32 %v2205, %v2209
        %v2211 = vpack.c.bf16 %v2210, %v2210
        %2212 = vrot.lane.b32.xlu0 %v1810, 72
        %v2213 = vpop.permute.xlu0 %2212
        %v2215 = vsel %vm1118, %v2211, 0
        %v2218 = vsel %vm1182, %v2213, 0
        %2220 = vmatprep.subr.bf16.mxu0 0
        %2221 = vmatpush1.bf16.msra.mxu0 %v2218
        %2222 = vmatprep.subr.bf16.mxu0 0
        %2223 = vmatpush1.bf16.msra.mxu0 0
        %2224 = vmatprep.subr.bf16.mxu0 0
        %2225 = vmatpush1.bf16.msra.mxu0 0
        %2226 = vmatprep.subr.bf16.mxu0 0
        %2227 = vmatpush1.bf16.msra.mxu0 0
        %2228 = vmatprep.subr.bf16.mxu0 0
        %2229 = vmatpush1.bf16.msra.mxu0 0
        %2230 = vmatprep.subr.bf16.mxu0 0
        %2231 = vmatpush1.bf16.msra.mxu0 0
        %2232 = vmatprep.subr.bf16.mxu0 0
        %2233 = vmatpush1.bf16.msra.mxu0 0
        %2234 = vmatprep.subr.bf16.mxu0 0
        %2235 = vmatpush1.bf16.msra.mxu0 0
        %2236 = vmatprep.subr.bf16.mxu0 0
        %2237 = vmatpush1.bf16.msra.mxu0 0
        %2238 = vmatprep.subr.bf16.mxu0 0
        %2239 = vmatpush1.bf16.msra.mxu0 0
        %2240 = vmatprep.subr.bf16.mxu0 0
        %2241 = vmatpush1.bf16.msra.mxu0 0
        %2242 = vmatprep.subr.bf16.mxu0 0
        %2243 = vmatpush1.bf16.msra.mxu0 0
        %2244 = vmatprep.subr.bf16.mxu0 0
        %2245 = vmatpush1.bf16.msra.mxu0 0
        %2246 = vmatprep.subr.bf16.mxu0 0
        %2247 = vmatpush1.bf16.msra.mxu0 0
        %2248 = vmatprep.subr.bf16.mxu0 0
        %2249 = vmatpush1.bf16.msra.mxu0 0
        %2250 = vmatprep.subr.bf16.mxu0 0
        %2251 = vmatpush1.bf16.msra.mxu0 0
        %2252 = vmatprep.mubr.bf16.mxu0 0
        %2253 = vmatmul.mubr.bf16.gmra.mrb[0].mxu0 %v2215
        %v2254 = vpop.f32.mrb[0].mxu0
        %v2255 = vadd.f32 0.0, %v2254
        %v2256 = vpop.f32.mrb[0].mxu0
        %v2257 = vpop.f32.mrb[0].mxu0
        %v2258 = vpop.f32.mrb[0].mxu0
        %2259 = vdwg.mxu0
        %2261 = vrot.lane.b32.xlu0 %v2255, 24
        %v2262 = vpop.permute.xlu0 %2261
        %2264 = vst.msk [vmem:[#allocation2] sm:$0xff] %vm1574, %v2262
        %v2265 = vld [vmem:[#allocation2] sm:$0xff]
        %v2266 = vpack.c.bf16 %v2265, %v2265
        %v2268 = vlaneseq
        %v2269 = vshrl.u32 %v2268, 7
        %v2270 = vsub.s32 0, %v2269
        %v2271 = vrot.slane %v1808, %v2270
        %v2277 = vunpack.c.l.b16 %v1804
        %v2278 = vunpack.c.l.b16 %v1805
        %v2279 = vunpack.c.l.b16 %v1806
        %v2280 = vunpack.c.l.b16 %v1807
        %v2281 = vpack.c.b16 %v2278, %v2277
        %v2282 = vpack.c.b16 %v2280, %v2279
        %v2286 = vsel %vm1011, %v2266, 0
        %2288 = vmatprep.subr.bf16.mxu0 0
        %2289 = vmatpush1.bf16.msra.mxu0 %v2281
        %2290 = vmatprep.subr.bf16.mxu0 0
        %2291 = vmatpush1.bf16.msra.mxu0 %v2282
        %2292 = vmatprep.subr.bf16.mxu0 0
        %2293 = vmatpush1.bf16.msra.mxu0 0
        %2294 = vmatprep.subr.bf16.mxu0 0
        %2295 = vmatpush1.bf16.msra.mxu0 0
        %2296 = vmatprep.subr.bf16.mxu0 0
        %2297 = vmatpush1.bf16.msra.mxu0 0
        %2298 = vmatprep.subr.bf16.mxu0 0
        %2299 = vmatpush1.bf16.msra.mxu0 0
        %2300 = vmatprep.subr.bf16.mxu0 0
        %2301 = vmatpush1.bf16.msra.mxu0 0
        %2302 = vmatprep.subr.bf16.mxu0 0
        %2303 = vmatpush1.bf16.msra.mxu0 0
        %2304 = vmatprep.subr.bf16.mxu0 0
        %2305 = vmatpush1.bf16.msra.mxu0 0
        %2306 = vmatprep.subr.bf16.mxu0 0
        %2307 = vmatpush1.bf16.msra.mxu0 0
        %2308 = vmatprep.subr.bf16.mxu0 0
        %2309 = vmatpush1.bf16.msra.mxu0 0
        %2310 = vmatprep.subr.bf16.mxu0 0
        %2311 = vmatpush1.bf16.msra.mxu0 0
        %2312 = vmatprep.subr.bf16.mxu0 0
        %2313 = vmatpush1.bf16.msra.mxu0 0
        %2314 = vmatprep.subr.bf16.mxu0 0
        %2315 = vmatpush1.bf16.msra.mxu0 0
        %2316 = vmatprep.subr.bf16.mxu0 0
        %2317 = vmatpush1.bf16.msra.mxu0 0
        %2318 = vmatprep.subr.bf16.mxu0 0
        %2319 = vmatpush1.bf16.msra.mxu0 0
        %2320 = vmatprep.mubr.bf16.mxu0 0
        %2321 = vmatmul.mubr.bf16.gmra.mrb[0].mxu0 %v2286
        %v2322 = vpop.f32.mrb[0].mxu0
        %v2323 = vadd.f32 %v2271, %v2322
        %v2324 = vpop.f32.mrb[0].mxu0
        %v2325 = vpop.f32.mrb[0].mxu0
        %v2326 = vpop.f32.mrb[0].mxu0
        %2327 = vdwg.mxu0
        %v2328 = vadd.f32 %v1639, %v2323
        %v2329 = vld [vmem:[#allocation29] sm:$0x1]
        %v2330 = vld [vmem:[#allocation30] sm:$0x1]
        %v2331 = vsel %vm1011, %v2328, 0.0
        %2332 = vadd.xlane.f32.xlu0 %v2331
        %v2333 = vpop.xlane.xlu0 %2332
        %v2334 = vmul.f32 %v2333, %v1015
        %v2335 = vsub.f32 %v2328, %v2334
        %v2336 = vmul.f32 %v2335, %v2335
        %v2337 = vsel %vm1011, %v2336, 0.0
        %2338 = vadd.xlane.f32.xlu0 %v2337
        %v2339 = vpop.xlane.xlu0 %2338
        %v2340 = vmul.f32 %v2339, %v1015
        %v2341 = vadd.f32 %v2340, 1e-05
        %v2342 = vrsqrt.pop %v2341
        %v2343 = vmul.f32 %v2335, %v2342
        %v2345 = vlaneseq
        %v2346 = vshrl.u32 %v2345, 7
        %v2347 = vsub.s32 0, %v2346
        %v2348 = vrot.slane %v2329, %v2347
        %v2350 = vmul.f32 %v2343, %v2348
        %v2352 = vlaneseq
        %v2353 = vshrl.u32 %v2352, 7
        %v2354 = vsub.s32 0, %v2353
        %v2355 = vrot.slane %v2330, %v2354
        %v2357 = vadd.f32 %v2350, %v2355
        %v2358 = vpack.c.bf16 %v2357, %v2357
        %v2359 = vld [vmem:[#allocation32] sm:$0xf]
        %v2360 = vld [vmem:[#allocation32 + $0x4] sm:$0xf]
        %v2361 = vld [vmem:[#allocation32 + $0x8] sm:$0xf]
        %v2362 = vld [vmem:[#allocation32 + $0xc] sm:$0xf]
        %v2363 = vld [vmem:[#allocation33] sm:$0x1]
        %v2365 = vlaneseq
        %v2366 = vshrl.u32 %v2365, 7
        %v2367 = vsub.s32 0, %v2366
        %v2368 = vrot.slane %v2363, %v2367
        %v2374 = vunpack.c.l.b16 %v2359
        %v2375 = vunpack.c.l.b16 %v2360
        %v2376 = vunpack.c.l.b16 %v2361
        %v2377 = vunpack.c.l.b16 %v2362
        %v2378 = vpack.c.b16 %v2375, %v2374
        %v2379 = vpack.c.b16 %v2377, %v2376
        %v2383 = vsel %vm1011, %v2358, 0
        %2385 = vmatprep.subr.bf16.mxu0 0
        %2386 = vmatpush1.bf16.msra.mxu0 %v2378
        %2387 = vmatprep.subr.bf16.mxu0 0
        %2388 = vmatpush1.bf16.msra.mxu0 %v2379
        %2389 = vmatprep.subr.bf16.mxu0 0
        %2390 = vmatpush1.bf16.msra.mxu0 0
        %2391 = vmatprep.subr.bf16.mxu0 0
        %2392 = vmatpush1.bf16.msra.mxu0 0
        %2393 = vmatprep.subr.bf16.mxu0 0
        %2394 = vmatpush1.bf16.msra.mxu0 0
        %2395 = vmatprep.subr.bf16.mxu0 0
        %2396 = vmatpush1.bf16.msra.mxu0 0
        %2397 = vmatprep.subr.bf16.mxu0 0
        %2398 = vmatpush1.bf16.msra.mxu0 0
        %2399 = vmatprep.subr.bf16.mxu0 0
        %2400 = vmatpush1.bf16.msra.mxu0 0
        %2401 = vmatprep.subr.bf16.mxu0 0
        %2402 = vmatpush1.bf16.msra.mxu0 0
        %2403 = vmatprep.subr.bf16.mxu0 0
        %2404 = vmatpush1.bf16.msra.mxu0 0
        %2405 = vmatprep.subr.bf16.mxu0 0
        %2406 = vmatpush1.bf16.msra.mxu0 0
        %2407 = vmatprep.subr.bf16.mxu0 0
        %2408 = vmatpush1.bf16.msra.mxu0 0
        %2409 = vmatprep.subr.bf16.mxu0 0
        %2410 = vmatpush1.bf16.msra.mxu0 0
        %2411 = vmatprep.subr.bf16.mxu0 0
        %2412 = vmatpush1.bf16.msra.mxu0 0
        %2413 = vmatprep.subr.bf16.mxu0 0
        %2414 = vmatpush1.bf16.msra.mxu0 0
        %2415 = vmatprep.subr.bf16.mxu0 0
        %2416 = vmatpush1.bf16.msra.mxu0 0
        %2417 = vmatprep.mubr.bf16.mxu0 0
        %2418 = vmatmul.mubr.bf16.gmra.mrb[0].mxu0 %v2383
        %v2419 = vpop.f32.mrb[0].mxu0
        %v2420 = vadd.f32 %v2368, %v2419
        %v2421 = vpop.f32.mrb[0].mxu0
        %v2422 = vpop.f32.mrb[0].mxu0
        %v2423 = vpop.f32.mrb[0].mxu0
        %2424 = vdwg.mxu0
        %v2425 = vmul.f32 %v2420, 0.5
        %v2426 = vmul.f32 %v2420, 0.70710677
        %v2427 = verf.f32.pop %v2426
        %v2428 = vadd.f32 %v2427, 1.0
        %v2429 = vmul.f32 %v2425, %v2428
        %v2430 = vpack.c.bf16 %v2429, %v2429
        %v2431 = vld [vmem:[#allocation35] sm:$0xf]
        %v2432 = vld [vmem:[#allocation35 + $0x4] sm:$0xf]
        %v2433 = vld [vmem:[#allocation35 + $0x8] sm:$0xf]
        %v2434 = vld [vmem:[#allocation35 + $0xc] sm:$0xf]
        %v2435 = vld [vmem:[#allocation35 + $0x10] sm:$0xf]
        %v2436 = vld [vmem:[#allocation35 + $0x14] sm:$0xf]
        %v2437 = vld [vmem:[#allocation35 + $0x18] sm:$0xf]
        %v2438 = vld [vmem:[#allocation35 + $0x1c] sm:$0xf]
        %v2439 = vld [vmem:[#allocation36] sm:$0x1]
        %v2441 = vlaneseq
        %v2442 = vshrl.u32 %v2441, 7
        %v2443 = vsub.s32 0, %v2442
        %v2444 = vrot.slane %v2439, %v2443
        %v2454 = vunpack.c.l.b16 %v2431
        %v2455 = vunpack.c.l.b16 %v2432
        %v2456 = vunpack.c.l.b16 %v2433
        %v2457 = vunpack.c.l.b16 %v2434
        %v2458 = vunpack.c.l.b16 %v2435
        %v2459 = vunpack.c.l.b16 %v2436
        %v2460 = vunpack.c.l.b16 %v2437
        %v2461 = vunpack.c.l.b16 %v2438
        %v2462 = vpack.c.b16 %v2455, %v2454
        %v2463 = vpack.c.b16 %v2457, %v2456
        %v2464 = vpack.c.b16 %v2459, %v2458
        %v2465 = vpack.c.b16 %v2461, %v2460
        %vm2470 = vcmask 523264
        %v2472 = vsel %vm2470, %v2430, 0
        %2474 = vmatprep.subr.bf16.mxu0 0
        %2475 = vmatpush1.bf16.msra.mxu0 %v2462
        %2476 = vmatprep.subr.bf16.mxu0 0
        %2477 = vmatpush1.bf16.msra.mxu0 %v2463
        %2478 = vmatprep.subr.bf16.mxu0 0
        %2479 = vmatpush1.bf16.msra.mxu0 %v2464
        %2480 = vmatprep.subr.bf16.mxu0 0
        %2481 = vmatpush1.bf16.msra.mxu0 %v2465
        %2482 = vmatprep.subr.bf16.mxu0 0
        %2483 = vmatpush1.bf16.msra.mxu0 0
        %2484 = vmatprep.subr.bf16.mxu0 0
        %2485 = vmatpush1.bf16.msra.mxu0 0
        %2486 = vmatprep.subr.bf16.mxu0 0
        %2487 = vmatpush1.bf16.msra.mxu0 0
        %2488 = vmatprep.subr.bf16.mxu0 0
        %2489 = vmatpush1.bf16.msra.mxu0 0
        %2490 = vmatprep.subr.bf16.mxu0 0
        %2491 = vmatpush1.bf16.msra.mxu0 0
        %2492 = vmatprep.subr.bf16.mxu0 0
        %2493 = vmatpush1.bf16.msra.mxu0 0
        %2494 = vmatprep.subr.bf16.mxu0 0
        %2495 = vmatpush1.bf16.msra.mxu0 0
        %2496 = vmatprep.subr.bf16.mxu0 0
        %2497 = vmatpush1.bf16.msra.mxu0 0
        %2498 = vmatprep.subr.bf16.mxu0 0
        %2499 = vmatpush1.bf16.msra.mxu0 0
        %2500 = vmatprep.subr.bf16.mxu0 0
        %2501 = vmatpush1.bf16.msra.mxu0 0
        %2502 = vmatprep.subr.bf16.mxu0 0
        %2503 = vmatpush1.bf16.msra.mxu0 0
        %2504 = vmatprep.subr.bf16.mxu0 0
        %2505 = vmatpush1.bf16.msra.mxu0 0
        %2506 = vmatprep.mubr.bf16.mxu0 0
        %2507 = vmatmul.mubr.bf16.gmra.mrb[0].mxu0 %v2472
        %v2508 = vpop.f32.mrb[0].mxu0
        %v2509 = vadd.f32 %v2444, %v2508
        %v2510 = vpop.f32.mrb[0].mxu0
        %v2511 = vpop.f32.mrb[0].mxu0
        %v2512 = vpop.f32.mrb[0].mxu0
        %2513 = vdwg.mxu0
        %v2514 = vadd.f32 %v2328, %v2509
        %2515 = vst.msk [vmem:[%s999] sm:$0xff] %vm1011, %v2514
        %s2516 = sand.u32 %s532, 1
        %s2517 = scalar_lea.sflag [#allocation5], %s2516
        %s2518 = sand.u32 %s532, 1
        %s2519 = smul.addr %s2518, 8
        %s2520 = scalar_lea.vmem [#allocation38], %s2519
        // Predicated region
        $region197: #{tpu_custom_call.1} parent=107 // pred_check
          %p2521 = pneg %p542
        $region198: #{tpu_custom_call.1} parent=107 // pred_check_branch
          %2523 = sbr.rel (%p2521) target = $region200
        $region199: #{tpu_custom_call.1} parent=107 // pred_region
          %s2525 = ssub.s32 128, 128
          %2526 = vsyncadd %s2517, %s2525
          %s2527 = smul.addr %s52, 128
          %s2528 = scalar_lea.hbm %s22, %s2527
          %s2530 = sshll.u32 %s2520, 4
          %s2531 = int_to_ptr.vmem [resolvable:$true] %s2530
          %2533 = dma.vmem_to_hbm [thread:$0]  %s2531, 128, %s2528, %s2517
        $region200: #{tpu_custom_call.1} parent=107 // pred_fallthru
          _
      $region108: #{tpu_custom_call.1} parent=5 // pred_fallthru
        _
      %p2534 = scmp.le.s32.totalorder 2, %s47
      // Predicated region
      $region201: #{tpu_custom_call.1} parent=5 // pred_check
        %p2535 = pneg %p2534
      $region202: #{tpu_custom_call.1} parent=5 // pred_check_branch
        %2537 = sbr.rel (%p2535) target = $region204
      $region203: #{tpu_custom_call.1} parent=5 // pred_region
        %s2538 = ssub.s32 %s47, 2
        // Predicated region
        $region205: #{tpu_custom_call.1} parent=203 // pred_check
          %p2539 = pneg %p548
        $region206: #{tpu_custom_call.1} parent=203 // pred_check_branch
          %2541 = sbr.rel (%p2539) target = $region208
        $region207: #{tpu_custom_call.1} parent=203 // pred_region
          %s2542 = sand.u32 %s533, 1
          %s2543 = scalar_lea.sflag [#allocation5], %s2542
          %s2544 = sand.u32 %s533, 1
          %s2545 = smul.addr %s2544, 8
          %s2546 = scalar_lea.vmem [#allocation38], %s2545
          %2547 = dma.done %s2543, 128
        $region208: #{tpu_custom_call.1} parent=203 // pred_fallthru
          _
      $region204: #{tpu_custom_call.1} parent=5 // pred_fallthru
        _
    $region6: #{tpu_custom_call.1} parent=1 // loop_footer
      %s51 = sadd.s32 1, %s47
    $region7: #{tpu_custom_call.1} parent=1 // loop_footer_branch
      %46 = sbr.rel target = $region3
    $region8: #{tpu_custom_call.1} parent=1 // loop_exit
      _
    %2548 = vsyncpa [#allocation4], 1
    %s2549 = scalar_lea.sflag [#allocation4], 1
    %2550 = vsyncpa %s2549, 1
    %2551 = vsyncpa [#allocation7], 1
    %s2552 = scalar_lea.sflag [#allocation7], 1
    %2553 = vsyncpa %s2552, 1
    %2554 = vsyncpa [#allocation10], 1
    %2555 = vsyncpa [#allocation13], 1
    %2556 = vsyncpa [#allocation16], 1
    %2557 = vsyncpa [#allocation19], 1
    %2558 = vsyncpa [#allocation22], 1
    %2559 = vsyncpa [#allocation25], 1
    %2560 = vsyncpa [#allocation28], 1
    %2561 = vsyncpa [#allocation31], 1
    %2562 = vsyncpa [#allocation34], 1
    %2563 = vsyncpa [#allocation37], 1
    %2564 = vsyncpa [#allocation5], 1
    %s2565 = scalar_lea.sflag [#allocation5], 1
    %2566 = vsyncpa %s2565, 1

</llo_original>
